<compile_context>
chip_gen: v5e
topology: v5e:2x2
jax: 0.10.0
libtpu: 0.0.40
codegen_flags: <defaults>
</compile_context>

<pallas_src>
import functools
import math

import jax
import jax.numpy as jnp
from jax.experimental import pallas as pl
from jax.experimental.pallas import tpu as pltpu  # noqa: F401  (TPU backend)

# ----- small model config (consistent with the module's __init__ signature) --
N_LAYERS = 2
N_EMBEDDINGS = 40          # vocab size
N_POS_EMBEDDINGS = 16
EMBEDDINGS_SIZE = 32
PADDING_IDX = 0
N_HEADS = 4
BOS_ID = 1
EOS_ID = 2
LN_EPS = 1e-5
VOCAB_PAD = 128            # lane-dense decoder output (V=40 zero-padded to 128)


# ----------------------------- kernel ----------------------------------------
def _layer_norm(x, g, b):
    mu = jnp.mean(x, axis=-1, keepdims=True)
    var = jnp.mean((x - mu) ** 2, axis=-1, keepdims=True)
    return (x - mu) * jax.lax.rsqrt(var + LN_EPS) * g + b


def _fused_forward_kernel(x_ref, pad_ref,
                          wq_ref, wk_ref, wv_ref, bq_ref, bk_ref, bv_ref,
                          wo_ref, bo_ref, ln1g_ref, ln1b_ref,
                          ff1w_ref, ff1b_ref, ff2w_ref, ff2b_ref,
                          ln2g_ref, ln2b_ref, dec_ref,
                          o_ref, *, n_layers, n_heads):
    """Entire forward pass (all transformer blocks + tied decoder), one call."""
    B, S, D = x_ref.shape
    H = n_heads

    # causal (future) mask — shared across batch / heads / layers
    row = jax.lax.broadcasted_iota(jnp.int32, (S, S), 0)
    col = jax.lax.broadcasted_iota(jnp.int32, (S, S), 1)
    causal = col > row

    dec_w = dec_ref[...]                                       # (D, VOCAB_PAD)

    for b in range(B):                                         # B=2: unrolled
        padb = pad_ref[b]                                      # (1, S) 1.0 = pad
        # additive mask; hoisted out of the layer loop (broadcasts aren't CSE'd)
        neg = jnp.where(causal | (padb > 0.5), -1e9, 0.0)      # (S, S)
        negh = jnp.broadcast_to(neg[None], (H, S, S))          # (H, S, S)

        h = x_ref[b]                                           # (S, D)
        for l in range(n_layers):                              # weights VMEM-resident
            # head-batched projections: no lane slicing, no concatenation.
            xh = jnp.broadcast_to(h[None], (H, S, D))
            q = jnp.einsum('hsd,hdf->hsf', xh, wq_ref[l],
                           preferred_element_type=jnp.float32) + bq_ref[l]
            k = jnp.einsum('hsd,hdf->hsf', xh, wk_ref[l],
                           preferred_element_type=jnp.float32) + bk_ref[l]
            v = jnp.einsum('hsd,hdf->hsf', xh, wv_ref[l],
                           preferred_element_type=jnp.float32) + bv_ref[l]

            # scores; 1/sqrt(dh) was pre-folded into wq/bq at wrapper time
            s = jnp.einsum('hqf,hkf->hqk', q, k,
                           preferred_element_type=jnp.float32) + negh
            s = s - jnp.max(s, axis=-1, keepdims=True)
            p = jnp.exp(s)
            w = p * pl.reciprocal(jnp.sum(p, axis=-1, keepdims=True), approx=True)

            a = jnp.einsum('hqk,hkf->hqf', w, v,
                           preferred_element_type=jnp.float32)   # (H, S, dh)
            # output projection folded per head, then summed (replaces concat)
            attn = jnp.sum(jnp.einsum('hsf,hfd->hsd', a, wo_ref[l],
                                      preferred_element_type=jnp.float32),
                           axis=0) + bo_ref[l]                   # (S, D)

            h1 = _layer_norm(h + attn, ln1g_ref[l], ln1b_ref[l])
            f = jnp.dot(h1, ff1w_ref[l],
                        preferred_element_type=jnp.float32) + ff1b_ref[l]
            f = jax.nn.gelu(f, approximate=True)   # tanh-GELU (matches module's gelu)
            f = jnp.dot(f, ff2w_ref[l],
                        preferred_element_type=jnp.float32) + ff2b_ref[l]
            h = _layer_norm(h1 + f, ln2g_ref[l], ln2b_ref[l])

        # tied decoder; lane-dense store (V padded to 128), sliced back outside
        o_ref[b] = jnp.dot(h, dec_w, preferred_element_type=jnp.float32)


# ------------------------------ model glue -----------------------------------
def init_params(key):
    std = 0.02
    keys = jax.random.split(key, 2 + N_LAYERS)
    emb = std * jax.random.normal(keys[0], (N_EMBEDDINGS, EMBEDDINGS_SIZE), jnp.float32)
    emb = emb.at[PADDING_IDX].set(0.0)                     # nn.Embedding padding_idx row
    pos = std * jax.random.normal(keys[1], (N_POS_EMBEDDINGS + 1, EMBEDDINGS_SIZE), jnp.float32)
    pos = pos.at[0].set(0.0)                               # positional padding row
    D = EMBEDDINGS_SIZE
    layers = []
    for i in range(N_LAYERS):
        lk = jax.random.split(keys[2 + i], 8)
        layers.append(dict(
            qkv_w=std * jax.random.normal(lk[0], (D, 3 * D), jnp.float32),
            qkv_b=std * jax.random.normal(lk[1], (1, 3 * D), jnp.float32),
            out_w=std * jax.random.normal(lk[2], (D, D), jnp.float32),
            out_b=std * jax.random.normal(lk[3], (1, D), jnp.float32),
            ln1_g=jnp.ones((1, D), jnp.float32),
            ln1_b=jnp.zeros((1, D), jnp.float32),
            ff1_w=std * jax.random.normal(lk[4], (D, 4 * D), jnp.float32),
            ff1_b=std * jax.random.normal(lk[5], (1, 4 * D), jnp.float32),
            ff2_w=std * jax.random.normal(lk[6], (4 * D, D), jnp.float32),
            ff2_b=std * jax.random.normal(lk[7], (1, D), jnp.float32),
            ln2_g=jnp.ones((1, D), jnp.float32),
            ln2_b=jnp.zeros((1, D), jnp.float32),
        ))
    return dict(emb=emb, pos=pos, layers=layers)


def transformer_model_forward(params, x_ids, contexts=()):
    # TransformerModel.forward(x, contexts=[]) -> decode(x, enc_contexts=[])
    # TODO(synk): encoder-context cross-attention (non-empty enc_contexts) and
    # beam-search generation are not part of the exercised forward and are omitted.
    B, S = x_ids.shape
    D, H, L = EMBEDDINGS_SIZE, N_HEADS, N_LAYERS
    dh = D // H

    pad = (x_ids == PADDING_IDX)
    positions = jnp.cumsum((~pad).astype(jnp.int32), axis=-1)
    positions = jnp.where(pad, 0, positions)
    positions = jnp.minimum(positions, N_POS_EMBEDDINGS)   # guard latent OOB if S > 16
    # embedding gather is glue (plain JAX); the hot path is the single fused kernel
    h = params['emb'][x_ids] * math.sqrt(D) + params['pos'][positions]
    pad3 = pad.astype(jnp.float32)[:, None, :]             # (B, 1, S)

    # trace-time repack: stacked per-layer, head-batched weight layout
    scale = 1.0 / math.sqrt(dh)
    ls = params['layers']
    stk = lambda fn: jnp.stack([fn(l) for l in ls], axis=0)
    wq = stk(lambda l: l['qkv_w'][:, :D].reshape(D, H, dh).transpose(1, 0, 2) * scale)
    wk = stk(lambda l: l['qkv_w'][:, D:2 * D].reshape(D, H, dh).transpose(1, 0, 2))
    wv = stk(lambda l: l['qkv_w'][:, 2 * D:].reshape(D, H, dh).transpose(1, 0, 2))
    bq = stk(lambda l: l['qkv_b'][0, :D].reshape(H, 1, dh) * scale)
    bk = stk(lambda l: l['qkv_b'][0, D:2 * D].reshape(H, 1, dh))
    bv = stk(lambda l: l['qkv_b'][0, 2 * D:].reshape(H, 1, dh))
    wo = stk(lambda l: l['out_w'].reshape(H, dh, D))
    bo = stk(lambda l: l['out_b'])
    ln1g = stk(lambda l: l['ln1_g']); ln1b = stk(lambda l: l['ln1_b'])
    ff1w = stk(lambda l: l['ff1_w']); ff1b = stk(lambda l: l['ff1_b'])
    ff2w = stk(lambda l: l['ff2_w']); ff2b = stk(lambda l: l['ff2_b'])
    ln2g = stk(lambda l: l['ln2_g']); ln2b = stk(lambda l: l['ln2_b'])

    # lane-dense tied decoder weight (V=40 zero-padded to 128 columns)
    dec_w = jnp.zeros((D, VOCAB_PAD), jnp.float32).at[:, :N_EMBEDDINGS].set(params['emb'].T)

    logits_padded = pl.pallas_call(
        functools.partial(_fused_forward_kernel, n_layers=L, n_heads=H),
        out_shape=jax.ShapeDtypeStruct((B, S, VOCAB_PAD), jnp.float32),
    )(h, pad3, wq, wk, wv, bq, bk, bv, wo, bo,
      ln1g, ln1b, ff1w, ff1b, ff2w, ff2b, ln2g, ln2b, dec_w)
    return logits_padded[:, :, :N_EMBEDDINGS]


# -------------------------- pure-JAX reference -------------------------------
def _reference_forward(params, x_ids):
    B, S = x_ids.shape
    D, H = EMBEDDINGS_SIZE, N_HEADS
    dh = D // H
    pad = (x_ids == PADDING_IDX)
    positions = jnp.cumsum((~pad).astype(jnp.int32), axis=-1)
    positions = jnp.where(pad, 0, positions)
    positions = jnp.minimum(positions, N_POS_EMBEDDINGS)
    h = params['emb'][x_ids] * math.sqrt(D) + params['pos'][positions]
    future = jnp.arange(S)[None, :] > jnp.arange(S)[:, None]
    for layer in params['layers']:
        qkv = h @ layer['qkv_w'] + layer['qkv_b'][0]
        q = qkv[..., :D].reshape(B, S, H, dh).transpose(0, 2, 1, 3)
        k = qkv[..., D:2 * D].reshape(B, S, H, dh).transpose(0, 2, 1, 3)
        v = qkv[..., 2 * D:].reshape(B, S, H, dh).transpose(0, 2, 1, 3)
        s = jnp.einsum('bhqd,bhkd->bhqk', q, k) / math.sqrt(dh)
        mask = future[None, None] | pad[:, None, None, :]
        s = jnp.where(mask, -1e9, s)
        w = jax.nn.softmax(s, axis=-1)
        a = jnp.einsum('bhqk,bhkd->bhqd', w, v).transpose(0, 2, 1, 3).reshape(B, S, D)
        a = a @ layer['out_w'] + layer['out_b'][0]
        h1 = _layer_norm(h + a, layer['ln1_g'][0], layer['ln1_b'][0])
        f = jax.nn.gelu(h1 @ layer['ff1_w'] + layer['ff1_b'][0], approximate=True)
        f = f @ layer['ff2_w'] + layer['ff2_b'][0]
        h = _layer_norm(h1 + f, layer['ln2_g'][0], layer['ln2_b'][0])
    return h @ params['emb'].T


# --------------------------------- main --------------------------------------
if __name__ == "__main__":
    key = jax.random.PRNGKey(0)
    pkey, xkey = jax.random.split(key)
    params = init_params(pkey)

    B, S = 2, 8
    x_ids = jax.random.randint(xkey, (B, S), 1, N_EMBEDDINGS, dtype=jnp.int32)
    x_ids = x_ids.at[0, 0].set(BOS_ID).at[1, 0].set(BOS_ID)
    x_ids = x_ids.at[1, 6:].set(PADDING_IDX)   # padded tail in second sequence

    logits = transformer_model_forward(params, x_ids)
    logits = jax.block_until_ready(logits)

    ref = _reference_forward(params, x_ids)
    assert logits.shape == (B, S, N_EMBEDDINGS)
    assert bool(jnp.all(jnp.isfinite(logits)))
    assert bool(jnp.allclose(logits, ref, rtol=2e-2, atol=2e-2))
    print("KERNEL_OK")
</pallas_src>

<mosaic_0001>
module attributes {stable_mosaic.version = 11 : i64} {
  func.func @_fused_forward_kernel(%arg0: memref<2x8x32xf32, #tpu.memory_space<vmem>>, %arg1: memref<2x1x8xf32, #tpu.memory_space<vmem>>, %arg2: memref<2x4x32x8xf32, #tpu.memory_space<vmem>>, %arg3: memref<2x4x32x8xf32, #tpu.memory_space<vmem>>, %arg4: memref<2x4x32x8xf32, #tpu.memory_space<vmem>>, %arg5: memref<2x4x1x8xf32, #tpu.memory_space<vmem>>, %arg6: memref<2x4x1x8xf32, #tpu.memory_space<vmem>>, %arg7: memref<2x4x1x8xf32, #tpu.memory_space<vmem>>, %arg8: memref<2x4x8x32xf32, #tpu.memory_space<vmem>>, %arg9: memref<2x1x32xf32, #tpu.memory_space<vmem>>, %arg10: memref<2x1x32xf32, #tpu.memory_space<vmem>>, %arg11: memref<2x1x32xf32, #tpu.memory_space<vmem>>, %arg12: memref<2x32x128xf32, #tpu.memory_space<vmem>>, %arg13: memref<2x1x128xf32, #tpu.memory_space<vmem>>, %arg14: memref<2x128x32xf32, #tpu.memory_space<vmem>>, %arg15: memref<2x1x32xf32, #tpu.memory_space<vmem>>, %arg16: memref<2x1x32xf32, #tpu.memory_space<vmem>>, %arg17: memref<2x1x32xf32, #tpu.memory_space<vmem>>, %arg18: memref<32x128xf32, #tpu.memory_space<vmem>>, %arg19: memref<2x8x128xf32, #tpu.memory_space<vmem>>) attributes {dimension_semantics = [], scalar_prefetch = 0 : i64, scratch_operands = 0 : i64, tpu.core_type = #tpu.core_type<tc>} {
    %0 = tpu.iota {dimensions = array<i32: 0>} : vector<8x8xi32>
    %1 = tpu.iota {dimensions = array<i32: 1>} : vector<8x8xi32>
    %2 = arith.cmpi sgt, %1, %0 : vector<8x8xi32>
    %c0 = arith.constant 0 : index
    %c0_0 = arith.constant 0 : index
    %3 = vector.load %arg18[%c0, %c0_0] : memref<32x128xf32, #tpu.memory_space<vmem>>, vector<32x128xf32>
    %c0_1 = arith.constant 0 : index
    %c0_2 = arith.constant 0 : index
    %c0_3 = arith.constant 0 : index
    %4 = vector.load %arg1[%c0_1, %c0_2, %c0_3] : memref<2x1x8xf32, #tpu.memory_space<vmem>>, vector<1x1x8xf32>
    %5 = vector.shape_cast %4 : vector<1x1x8xf32> to vector<1x8xf32>
    %cst = arith.constant 5.000000e-01 : f32
    %6 = vector.broadcast %cst : f32 to vector<1x8xf32>
    %7 = arith.cmpf ogt, %5, %6 : vector<1x8xf32>
    %8 = vector.broadcast %7 : vector<1x8xi1> to vector<8x8xi1>
    %9 = arith.ori %2, %8 : vector<8x8xi1>
    %cst_4 = arith.constant -1.000000e+09 : f32
    %cst_5 = arith.constant 0.000000e+00 : f32
    %10 = vector.broadcast %cst_4 : f32 to vector<8x8xf32>
    %11 = vector.broadcast %cst_5 : f32 to vector<8x8xf32>
    %12 = arith.select %9, %10, %11 : vector<8x8xi1>, vector<8x8xf32>
    %13 = vector.shape_cast %12 : vector<8x8xf32> to vector<1x8x8xf32>
    %14 = vector.shape_cast %13 : vector<1x8x8xf32> to vector<1x8x8xf32>
    %15 = vector.broadcast %14 : vector<1x8x8xf32> to vector<4x8x8xf32>
    %c0_6 = arith.constant 0 : index
    %c0_7 = arith.constant 0 : index
    %c0_8 = arith.constant 0 : index
    %16 = vector.load %arg0[%c0_6, %c0_7, %c0_8] : memref<2x8x32xf32, #tpu.memory_space<vmem>>, vector<1x8x32xf32>
    %17 = vector.shape_cast %16 : vector<1x8x32xf32> to vector<8x32xf32>
    %18 = vector.shape_cast %17 : vector<8x32xf32> to vector<1x8x32xf32>
    %19 = vector.shape_cast %18 : vector<1x8x32xf32> to vector<1x8x32xf32>
    %20 = vector.broadcast %19 : vector<1x8x32xf32> to vector<4x8x32xf32>
    %c0_9 = arith.constant 0 : index
    %c0_10 = arith.constant 0 : index
    %c0_11 = arith.constant 0 : index
    %c0_12 = arith.constant 0 : index
    %21 = vector.load %arg2[%c0_9, %c0_10, %c0_11, %c0_12] : memref<2x4x32x8xf32, #tpu.memory_space<vmem>>, vector<1x4x32x8xf32>
    %22 = vector.shape_cast %21 : vector<1x4x32x8xf32> to vector<4x32x8xf32>
    "tpu.trace_start"() <{level = 10 : i32, message = "hsd,hdf->hsf"}> : () -> ()
    %cst_13 = arith.constant dense<0.000000e+00> : vector<4x8x8xf32>
    %23 = tpu.matmul %20, %22, %cst_13 {dimension_numbers = #tpu.dot_dimension_numbers<[2], [1], [1], [2], [0, 0, 0, 1, 1, 2], [0], [0]>} : vector<4x8x32xf32>, vector<4x32x8xf32>, vector<4x8x8xf32> -> vector<4x8x8xf32>
    "tpu.trace_stop"() : () -> ()
    %c0_14 = arith.constant 0 : index
    %c0_15 = arith.constant 0 : index
    %c0_16 = arith.constant 0 : index
    %c0_17 = arith.constant 0 : index
    %24 = vector.load %arg5[%c0_14, %c0_15, %c0_16, %c0_17] : memref<2x4x1x8xf32, #tpu.memory_space<vmem>>, vector<1x4x1x8xf32>
    %25 = vector.shape_cast %24 : vector<1x4x1x8xf32> to vector<4x1x8xf32>
    %26 = vector.broadcast %25 : vector<4x1x8xf32> to vector<4x8x8xf32>
    %27 = arith.addf %23, %26 : vector<4x8x8xf32>
    %c0_18 = arith.constant 0 : index
    %c0_19 = arith.constant 0 : index
    %c0_20 = arith.constant 0 : index
    %c0_21 = arith.constant 0 : index
    %28 = vector.load %arg3[%c0_18, %c0_19, %c0_20, %c0_21] : memref<2x4x32x8xf32, #tpu.memory_space<vmem>>, vector<1x4x32x8xf32>
    %29 = vector.shape_cast %28 : vector<1x4x32x8xf32> to vector<4x32x8xf32>
    "tpu.trace_start"() <{level = 10 : i32, message = "hsd,hdf->hsf"}> : () -> ()
    %cst_22 = arith.constant dense<0.000000e+00> : vector<4x8x8xf32>
    %30 = tpu.matmul %20, %29, %cst_22 {dimension_numbers = #tpu.dot_dimension_numbers<[2], [1], [1], [2], [0, 0, 0, 1, 1, 2], [0], [0]>} : vector<4x8x32xf32>, vector<4x32x8xf32>, vector<4x8x8xf32> -> vector<4x8x8xf32>
    "tpu.trace_stop"() : () -> ()
    %c0_23 = arith.constant 0 : index
    %c0_24 = arith.constant 0 : index
    %c0_25 = arith.constant 0 : index
    %c0_26 = arith.constant 0 : index
    %31 = vector.load %arg6[%c0_23, %c0_24, %c0_25, %c0_26] : memref<2x4x1x8xf32, #tpu.memory_space<vmem>>, vector<1x4x1x8xf32>
    %32 = vector.shape_cast %31 : vector<1x4x1x8xf32> to vector<4x1x8xf32>
    %33 = vector.broadcast %32 : vector<4x1x8xf32> to vector<4x8x8xf32>
    %34 = arith.addf %30, %33 : vector<4x8x8xf32>
    %c0_27 = arith.constant 0 : index
    %c0_28 = arith.constant 0 : index
    %c0_29 = arith.constant 0 : index
    %c0_30 = arith.constant 0 : index
    %35 = vector.load %arg4[%c0_27, %c0_28, %c0_29, %c0_30] : memref<2x4x32x8xf32, #tpu.memory_space<vmem>>, vector<1x4x32x8xf32>
    %36 = vector.shape_cast %35 : vector<1x4x32x8xf32> to vector<4x32x8xf32>
    "tpu.trace_start"() <{level = 10 : i32, message = "hsd,hdf->hsf"}> : () -> ()
    %cst_31 = arith.constant dense<0.000000e+00> : vector<4x8x8xf32>
    %37 = tpu.matmul %20, %36, %cst_31 {dimension_numbers = #tpu.dot_dimension_numbers<[2], [1], [1], [2], [0, 0, 0, 1, 1, 2], [0], [0]>} : vector<4x8x32xf32>, vector<4x32x8xf32>, vector<4x8x8xf32> -> vector<4x8x8xf32>
    "tpu.trace_stop"() : () -> ()
    %c0_32 = arith.constant 0 : index
    %c0_33 = arith.constant 0 : index
    %c0_34 = arith.constant 0 : index
    %c0_35 = arith.constant 0 : index
    %38 = vector.load %arg7[%c0_32, %c0_33, %c0_34, %c0_35] : memref<2x4x1x8xf32, #tpu.memory_space<vmem>>, vector<1x4x1x8xf32>
    %39 = vector.shape_cast %38 : vector<1x4x1x8xf32> to vector<4x1x8xf32>
    %40 = vector.broadcast %39 : vector<4x1x8xf32> to vector<4x8x8xf32>
    %41 = arith.addf %37, %40 : vector<4x8x8xf32>
    "tpu.trace_start"() <{level = 10 : i32, message = "hqf,hkf->hqk"}> : () -> ()
    %cst_36 = arith.constant dense<0.000000e+00> : vector<4x8x8xf32>
    %42 = tpu.matmul %27, %34, %cst_36 {dimension_numbers = #tpu.dot_dimension_numbers<[2], [2], [1], [1], [0, 0, 0, 1, 1, 1], [0], [0]>} : vector<4x8x8xf32>, vector<4x8x8xf32>, vector<4x8x8xf32> -> vector<4x8x8xf32>
    "tpu.trace_stop"() : () -> ()
    %43 = arith.addf %42, %15 : vector<4x8x8xf32>
    %cst_37 = arith.constant dense<0xFF800000> : vector<4x8xf32>
    %44 = vector.multi_reduction <maximumf>, %43, %cst_37 [2] : vector<4x8x8xf32> to vector<4x8xf32>
    %45 = vector.shape_cast %44 : vector<4x8xf32> to vector<4x8x1xf32>
    %46 = vector.broadcast %45 : vector<4x8x1xf32> to vector<4x8x8xf32>
    %47 = arith.subf %43, %46 : vector<4x8x8xf32>
    %48 = math.exp %47 : vector<4x8x8xf32>
    %cst_38 = arith.constant dense<0.000000e+00> : vector<4x8xf32>
    %49 = vector.multi_reduction <add>, %48, %cst_38 [2] : vector<4x8x8xf32> to vector<4x8xf32>
    %50 = vector.shape_cast %49 : vector<4x8xf32> to vector<4x8x1xf32>
    %51 = tpu.reciprocal %50 {approx = true} : vector<4x8x1xf32> -> vector<4x8x1xf32>
    %52 = vector.broadcast %51 : vector<4x8x1xf32> to vector<4x8x8xf32>
    %53 = arith.mulf %48, %52 : vector<4x8x8xf32>
    "tpu.trace_start"() <{level = 10 : i32, message = "hqk,hkf->hqf"}> : () -> ()
    %cst_39 = arith.constant dense<0.000000e+00> : vector<4x8x8xf32>
    %54 = tpu.matmul %53, %41, %cst_39 {dimension_numbers = #tpu.dot_dimension_numbers<[2], [1], [1], [2], [0, 0, 0, 1, 1, 2], [0], [0]>} : vector<4x8x8xf32>, vector<4x8x8xf32>, vector<4x8x8xf32> -> vector<4x8x8xf32>
    "tpu.trace_stop"() : () -> ()
    %c0_40 = arith.constant 0 : index
    %c0_41 = arith.constant 0 : index
    %c0_42 = arith.constant 0 : index
    %c0_43 = arith.constant 0 : index
    %55 = vector.load %arg8[%c0_40, %c0_41, %c0_42, %c0_43] : memref<2x4x8x32xf32, #tpu.memory_space<vmem>>, vector<1x4x8x32xf32>
    %56 = vector.shape_cast %55 : vector<1x4x8x32xf32> to vector<4x8x32xf32>
    "tpu.trace_start"() <{level = 10 : i32, message = "hsf,hfd->hsd"}> : () -> ()
    %cst_44 = arith.constant dense<0.000000e+00> : vector<4x8x32xf32>
    %57 = tpu.matmul %54, %56, %cst_44 {dimension_numbers = #tpu.dot_dimension_numbers<[2], [1], [1], [2], [0, 0, 0, 1, 1, 2], [0], [0]>} : vector<4x8x8xf32>, vector<4x8x32xf32>, vector<4x8x32xf32> -> vector<4x8x32xf32>
    "tpu.trace_stop"() : () -> ()
    %cst_45 = arith.constant dense<0.000000e+00> : vector<8x32xf32>
    %58 = vector.multi_reduction <add>, %57, %cst_45 [0] : vector<4x8x32xf32> to vector<8x32xf32>
    %c0_46 = arith.constant 0 : index
    %c0_47 = arith.constant 0 : index
    %c0_48 = arith.constant 0 : index
    %59 = vector.load %arg9[%c0_46, %c0_47, %c0_48] : memref<2x1x32xf32, #tpu.memory_space<vmem>>, vector<1x1x32xf32>
    %60 = vector.shape_cast %59 : vector<1x1x32xf32> to vector<1x32xf32>
    %61 = vector.broadcast %60 : vector<1x32xf32> to vector<8x32xf32>
    %62 = arith.addf %58, %61 : vector<8x32xf32>
    %63 = arith.addf %17, %62 : vector<8x32xf32>
    %c0_49 = arith.constant 0 : index
    %c0_50 = arith.constant 0 : index
    %c0_51 = arith.constant 0 : index
    %64 = vector.load %arg10[%c0_49, %c0_50, %c0_51] : memref<2x1x32xf32, #tpu.memory_space<vmem>>, vector<1x1x32xf32>
    %65 = vector.shape_cast %64 : vector<1x1x32xf32> to vector<1x32xf32>
    %c0_52 = arith.constant 0 : index
    %c0_53 = arith.constant 0 : index
    %c0_54 = arith.constant 0 : index
    %66 = vector.load %arg11[%c0_52, %c0_53, %c0_54] : memref<2x1x32xf32, #tpu.memory_space<vmem>>, vector<1x1x32xf32>
    %67 = vector.shape_cast %66 : vector<1x1x32xf32> to vector<1x32xf32>
    %cst_55 = arith.constant dense<0.000000e+00> : vector<8xf32>
    %68 = vector.multi_reduction <add>, %63, %cst_55 [1] : vector<8x32xf32> to vector<8xf32>
    %69 = vector.shape_cast %68 : vector<8xf32> to vector<8x1xf32>
    %cst_56 = arith.constant 3.200000e+01 : f32
    %70 = vector.broadcast %cst_56 : f32 to vector<8x1xf32>
    %71 = arith.divf %69, %70 : vector<8x1xf32>
    %72 = vector.broadcast %71 : vector<8x1xf32> to vector<8x32xf32>
    %73 = arith.subf %63, %72 : vector<8x32xf32>
    %74 = arith.mulf %73, %73 : vector<8x32xf32>
    %cst_57 = arith.constant dense<0.000000e+00> : vector<8xf32>
    %75 = vector.multi_reduction <add>, %74, %cst_57 [1] : vector<8x32xf32> to vector<8xf32>
    %76 = vector.shape_cast %75 : vector<8xf32> to vector<8x1xf32>
    %cst_58 = arith.constant 3.200000e+01 : f32
    %77 = vector.broadcast %cst_58 : f32 to vector<8x1xf32>
    %78 = arith.divf %76, %77 : vector<8x1xf32>
    %79 = vector.broadcast %71 : vector<8x1xf32> to vector<8x32xf32>
    %80 = arith.subf %63, %79 : vector<8x32xf32>
    %cst_59 = arith.constant 9.99999974E-6 : f32
    %81 = vector.broadcast %cst_59 : f32 to vector<8x1xf32>
    %82 = arith.addf %78, %81 : vector<8x1xf32>
    %83 = math.rsqrt %82 : vector<8x1xf32>
    %84 = vector.broadcast %83 : vector<8x1xf32> to vector<8x32xf32>
    %85 = arith.mulf %80, %84 : vector<8x32xf32>
    %86 = vector.broadcast %65 : vector<1x32xf32> to vector<8x32xf32>
    %87 = arith.mulf %85, %86 : vector<8x32xf32>
    %88 = vector.broadcast %67 : vector<1x32xf32> to vector<8x32xf32>
    %89 = arith.addf %87, %88 : vector<8x32xf32>
    %c0_60 = arith.constant 0 : index
    %c0_61 = arith.constant 0 : index
    %c0_62 = arith.constant 0 : index
    %90 = vector.load %arg12[%c0_60, %c0_61, %c0_62] : memref<2x32x128xf32, #tpu.memory_space<vmem>>, vector<1x32x128xf32>
    %91 = vector.shape_cast %90 : vector<1x32x128xf32> to vector<32x128xf32>
    %cst_63 = arith.constant dense<0.000000e+00> : vector<8x128xf32>
    %92 = tpu.matmul %89, %91, %cst_63 {dimension_numbers = #tpu.dot_dimension_numbers<[1], [0], [0], [1], [0, 0, 1, 1], [], []>} : vector<8x32xf32>, vector<32x128xf32>, vector<8x128xf32> -> vector<8x128xf32>
    %c0_64 = arith.constant 0 : index
    %c0_65 = arith.constant 0 : index
    %c0_66 = arith.constant 0 : index
    %93 = vector.load %arg13[%c0_64, %c0_65, %c0_66] : memref<2x1x128xf32, #tpu.memory_space<vmem>>, vector<1x1x128xf32>
    %94 = vector.shape_cast %93 : vector<1x1x128xf32> to vector<1x128xf32>
    %95 = vector.broadcast %94 : vector<1x128xf32> to vector<8x128xf32>
    %96 = arith.addf %92, %95 : vector<8x128xf32>
    %97 = arith.mulf %96, %96 : vector<8x128xf32>
    %98 = arith.mulf %96, %97 : vector<8x128xf32>
    %cst_67 = arith.constant 4.471500e-02 : f32
    %99 = vector.broadcast %cst_67 : f32 to vector<8x128xf32>
    %100 = arith.mulf %99, %98 : vector<8x128xf32>
    %101 = arith.addf %96, %100 : vector<8x128xf32>
    %cst_68 = arith.constant 0.797884583 : f32
    %102 = vector.broadcast %cst_68 : f32 to vector<8x128xf32>
    %103 = arith.mulf %102, %101 : vector<8x128xf32>
    %104 = math.tanh %103 : vector<8x128xf32>
    %cst_69 = arith.constant 1.000000e+00 : f32
    %105 = vector.broadcast %cst_69 : f32 to vector<8x128xf32>
    %106 = arith.addf %105, %104 : vector<8x128xf32>
    %cst_70 = arith.constant 5.000000e-01 : f32
    %107 = vector.broadcast %cst_70 : f32 to vector<8x128xf32>
    %108 = arith.mulf %107, %106 : vector<8x128xf32>
    %109 = arith.mulf %96, %108 : vector<8x128xf32>
    %c0_71 = arith.constant 0 : index
    %c0_72 = arith.constant 0 : index
    %c0_73 = arith.constant 0 : index
    %110 = vector.load %arg14[%c0_71, %c0_72, %c0_73] : memref<2x128x32xf32, #tpu.memory_space<vmem>>, vector<1x128x32xf32>
    %111 = vector.shape_cast %110 : vector<1x128x32xf32> to vector<128x32xf32>
    %cst_74 = arith.constant dense<0.000000e+00> : vector<8x32xf32>
    %112 = tpu.matmul %109, %111, %cst_74 {dimension_numbers = #tpu.dot_dimension_numbers<[1], [0], [0], [1], [0, 0, 1, 1], [], []>} : vector<8x128xf32>, vector<128x32xf32>, vector<8x32xf32> -> vector<8x32xf32>
    %c0_75 = arith.constant 0 : index
    %c0_76 = arith.constant 0 : index
    %c0_77 = arith.constant 0 : index
    %113 = vector.load %arg15[%c0_75, %c0_76, %c0_77] : memref<2x1x32xf32, #tpu.memory_space<vmem>>, vector<1x1x32xf32>
    %114 = vector.shape_cast %113 : vector<1x1x32xf32> to vector<1x32xf32>
    %115 = vector.broadcast %114 : vector<1x32xf32> to vector<8x32xf32>
    %116 = arith.addf %112, %115 : vector<8x32xf32>
    %117 = arith.addf %89, %116 : vector<8x32xf32>
    %c0_78 = arith.constant 0 : index
    %c0_79 = arith.constant 0 : index
    %c0_80 = arith.constant 0 : index
    %118 = vector.load %arg16[%c0_78, %c0_79, %c0_80] : memref<2x1x32xf32, #tpu.memory_space<vmem>>, vector<1x1x32xf32>
    %119 = vector.shape_cast %118 : vector<1x1x32xf32> to vector<1x32xf32>
    %c0_81 = arith.constant 0 : index
    %c0_82 = arith.constant 0 : index
    %c0_83 = arith.constant 0 : index
    %120 = vector.load %arg17[%c0_81, %c0_82, %c0_83] : memref<2x1x32xf32, #tpu.memory_space<vmem>>, vector<1x1x32xf32>
    %121 = vector.shape_cast %120 : vector<1x1x32xf32> to vector<1x32xf32>
    %cst_84 = arith.constant dense<0.000000e+00> : vector<8xf32>
    %122 = vector.multi_reduction <add>, %117, %cst_84 [1] : vector<8x32xf32> to vector<8xf32>
    %123 = vector.shape_cast %122 : vector<8xf32> to vector<8x1xf32>
    %cst_85 = arith.constant 3.200000e+01 : f32
    %124 = vector.broadcast %cst_85 : f32 to vector<8x1xf32>
    %125 = arith.divf %123, %124 : vector<8x1xf32>
    %126 = vector.broadcast %125 : vector<8x1xf32> to vector<8x32xf32>
    %127 = arith.subf %117, %126 : vector<8x32xf32>
    %128 = arith.mulf %127, %127 : vector<8x32xf32>
    %cst_86 = arith.constant dense<0.000000e+00> : vector<8xf32>
    %129 = vector.multi_reduction <add>, %128, %cst_86 [1] : vector<8x32xf32> to vector<8xf32>
    %130 = vector.shape_cast %129 : vector<8xf32> to vector<8x1xf32>
    %cst_87 = arith.constant 3.200000e+01 : f32
    %131 = vector.broadcast %cst_87 : f32 to vector<8x1xf32>
    %132 = arith.divf %130, %131 : vector<8x1xf32>
    %133 = vector.broadcast %125 : vector<8x1xf32> to vector<8x32xf32>
    %134 = arith.subf %117, %133 : vector<8x32xf32>
    %cst_88 = arith.constant 9.99999974E-6 : f32
    %135 = vector.broadcast %cst_88 : f32 to vector<8x1xf32>
    %136 = arith.addf %132, %135 : vector<8x1xf32>
    %137 = math.rsqrt %136 : vector<8x1xf32>
    %138 = vector.broadcast %137 : vector<8x1xf32> to vector<8x32xf32>
    %139 = arith.mulf %134, %138 : vector<8x32xf32>
    %140 = vector.broadcast %119 : vector<1x32xf32> to vector<8x32xf32>
    %141 = arith.mulf %139, %140 : vector<8x32xf32>
    %142 = vector.broadcast %121 : vector<1x32xf32> to vector<8x32xf32>
    %143 = arith.addf %141, %142 : vector<8x32xf32>
    %144 = vector.shape_cast %143 : vector<8x32xf32> to vector<1x8x32xf32>
    %145 = vector.shape_cast %144 : vector<1x8x32xf32> to vector<1x8x32xf32>
    %146 = vector.broadcast %145 : vector<1x8x32xf32> to vector<4x8x32xf32>
    %c1 = arith.constant 1 : index
    %c0_89 = arith.constant 0 : index
    %c0_90 = arith.constant 0 : index
    %c0_91 = arith.constant 0 : index
    %147 = vector.load %arg2[%c1, %c0_89, %c0_90, %c0_91] : memref<2x4x32x8xf32, #tpu.memory_space<vmem>>, vector<1x4x32x8xf32>
    %148 = vector.shape_cast %147 : vector<1x4x32x8xf32> to vector<4x32x8xf32>
    "tpu.trace_start"() <{level = 10 : i32, message = "hsd,hdf->hsf"}> : () -> ()
    %cst_92 = arith.constant dense<0.000000e+00> : vector<4x8x8xf32>
    %149 = tpu.matmul %146, %148, %cst_92 {dimension_numbers = #tpu.dot_dimension_numbers<[2], [1], [1], [2], [0, 0, 0, 1, 1, 2], [0], [0]>} : vector<4x8x32xf32>, vector<4x32x8xf32>, vector<4x8x8xf32> -> vector<4x8x8xf32>
    "tpu.trace_stop"() : () -> ()
    %c1_93 = arith.constant 1 : index
    %c0_94 = arith.constant 0 : index
    %c0_95 = arith.constant 0 : index
    %c0_96 = arith.constant 0 : index
    %150 = vector.load %arg5[%c1_93, %c0_94, %c0_95, %c0_96] : memref<2x4x1x8xf32, #tpu.memory_space<vmem>>, vector<1x4x1x8xf32>
    %151 = vector.shape_cast %150 : vector<1x4x1x8xf32> to vector<4x1x8xf32>
    %152 = vector.broadcast %151 : vector<4x1x8xf32> to vector<4x8x8xf32>
    %153 = arith.addf %149, %152 : vector<4x8x8xf32>
    %c1_97 = arith.constant 1 : index
    %c0_98 = arith.constant 0 : index
    %c0_99 = arith.constant 0 : index
    %c0_100 = arith.constant 0 : index
    %154 = vector.load %arg3[%c1_97, %c0_98, %c0_99, %c0_100] : memref<2x4x32x8xf32, #tpu.memory_space<vmem>>, vector<1x4x32x8xf32>
    %155 = vector.shape_cast %154 : vector<1x4x32x8xf32> to vector<4x32x8xf32>
    "tpu.trace_start"() <{level = 10 : i32, message = "hsd,hdf->hsf"}> : () -> ()
    %cst_101 = arith.constant dense<0.000000e+00> : vector<4x8x8xf32>
    %156 = tpu.matmul %146, %155, %cst_101 {dimension_numbers = #tpu.dot_dimension_numbers<[2], [1], [1], [2], [0, 0, 0, 1, 1, 2], [0], [0]>} : vector<4x8x32xf32>, vector<4x32x8xf32>, vector<4x8x8xf32> -> vector<4x8x8xf32>
    "tpu.trace_stop"() : () -> ()
    %c1_102 = arith.constant 1 : index
    %c0_103 = arith.constant 0 : index
    %c0_104 = arith.constant 0 : index
    %c0_105 = arith.constant 0 : index
    %157 = vector.load %arg6[%c1_102, %c0_103, %c0_104, %c0_105] : memref<2x4x1x8xf32, #tpu.memory_space<vmem>>, vector<1x4x1x8xf32>
    %158 = vector.shape_cast %157 : vector<1x4x1x8xf32> to vector<4x1x8xf32>
    %159 = vector.broadcast %158 : vector<4x1x8xf32> to vector<4x8x8xf32>
    %160 = arith.addf %156, %159 : vector<4x8x8xf32>
    %c1_106 = arith.constant 1 : index
    %c0_107 = arith.constant 0 : index
    %c0_108 = arith.constant 0 : index
    %c0_109 = arith.constant 0 : index
    %161 = vector.load %arg4[%c1_106, %c0_107, %c0_108, %c0_109] : memref<2x4x32x8xf32, #tpu.memory_space<vmem>>, vector<1x4x32x8xf32>
    %162 = vector.shape_cast %161 : vector<1x4x32x8xf32> to vector<4x32x8xf32>
    "tpu.trace_start"() <{level = 10 : i32, message = "hsd,hdf->hsf"}> : () -> ()
    %cst_110 = arith.constant dense<0.000000e+00> : vector<4x8x8xf32>
    %163 = tpu.matmul %146, %162, %cst_110 {dimension_numbers = #tpu.dot_dimension_numbers<[2], [1], [1], [2], [0, 0, 0, 1, 1, 2], [0], [0]>} : vector<4x8x32xf32>, vector<4x32x8xf32>, vector<4x8x8xf32> -> vector<4x8x8xf32>
    "tpu.trace_stop"() : () -> ()
    %c1_111 = arith.constant 1 : index
    %c0_112 = arith.constant 0 : index
    %c0_113 = arith.constant 0 : index
    %c0_114 = arith.constant 0 : index
    %164 = vector.load %arg7[%c1_111, %c0_112, %c0_113, %c0_114] : memref<2x4x1x8xf32, #tpu.memory_space<vmem>>, vector<1x4x1x8xf32>
    %165 = vector.shape_cast %164 : vector<1x4x1x8xf32> to vector<4x1x8xf32>
    %166 = vector.broadcast %165 : vector<4x1x8xf32> to vector<4x8x8xf32>
    %167 = arith.addf %163, %166 : vector<4x8x8xf32>
    "tpu.trace_start"() <{level = 10 : i32, message = "hqf,hkf->hqk"}> : () -> ()
    %cst_115 = arith.constant dense<0.000000e+00> : vector<4x8x8xf32>
    %168 = tpu.matmul %153, %160, %cst_115 {dimension_numbers = #tpu.dot_dimension_numbers<[2], [2], [1], [1], [0, 0, 0, 1, 1, 1], [0], [0]>} : vector<4x8x8xf32>, vector<4x8x8xf32>, vector<4x8x8xf32> -> vector<4x8x8xf32>
    "tpu.trace_stop"() : () -> ()
    %169 = arith.addf %168, %15 : vector<4x8x8xf32>
    %cst_116 = arith.constant dense<0xFF800000> : vector<4x8xf32>
    %170 = vector.multi_reduction <maximumf>, %169, %cst_116 [2] : vector<4x8x8xf32> to vector<4x8xf32>
    %171 = vector.shape_cast %170 : vector<4x8xf32> to vector<4x8x1xf32>
    %172 = vector.broadcast %171 : vector<4x8x1xf32> to vector<4x8x8xf32>
    %173 = arith.subf %169, %172 : vector<4x8x8xf32>
    %174 = math.exp %173 : vector<4x8x8xf32>
    %cst_117 = arith.constant dense<0.000000e+00> : vector<4x8xf32>
    %175 = vector.multi_reduction <add>, %174, %cst_117 [2] : vector<4x8x8xf32> to vector<4x8xf32>
    %176 = vector.shape_cast %175 : vector<4x8xf32> to vector<4x8x1xf32>
    %177 = tpu.reciprocal %176 {approx = true} : vector<4x8x1xf32> -> vector<4x8x1xf32>
    %178 = vector.broadcast %177 : vector<4x8x1xf32> to vector<4x8x8xf32>
    %179 = arith.mulf %174, %178 : vector<4x8x8xf32>
    "tpu.trace_start"() <{level = 10 : i32, message = "hqk,hkf->hqf"}> : () -> ()
    %cst_118 = arith.constant dense<0.000000e+00> : vector<4x8x8xf32>
    %180 = tpu.matmul %179, %167, %cst_118 {dimension_numbers = #tpu.dot_dimension_numbers<[2], [1], [1], [2], [0, 0, 0, 1, 1, 2], [0], [0]>} : vector<4x8x8xf32>, vector<4x8x8xf32>, vector<4x8x8xf32> -> vector<4x8x8xf32>
    "tpu.trace_stop"() : () -> ()
    %c1_119 = arith.constant 1 : index
    %c0_120 = arith.constant 0 : index
    %c0_121 = arith.constant 0 : index
    %c0_122 = arith.constant 0 : index
    %181 = vector.load %arg8[%c1_119, %c0_120, %c0_121, %c0_122] : memref<2x4x8x32xf32, #tpu.memory_space<vmem>>, vector<1x4x8x32xf32>
    %182 = vector.shape_cast %181 : vector<1x4x8x32xf32> to vector<4x8x32xf32>
    "tpu.trace_start"() <{level = 10 : i32, message = "hsf,hfd->hsd"}> : () -> ()
    %cst_123 = arith.constant dense<0.000000e+00> : vector<4x8x32xf32>
    %183 = tpu.matmul %180, %182, %cst_123 {dimension_numbers = #tpu.dot_dimension_numbers<[2], [1], [1], [2], [0, 0, 0, 1, 1, 2], [0], [0]>} : vector<4x8x8xf32>, vector<4x8x32xf32>, vector<4x8x32xf32> -> vector<4x8x32xf32>
    "tpu.trace_stop"() : () -> ()
    %cst_124 = arith.constant dense<0.000000e+00> : vector<8x32xf32>
    %184 = vector.multi_reduction <add>, %183, %cst_124 [0] : vector<4x8x32xf32> to vector<8x32xf32>
    %c1_125 = arith.constant 1 : index
    %c0_126 = arith.constant 0 : index
    %c0_127 = arith.constant 0 : index
    %185 = vector.load %arg9[%c1_125, %c0_126, %c0_127] : memref<2x1x32xf32, #tpu.memory_space<vmem>>, vector<1x1x32xf32>
    %186 = vector.shape_cast %185 : vector<1x1x32xf32> to vector<1x32xf32>
    %187 = vector.broadcast %186 : vector<1x32xf32> to vector<8x32xf32>
    %188 = arith.addf %184, %187 : vector<8x32xf32>
    %189 = arith.addf %143, %188 : vector<8x32xf32>
    %c1_128 = arith.constant 1 : index
    %c0_129 = arith.constant 0 : index
    %c0_130 = arith.constant 0 : index
    %190 = vector.load %arg10[%c1_128, %c0_129, %c0_130] : memref<2x1x32xf32, #tpu.memory_space<vmem>>, vector<1x1x32xf32>
    %191 = vector.shape_cast %190 : vector<1x1x32xf32> to vector<1x32xf32>
    %c1_131 = arith.constant 1 : index
    %c0_132 = arith.constant 0 : index
    %c0_133 = arith.constant 0 : index
    %192 = vector.load %arg11[%c1_131, %c0_132, %c0_133] : memref<2x1x32xf32, #tpu.memory_space<vmem>>, vector<1x1x32xf32>
    %193 = vector.shape_cast %192 : vector<1x1x32xf32> to vector<1x32xf32>
    %cst_134 = arith.constant dense<0.000000e+00> : vector<8xf32>
    %194 = vector.multi_reduction <add>, %189, %cst_134 [1] : vector<8x32xf32> to vector<8xf32>
    %195 = vector.shape_cast %194 : vector<8xf32> to vector<8x1xf32>
    %cst_135 = arith.constant 3.200000e+01 : f32
    %196 = vector.broadcast %cst_135 : f32 to vector<8x1xf32>
    %197 = arith.divf %195, %196 : vector<8x1xf32>
    %198 = vector.broadcast %197 : vector<8x1xf32> to vector<8x32xf32>
    %199 = arith.subf %189, %198 : vector<8x32xf32>
    %200 = arith.mulf %199, %199 : vector<8x32xf32>
    %cst_136 = arith.constant dense<0.000000e+00> : vector<8xf32>
    %201 = vector.multi_reduction <add>, %200, %cst_136 [1] : vector<8x32xf32> to vector<8xf32>
    %202 = vector.shape_cast %201 : vector<8xf32> to vector<8x1xf32>
    %cst_137 = arith.constant 3.200000e+01 : f32
    %203 = vector.broadcast %cst_137 : f32 to vector<8x1xf32>
    %204 = arith.divf %202, %203 : vector<8x1xf32>
    %205 = vector.broadcast %197 : vector<8x1xf32> to vector<8x32xf32>
    %206 = arith.subf %189, %205 : vector<8x32xf32>
    %cst_138 = arith.constant 9.99999974E-6 : f32
    %207 = vector.broadcast %cst_138 : f32 to vector<8x1xf32>
    %208 = arith.addf %204, %207 : vector<8x1xf32>
    %209 = math.rsqrt %208 : vector<8x1xf32>
    %210 = vector.broadcast %209 : vector<8x1xf32> to vector<8x32xf32>
    %211 = arith.mulf %206, %210 : vector<8x32xf32>
    %212 = vector.broadcast %191 : vector<1x32xf32> to vector<8x32xf32>
    %213 = arith.mulf %211, %212 : vector<8x32xf32>
    %214 = vector.broadcast %193 : vector<1x32xf32> to vector<8x32xf32>
    %215 = arith.addf %213, %214 : vector<8x32xf32>
    %c1_139 = arith.constant 1 : index
    %c0_140 = arith.constant 0 : index
    %c0_141 = arith.constant 0 : index
    %216 = vector.load %arg12[%c1_139, %c0_140, %c0_141] : memref<2x32x128xf32, #tpu.memory_space<vmem>>, vector<1x32x128xf32>
    %217 = vector.shape_cast %216 : vector<1x32x128xf32> to vector<32x128xf32>
    %cst_142 = arith.constant dense<0.000000e+00> : vector<8x128xf32>
    %218 = tpu.matmul %215, %217, %cst_142 {dimension_numbers = #tpu.dot_dimension_numbers<[1], [0], [0], [1], [0, 0, 1, 1], [], []>} : vector<8x32xf32>, vector<32x128xf32>, vector<8x128xf32> -> vector<8x128xf32>
    %c1_143 = arith.constant 1 : index
    %c0_144 = arith.constant 0 : index
    %c0_145 = arith.constant 0 : index
    %219 = vector.load %arg13[%c1_143, %c0_144, %c0_145] : memref<2x1x128xf32, #tpu.memory_space<vmem>>, vector<1x1x128xf32>
    %220 = vector.shape_cast %219 : vector<1x1x128xf32> to vector<1x128xf32>
    %221 = vector.broadcast %220 : vector<1x128xf32> to vector<8x128xf32>
    %222 = arith.addf %218, %221 : vector<8x128xf32>
    %223 = arith.mulf %222, %222 : vector<8x128xf32>
    %224 = arith.mulf %222, %223 : vector<8x128xf32>
    %cst_146 = arith.constant 4.471500e-02 : f32
    %225 = vector.broadcast %cst_146 : f32 to vector<8x128xf32>
    %226 = arith.mulf %225, %224 : vector<8x128xf32>
    %227 = arith.addf %222, %226 : vector<8x128xf32>
    %cst_147 = arith.constant 0.797884583 : f32
    %228 = vector.broadcast %cst_147 : f32 to vector<8x128xf32>
    %229 = arith.mulf %228, %227 : vector<8x128xf32>
    %230 = math.tanh %229 : vector<8x128xf32>
    %cst_148 = arith.constant 1.000000e+00 : f32
    %231 = vector.broadcast %cst_148 : f32 to vector<8x128xf32>
    %232 = arith.addf %231, %230 : vector<8x128xf32>
    %cst_149 = arith.constant 5.000000e-01 : f32
    %233 = vector.broadcast %cst_149 : f32 to vector<8x128xf32>
    %234 = arith.mulf %233, %232 : vector<8x128xf32>
    %235 = arith.mulf %222, %234 : vector<8x128xf32>
    %c1_150 = arith.constant 1 : index
    %c0_151 = arith.constant 0 : index
    %c0_152 = arith.constant 0 : index
    %236 = vector.load %arg14[%c1_150, %c0_151, %c0_152] : memref<2x128x32xf32, #tpu.memory_space<vmem>>, vector<1x128x32xf32>
    %237 = vector.shape_cast %236 : vector<1x128x32xf32> to vector<128x32xf32>
    %cst_153 = arith.constant dense<0.000000e+00> : vector<8x32xf32>
    %238 = tpu.matmul %235, %237, %cst_153 {dimension_numbers = #tpu.dot_dimension_numbers<[1], [0], [0], [1], [0, 0, 1, 1], [], []>} : vector<8x128xf32>, vector<128x32xf32>, vector<8x32xf32> -> vector<8x32xf32>
    %c1_154 = arith.constant 1 : index
    %c0_155 = arith.constant 0 : index
    %c0_156 = arith.constant 0 : index
    %239 = vector.load %arg15[%c1_154, %c0_155, %c0_156] : memref<2x1x32xf32, #tpu.memory_space<vmem>>, vector<1x1x32xf32>
    %240 = vector.shape_cast %239 : vector<1x1x32xf32> to vector<1x32xf32>
    %241 = vector.broadcast %240 : vector<1x32xf32> to vector<8x32xf32>
    %242 = arith.addf %238, %241 : vector<8x32xf32>
    %243 = arith.addf %215, %242 : vector<8x32xf32>
    %c1_157 = arith.constant 1 : index
    %c0_158 = arith.constant 0 : index
    %c0_159 = arith.constant 0 : index
    %244 = vector.load %arg16[%c1_157, %c0_158, %c0_159] : memref<2x1x32xf32, #tpu.memory_space<vmem>>, vector<1x1x32xf32>
    %245 = vector.shape_cast %244 : vector<1x1x32xf32> to vector<1x32xf32>
    %c1_160 = arith.constant 1 : index
    %c0_161 = arith.constant 0 : index
    %c0_162 = arith.constant 0 : index
    %246 = vector.load %arg17[%c1_160, %c0_161, %c0_162] : memref<2x1x32xf32, #tpu.memory_space<vmem>>, vector<1x1x32xf32>
    %247 = vector.shape_cast %246 : vector<1x1x32xf32> to vector<1x32xf32>
    %cst_163 = arith.constant dense<0.000000e+00> : vector<8xf32>
    %248 = vector.multi_reduction <add>, %243, %cst_163 [1] : vector<8x32xf32> to vector<8xf32>
    %249 = vector.shape_cast %248 : vector<8xf32> to vector<8x1xf32>
    %cst_164 = arith.constant 3.200000e+01 : f32
    %250 = vector.broadcast %cst_164 : f32 to vector<8x1xf32>
    %251 = arith.divf %249, %250 : vector<8x1xf32>
    %252 = vector.broadcast %251 : vector<8x1xf32> to vector<8x32xf32>
    %253 = arith.subf %243, %252 : vector<8x32xf32>
    %254 = arith.mulf %253, %253 : vector<8x32xf32>
    %cst_165 = arith.constant dense<0.000000e+00> : vector<8xf32>
    %255 = vector.multi_reduction <add>, %254, %cst_165 [1] : vector<8x32xf32> to vector<8xf32>
    %256 = vector.shape_cast %255 : vector<8xf32> to vector<8x1xf32>
    %cst_166 = arith.constant 3.200000e+01 : f32
    %257 = vector.broadcast %cst_166 : f32 to vector<8x1xf32>
    %258 = arith.divf %256, %257 : vector<8x1xf32>
    %259 = vector.broadcast %251 : vector<8x1xf32> to vector<8x32xf32>
    %260 = arith.subf %243, %259 : vector<8x32xf32>
    %cst_167 = arith.constant 9.99999974E-6 : f32
    %261 = vector.broadcast %cst_167 : f32 to vector<8x1xf32>
    %262 = arith.addf %258, %261 : vector<8x1xf32>
    %263 = math.rsqrt %262 : vector<8x1xf32>
    %264 = vector.broadcast %263 : vector<8x1xf32> to vector<8x32xf32>
    %265 = arith.mulf %260, %264 : vector<8x32xf32>
    %266 = vector.broadcast %245 : vector<1x32xf32> to vector<8x32xf32>
    %267 = arith.mulf %265, %266 : vector<8x32xf32>
    %268 = vector.broadcast %247 : vector<1x32xf32> to vector<8x32xf32>
    %269 = arith.addf %267, %268 : vector<8x32xf32>
    %cst_168 = arith.constant dense<0.000000e+00> : vector<8x128xf32>
    %270 = tpu.matmul %269, %3, %cst_168 {dimension_numbers = #tpu.dot_dimension_numbers<[1], [0], [0], [1], [0, 0, 1, 1], [], []>} : vector<8x32xf32>, vector<32x128xf32>, vector<8x128xf32> -> vector<8x128xf32>
    %c0_169 = arith.constant 0 : index
    %c0_170 = arith.constant 0 : index
    %c0_171 = arith.constant 0 : index
    %271 = vector.load %arg19[%c0_169, %c0_170, %c0_171] : memref<2x8x128xf32, #tpu.memory_space<vmem>>, vector<1x8x128xf32>
    %272 = vector.shape_cast %271 : vector<1x8x128xf32> to vector<8x128xf32>
    %273 = vector.shape_cast %270 : vector<8x128xf32> to vector<1x8x128xf32>
    tpu.vector_store %arg19[%c0_169, %c0_170, %c0_171], %273 {strides = array<i32>} : memref<2x8x128xf32, #tpu.memory_space<vmem>>, vector<1x8x128xf32>,
    %c1_172 = arith.constant 1 : index
    %c0_173 = arith.constant 0 : index
    %c0_174 = arith.constant 0 : index
    %274 = vector.load %arg1[%c1_172, %c0_173, %c0_174] : memref<2x1x8xf32, #tpu.memory_space<vmem>>, vector<1x1x8xf32>
    %275 = vector.shape_cast %274 : vector<1x1x8xf32> to vector<1x8xf32>
    %cst_175 = arith.constant 5.000000e-01 : f32
    %276 = vector.broadcast %cst_175 : f32 to vector<1x8xf32>
    %277 = arith.cmpf ogt, %275, %276 : vector<1x8xf32>
    %278 = vector.broadcast %277 : vector<1x8xi1> to vector<8x8xi1>
    %279 = arith.ori %2, %278 : vector<8x8xi1>
    %cst_176 = arith.constant -1.000000e+09 : f32
    %cst_177 = arith.constant 0.000000e+00 : f32
    %280 = vector.broadcast %cst_176 : f32 to vector<8x8xf32>
    %281 = vector.broadcast %cst_177 : f32 to vector<8x8xf32>
    %282 = arith.select %279, %280, %281 : vector<8x8xi1>, vector<8x8xf32>
    %283 = vector.shape_cast %282 : vector<8x8xf32> to vector<1x8x8xf32>
    %284 = vector.shape_cast %283 : vector<1x8x8xf32> to vector<1x8x8xf32>
    %285 = vector.broadcast %284 : vector<1x8x8xf32> to vector<4x8x8xf32>
    %c1_178 = arith.constant 1 : index
    %c0_179 = arith.constant 0 : index
    %c0_180 = arith.constant 0 : index
    %286 = vector.load %arg0[%c1_178, %c0_179, %c0_180] : memref<2x8x32xf32, #tpu.memory_space<vmem>>, vector<1x8x32xf32>
    %287 = vector.shape_cast %286 : vector<1x8x32xf32> to vector<8x32xf32>
    %288 = vector.shape_cast %287 : vector<8x32xf32> to vector<1x8x32xf32>
    %289 = vector.shape_cast %288 : vector<1x8x32xf32> to vector<1x8x32xf32>
    %290 = vector.broadcast %289 : vector<1x8x32xf32> to vector<4x8x32xf32>
    %c0_181 = arith.constant 0 : index
    %c0_182 = arith.constant 0 : index
    %c0_183 = arith.constant 0 : index
    %c0_184 = arith.constant 0 : index
    %291 = vector.load %arg2[%c0_181, %c0_182, %c0_183, %c0_184] : memref<2x4x32x8xf32, #tpu.memory_space<vmem>>, vector<1x4x32x8xf32>
    %292 = vector.shape_cast %291 : vector<1x4x32x8xf32> to vector<4x32x8xf32>
    "tpu.trace_start"() <{level = 10 : i32, message = "hsd,hdf->hsf"}> : () -> ()
    %cst_185 = arith.constant dense<0.000000e+00> : vector<4x8x8xf32>
    %293 = tpu.matmul %290, %292, %cst_185 {dimension_numbers = #tpu.dot_dimension_numbers<[2], [1], [1], [2], [0, 0, 0, 1, 1, 2], [0], [0]>} : vector<4x8x32xf32>, vector<4x32x8xf32>, vector<4x8x8xf32> -> vector<4x8x8xf32>
    "tpu.trace_stop"() : () -> ()
    %c0_186 = arith.constant 0 : index
    %c0_187 = arith.constant 0 : index
    %c0_188 = arith.constant 0 : index
    %c0_189 = arith.constant 0 : index
    %294 = vector.load %arg5[%c0_186, %c0_187, %c0_188, %c0_189] : memref<2x4x1x8xf32, #tpu.memory_space<vmem>>, vector<1x4x1x8xf32>
    %295 = vector.shape_cast %294 : vector<1x4x1x8xf32> to vector<4x1x8xf32>
    %296 = vector.broadcast %295 : vector<4x1x8xf32> to vector<4x8x8xf32>
    %297 = arith.addf %293, %296 : vector<4x8x8xf32>
    %c0_190 = arith.constant 0 : index
    %c0_191 = arith.constant 0 : index
    %c0_192 = arith.constant 0 : index
    %c0_193 = arith.constant 0 : index
    %298 = vector.load %arg3[%c0_190, %c0_191, %c0_192, %c0_193] : memref<2x4x32x8xf32, #tpu.memory_space<vmem>>, vector<1x4x32x8xf32>
    %299 = vector.shape_cast %298 : vector<1x4x32x8xf32> to vector<4x32x8xf32>
    "tpu.trace_start"() <{level = 10 : i32, message = "hsd,hdf->hsf"}> : () -> ()
    %cst_194 = arith.constant dense<0.000000e+00> : vector<4x8x8xf32>
    %300 = tpu.matmul %290, %299, %cst_194 {dimension_numbers = #tpu.dot_dimension_numbers<[2], [1], [1], [2], [0, 0, 0, 1, 1, 2], [0], [0]>} : vector<4x8x32xf32>, vector<4x32x8xf32>, vector<4x8x8xf32> -> vector<4x8x8xf32>
    "tpu.trace_stop"() : () -> ()
    %c0_195 = arith.constant 0 : index
    %c0_196 = arith.constant 0 : index
    %c0_197 = arith.constant 0 : index
    %c0_198 = arith.constant 0 : index
    %301 = vector.load %arg6[%c0_195, %c0_196, %c0_197, %c0_198] : memref<2x4x1x8xf32, #tpu.memory_space<vmem>>, vector<1x4x1x8xf32>
    %302 = vector.shape_cast %301 : vector<1x4x1x8xf32> to vector<4x1x8xf32>
    %303 = vector.broadcast %302 : vector<4x1x8xf32> to vector<4x8x8xf32>
    %304 = arith.addf %300, %303 : vector<4x8x8xf32>
    %c0_199 = arith.constant 0 : index
    %c0_200 = arith.constant 0 : index
    %c0_201 = arith.constant 0 : index
    %c0_202 = arith.constant 0 : index
    %305 = vector.load %arg4[%c0_199, %c0_200, %c0_201, %c0_202] : memref<2x4x32x8xf32, #tpu.memory_space<vmem>>, vector<1x4x32x8xf32>
    %306 = vector.shape_cast %305 : vector<1x4x32x8xf32> to vector<4x32x8xf32>
    "tpu.trace_start"() <{level = 10 : i32, message = "hsd,hdf->hsf"}> : () -> ()
    %cst_203 = arith.constant dense<0.000000e+00> : vector<4x8x8xf32>
    %307 = tpu.matmul %290, %306, %cst_203 {dimension_numbers = #tpu.dot_dimension_numbers<[2], [1], [1], [2], [0, 0, 0, 1, 1, 2], [0], [0]>} : vector<4x8x32xf32>, vector<4x32x8xf32>, vector<4x8x8xf32> -> vector<4x8x8xf32>
    "tpu.trace_stop"() : () -> ()
    %c0_204 = arith.constant 0 : index
    %c0_205 = arith.constant 0 : index
    %c0_206 = arith.constant 0 : index
    %c0_207 = arith.constant 0 : index
    %308 = vector.load %arg7[%c0_204, %c0_205, %c0_206, %c0_207] : memref<2x4x1x8xf32, #tpu.memory_space<vmem>>, vector<1x4x1x8xf32>
    %309 = vector.shape_cast %308 : vector<1x4x1x8xf32> to vector<4x1x8xf32>
    %310 = vector.broadcast %309 : vector<4x1x8xf32> to vector<4x8x8xf32>
    %311 = arith.addf %307, %310 : vector<4x8x8xf32>
    "tpu.trace_start"() <{level = 10 : i32, message = "hqf,hkf->hqk"}> : () -> ()
    %cst_208 = arith.constant dense<0.000000e+00> : vector<4x8x8xf32>
    %312 = tpu.matmul %297, %304, %cst_208 {dimension_numbers = #tpu.dot_dimension_numbers<[2], [2], [1], [1], [0, 0, 0, 1, 1, 1], [0], [0]>} : vector<4x8x8xf32>, vector<4x8x8xf32>, vector<4x8x8xf32> -> vector<4x8x8xf32>
    "tpu.trace_stop"() : () -> ()
    %313 = arith.addf %312, %285 : vector<4x8x8xf32>
    %cst_209 = arith.constant dense<0xFF800000> : vector<4x8xf32>
    %314 = vector.multi_reduction <maximumf>, %313, %cst_209 [2] : vector<4x8x8xf32> to vector<4x8xf32>
    %315 = vector.shape_cast %314 : vector<4x8xf32> to vector<4x8x1xf32>
    %316 = vector.broadcast %315 : vector<4x8x1xf32> to vector<4x8x8xf32>
    %317 = arith.subf %313, %316 : vector<4x8x8xf32>
    %318 = math.exp %317 : vector<4x8x8xf32>
    %cst_210 = arith.constant dense<0.000000e+00> : vector<4x8xf32>
    %319 = vector.multi_reduction <add>, %318, %cst_210 [2] : vector<4x8x8xf32> to vector<4x8xf32>
    %320 = vector.shape_cast %319 : vector<4x8xf32> to vector<4x8x1xf32>
    %321 = tpu.reciprocal %320 {approx = true} : vector<4x8x1xf32> -> vector<4x8x1xf32>
    %322 = vector.broadcast %321 : vector<4x8x1xf32> to vector<4x8x8xf32>
    %323 = arith.mulf %318, %322 : vector<4x8x8xf32>
    "tpu.trace_start"() <{level = 10 : i32, message = "hqk,hkf->hqf"}> : () -> ()
    %cst_211 = arith.constant dense<0.000000e+00> : vector<4x8x8xf32>
    %324 = tpu.matmul %323, %311, %cst_211 {dimension_numbers = #tpu.dot_dimension_numbers<[2], [1], [1], [2], [0, 0, 0, 1, 1, 2], [0], [0]>} : vector<4x8x8xf32>, vector<4x8x8xf32>, vector<4x8x8xf32> -> vector<4x8x8xf32>
    "tpu.trace_stop"() : () -> ()
    %c0_212 = arith.constant 0 : index
    %c0_213 = arith.constant 0 : index
    %c0_214 = arith.constant 0 : index
    %c0_215 = arith.constant 0 : index
    %325 = vector.load %arg8[%c0_212, %c0_213, %c0_214, %c0_215] : memref<2x4x8x32xf32, #tpu.memory_space<vmem>>, vector<1x4x8x32xf32>
    %326 = vector.shape_cast %325 : vector<1x4x8x32xf32> to vector<4x8x32xf32>
    "tpu.trace_start"() <{level = 10 : i32, message = "hsf,hfd->hsd"}> : () -> ()
    %cst_216 = arith.constant dense<0.000000e+00> : vector<4x8x32xf32>
    %327 = tpu.matmul %324, %326, %cst_216 {dimension_numbers = #tpu.dot_dimension_numbers<[2], [1], [1], [2], [0, 0, 0, 1, 1, 2], [0], [0]>} : vector<4x8x8xf32>, vector<4x8x32xf32>, vector<4x8x32xf32> -> vector<4x8x32xf32>
    "tpu.trace_stop"() : () -> ()
    %cst_217 = arith.constant dense<0.000000e+00> : vector<8x32xf32>
    %328 = vector.multi_reduction <add>, %327, %cst_217 [0] : vector<4x8x32xf32> to vector<8x32xf32>
    %c0_218 = arith.constant 0 : index
    %c0_219 = arith.constant 0 : index
    %c0_220 = arith.constant 0 : index
    %329 = vector.load %arg9[%c0_218, %c0_219, %c0_220] : memref<2x1x32xf32, #tpu.memory_space<vmem>>, vector<1x1x32xf32>
    %330 = vector.shape_cast %329 : vector<1x1x32xf32> to vector<1x32xf32>
    %331 = vector.broadcast %330 : vector<1x32xf32> to vector<8x32xf32>
    %332 = arith.addf %328, %331 : vector<8x32xf32>
    %333 = arith.addf %287, %332 : vector<8x32xf32>
    %c0_221 = arith.constant 0 : index
    %c0_222 = arith.constant 0 : index
    %c0_223 = arith.constant 0 : index
    %334 = vector.load %arg10[%c0_221, %c0_222, %c0_223] : memref<2x1x32xf32, #tpu.memory_space<vmem>>, vector<1x1x32xf32>
    %335 = vector.shape_cast %334 : vector<1x1x32xf32> to vector<1x32xf32>
    %c0_224 = arith.constant 0 : index
    %c0_225 = arith.constant 0 : index
    %c0_226 = arith.constant 0 : index
    %336 = vector.load %arg11[%c0_224, %c0_225, %c0_226] : memref<2x1x32xf32, #tpu.memory_space<vmem>>, vector<1x1x32xf32>
    %337 = vector.shape_cast %336 : vector<1x1x32xf32> to vector<1x32xf32>
    %cst_227 = arith.constant dense<0.000000e+00> : vector<8xf32>
    %338 = vector.multi_reduction <add>, %333, %cst_227 [1] : vector<8x32xf32> to vector<8xf32>
    %339 = vector.shape_cast %338 : vector<8xf32> to vector<8x1xf32>
    %cst_228 = arith.constant 3.200000e+01 : f32
    %340 = vector.broadcast %cst_228 : f32 to vector<8x1xf32>
    %341 = arith.divf %339, %340 : vector<8x1xf32>
    %342 = vector.broadcast %341 : vector<8x1xf32> to vector<8x32xf32>
    %343 = arith.subf %333, %342 : vector<8x32xf32>
    %344 = arith.mulf %343, %343 : vector<8x32xf32>
    %cst_229 = arith.constant dense<0.000000e+00> : vector<8xf32>
    %345 = vector.multi_reduction <add>, %344, %cst_229 [1] : vector<8x32xf32> to vector<8xf32>
    %346 = vector.shape_cast %345 : vector<8xf32> to vector<8x1xf32>
    %cst_230 = arith.constant 3.200000e+01 : f32
    %347 = vector.broadcast %cst_230 : f32 to vector<8x1xf32>
    %348 = arith.divf %346, %347 : vector<8x1xf32>
    %349 = vector.broadcast %341 : vector<8x1xf32> to vector<8x32xf32>
    %350 = arith.subf %333, %349 : vector<8x32xf32>
    %cst_231 = arith.constant 9.99999974E-6 : f32
    %351 = vector.broadcast %cst_231 : f32 to vector<8x1xf32>
    %352 = arith.addf %348, %351 : vector<8x1xf32>
    %353 = math.rsqrt %352 : vector<8x1xf32>
    %354 = vector.broadcast %353 : vector<8x1xf32> to vector<8x32xf32>
    %355 = arith.mulf %350, %354 : vector<8x32xf32>
    %356 = vector.broadcast %335 : vector<1x32xf32> to vector<8x32xf32>
    %357 = arith.mulf %355, %356 : vector<8x32xf32>
    %358 = vector.broadcast %337 : vector<1x32xf32> to vector<8x32xf32>
    %359 = arith.addf %357, %358 : vector<8x32xf32>
    %c0_232 = arith.constant 0 : index
    %c0_233 = arith.constant 0 : index
    %c0_234 = arith.constant 0 : index
    %360 = vector.load %arg12[%c0_232, %c0_233, %c0_234] : memref<2x32x128xf32, #tpu.memory_space<vmem>>, vector<1x32x128xf32>
    %361 = vector.shape_cast %360 : vector<1x32x128xf32> to vector<32x128xf32>
    %cst_235 = arith.constant dense<0.000000e+00> : vector<8x128xf32>
    %362 = tpu.matmul %359, %361, %cst_235 {dimension_numbers = #tpu.dot_dimension_numbers<[1], [0], [0], [1], [0, 0, 1, 1], [], []>} : vector<8x32xf32>, vector<32x128xf32>, vector<8x128xf32> -> vector<8x128xf32>
    %c0_236 = arith.constant 0 : index
    %c0_237 = arith.constant 0 : index
    %c0_238 = arith.constant 0 : index
    %363 = vector.load %arg13[%c0_236, %c0_237, %c0_238] : memref<2x1x128xf32, #tpu.memory_space<vmem>>, vector<1x1x128xf32>
    %364 = vector.shape_cast %363 : vector<1x1x128xf32> to vector<1x128xf32>
    %365 = vector.broadcast %364 : vector<1x128xf32> to vector<8x128xf32>
    %366 = arith.addf %362, %365 : vector<8x128xf32>
    %367 = arith.mulf %366, %366 : vector<8x128xf32>
    %368 = arith.mulf %366, %367 : vector<8x128xf32>
    %cst_239 = arith.constant 4.471500e-02 : f32
    %369 = vector.broadcast %cst_239 : f32 to vector<8x128xf32>
    %370 = arith.mulf %369, %368 : vector<8x128xf32>
    %371 = arith.addf %366, %370 : vector<8x128xf32>
    %cst_240 = arith.constant 0.797884583 : f32
    %372 = vector.broadcast %cst_240 : f32 to vector<8x128xf32>
    %373 = arith.mulf %372, %371 : vector<8x128xf32>
    %374 = math.tanh %373 : vector<8x128xf32>
    %cst_241 = arith.constant 1.000000e+00 : f32
    %375 = vector.broadcast %cst_241 : f32 to vector<8x128xf32>
    %376 = arith.addf %375, %374 : vector<8x128xf32>
    %cst_242 = arith.constant 5.000000e-01 : f32
    %377 = vector.broadcast %cst_242 : f32 to vector<8x128xf32>
    %378 = arith.mulf %377, %376 : vector<8x128xf32>
    %379 = arith.mulf %366, %378 : vector<8x128xf32>
    %c0_243 = arith.constant 0 : index
    %c0_244 = arith.constant 0 : index
    %c0_245 = arith.constant 0 : index
    %380 = vector.load %arg14[%c0_243, %c0_244, %c0_245] : memref<2x128x32xf32, #tpu.memory_space<vmem>>, vector<1x128x32xf32>
    %381 = vector.shape_cast %380 : vector<1x128x32xf32> to vector<128x32xf32>
    %cst_246 = arith.constant dense<0.000000e+00> : vector<8x32xf32>
    %382 = tpu.matmul %379, %381, %cst_246 {dimension_numbers = #tpu.dot_dimension_numbers<[1], [0], [0], [1], [0, 0, 1, 1], [], []>} : vector<8x128xf32>, vector<128x32xf32>, vector<8x32xf32> -> vector<8x32xf32>
    %c0_247 = arith.constant 0 : index
    %c0_248 = arith.constant 0 : index
    %c0_249 = arith.constant 0 : index
    %383 = vector.load %arg15[%c0_247, %c0_248, %c0_249] : memref<2x1x32xf32, #tpu.memory_space<vmem>>, vector<1x1x32xf32>
    %384 = vector.shape_cast %383 : vector<1x1x32xf32> to vector<1x32xf32>
    %385 = vector.broadcast %384 : vector<1x32xf32> to vector<8x32xf32>
    %386 = arith.addf %382, %385 : vector<8x32xf32>
    %387 = arith.addf %359, %386 : vector<8x32xf32>
    %c0_250 = arith.constant 0 : index
    %c0_251 = arith.constant 0 : index
    %c0_252 = arith.constant 0 : index
    %388 = vector.load %arg16[%c0_250, %c0_251, %c0_252] : memref<2x1x32xf32, #tpu.memory_space<vmem>>, vector<1x1x32xf32>
    %389 = vector.shape_cast %388 : vector<1x1x32xf32> to vector<1x32xf32>
    %c0_253 = arith.constant 0 : index
    %c0_254 = arith.constant 0 : index
    %c0_255 = arith.constant 0 : index
    %390 = vector.load %arg17[%c0_253, %c0_254, %c0_255] : memref<2x1x32xf32, #tpu.memory_space<vmem>>, vector<1x1x32xf32>
    %391 = vector.shape_cast %390 : vector<1x1x32xf32> to vector<1x32xf32>
    %cst_256 = arith.constant dense<0.000000e+00> : vector<8xf32>
    %392 = vector.multi_reduction <add>, %387, %cst_256 [1] : vector<8x32xf32> to vector<8xf32>
    %393 = vector.shape_cast %392 : vector<8xf32> to vector<8x1xf32>
    %cst_257 = arith.constant 3.200000e+01 : f32
    %394 = vector.broadcast %cst_257 : f32 to vector<8x1xf32>
    %395 = arith.divf %393, %394 : vector<8x1xf32>
    %396 = vector.broadcast %395 : vector<8x1xf32> to vector<8x32xf32>
    %397 = arith.subf %387, %396 : vector<8x32xf32>
    %398 = arith.mulf %397, %397 : vector<8x32xf32>
    %cst_258 = arith.constant dense<0.000000e+00> : vector<8xf32>
    %399 = vector.multi_reduction <add>, %398, %cst_258 [1] : vector<8x32xf32> to vector<8xf32>
    %400 = vector.shape_cast %399 : vector<8xf32> to vector<8x1xf32>
    %cst_259 = arith.constant 3.200000e+01 : f32
    %401 = vector.broadcast %cst_259 : f32 to vector<8x1xf32>
    %402 = arith.divf %400, %401 : vector<8x1xf32>
    %403 = vector.broadcast %395 : vector<8x1xf32> to vector<8x32xf32>
    %404 = arith.subf %387, %403 : vector<8x32xf32>
    %cst_260 = arith.constant 9.99999974E-6 : f32
    %405 = vector.broadcast %cst_260 : f32 to vector<8x1xf32>
    %406 = arith.addf %402, %405 : vector<8x1xf32>
    %407 = math.rsqrt %406 : vector<8x1xf32>
    %408 = vector.broadcast %407 : vector<8x1xf32> to vector<8x32xf32>
    %409 = arith.mulf %404, %408 : vector<8x32xf32>
    %410 = vector.broadcast %389 : vector<1x32xf32> to vector<8x32xf32>
    %411 = arith.mulf %409, %410 : vector<8x32xf32>
    %412 = vector.broadcast %391 : vector<1x32xf32> to vector<8x32xf32>
    %413 = arith.addf %411, %412 : vector<8x32xf32>
    %414 = vector.shape_cast %413 : vector<8x32xf32> to vector<1x8x32xf32>
    %415 = vector.shape_cast %414 : vector<1x8x32xf32> to vector<1x8x32xf32>
    %416 = vector.broadcast %415 : vector<1x8x32xf32> to vector<4x8x32xf32>
    %c1_261 = arith.constant 1 : index
    %c0_262 = arith.constant 0 : index
    %c0_263 = arith.constant 0 : index
    %c0_264 = arith.constant 0 : index
    %417 = vector.load %arg2[%c1_261, %c0_262, %c0_263, %c0_264] : memref<2x4x32x8xf32, #tpu.memory_space<vmem>>, vector<1x4x32x8xf32>
    %418 = vector.shape_cast %417 : vector<1x4x32x8xf32> to vector<4x32x8xf32>
    "tpu.trace_start"() <{level = 10 : i32, message = "hsd,hdf->hsf"}> : () -> ()
    %cst_265 = arith.constant dense<0.000000e+00> : vector<4x8x8xf32>
    %419 = tpu.matmul %416, %418, %cst_265 {dimension_numbers = #tpu.dot_dimension_numbers<[2], [1], [1], [2], [0, 0, 0, 1, 1, 2], [0], [0]>} : vector<4x8x32xf32>, vector<4x32x8xf32>, vector<4x8x8xf32> -> vector<4x8x8xf32>
    "tpu.trace_stop"() : () -> ()
    %c1_266 = arith.constant 1 : index
    %c0_267 = arith.constant 0 : index
    %c0_268 = arith.constant 0 : index
    %c0_269 = arith.constant 0 : index
    %420 = vector.load %arg5[%c1_266, %c0_267, %c0_268, %c0_269] : memref<2x4x1x8xf32, #tpu.memory_space<vmem>>, vector<1x4x1x8xf32>
    %421 = vector.shape_cast %420 : vector<1x4x1x8xf32> to vector<4x1x8xf32>
    %422 = vector.broadcast %421 : vector<4x1x8xf32> to vector<4x8x8xf32>
    %423 = arith.addf %419, %422 : vector<4x8x8xf32>
    %c1_270 = arith.constant 1 : index
    %c0_271 = arith.constant 0 : index
    %c0_272 = arith.constant 0 : index
    %c0_273 = arith.constant 0 : index
    %424 = vector.load %arg3[%c1_270, %c0_271, %c0_272, %c0_273] : memref<2x4x32x8xf32, #tpu.memory_space<vmem>>, vector<1x4x32x8xf32>
    %425 = vector.shape_cast %424 : vector<1x4x32x8xf32> to vector<4x32x8xf32>
    "tpu.trace_start"() <{level = 10 : i32, message = "hsd,hdf->hsf"}> : () -> ()
    %cst_274 = arith.constant dense<0.000000e+00> : vector<4x8x8xf32>
    %426 = tpu.matmul %416, %425, %cst_274 {dimension_numbers = #tpu.dot_dimension_numbers<[2], [1], [1], [2], [0, 0, 0, 1, 1, 2], [0], [0]>} : vector<4x8x32xf32>, vector<4x32x8xf32>, vector<4x8x8xf32> -> vector<4x8x8xf32>
    "tpu.trace_stop"() : () -> ()
    %c1_275 = arith.constant 1 : index
    %c0_276 = arith.constant 0 : index
    %c0_277 = arith.constant 0 : index
    %c0_278 = arith.constant 0 : index
    %427 = vector.load %arg6[%c1_275, %c0_276, %c0_277, %c0_278] : memref<2x4x1x8xf32, #tpu.memory_space<vmem>>, vector<1x4x1x8xf32>
    %428 = vector.shape_cast %427 : vector<1x4x1x8xf32> to vector<4x1x8xf32>
    %429 = vector.broadcast %428 : vector<4x1x8xf32> to vector<4x8x8xf32>
    %430 = arith.addf %426, %429 : vector<4x8x8xf32>
    %c1_279 = arith.constant 1 : index
    %c0_280 = arith.constant 0 : index
    %c0_281 = arith.constant 0 : index
    %c0_282 = arith.constant 0 : index
    %431 = vector.load %arg4[%c1_279, %c0_280, %c0_281, %c0_282] : memref<2x4x32x8xf32, #tpu.memory_space<vmem>>, vector<1x4x32x8xf32>
    %432 = vector.shape_cast %431 : vector<1x4x32x8xf32> to vector<4x32x8xf32>
    "tpu.trace_start"() <{level = 10 : i32, message = "hsd,hdf->hsf"}> : () -> ()
    %cst_283 = arith.constant dense<0.000000e+00> : vector<4x8x8xf32>
    %433 = tpu.matmul %416, %432, %cst_283 {dimension_numbers = #tpu.dot_dimension_numbers<[2], [1], [1], [2], [0, 0, 0, 1, 1, 2], [0], [0]>} : vector<4x8x32xf32>, vector<4x32x8xf32>, vector<4x8x8xf32> -> vector<4x8x8xf32>
    "tpu.trace_stop"() : () -> ()
    %c1_284 = arith.constant 1 : index
    %c0_285 = arith.constant 0 : index
    %c0_286 = arith.constant 0 : index
    %c0_287 = arith.constant 0 : index
    %434 = vector.load %arg7[%c1_284, %c0_285, %c0_286, %c0_287] : memref<2x4x1x8xf32, #tpu.memory_space<vmem>>, vector<1x4x1x8xf32>
    %435 = vector.shape_cast %434 : vector<1x4x1x8xf32> to vector<4x1x8xf32>
    %436 = vector.broadcast %435 : vector<4x1x8xf32> to vector<4x8x8xf32>
    %437 = arith.addf %433, %436 : vector<4x8x8xf32>
    "tpu.trace_start"() <{level = 10 : i32, message = "hqf,hkf->hqk"}> : () -> ()
    %cst_288 = arith.constant dense<0.000000e+00> : vector<4x8x8xf32>
    %438 = tpu.matmul %423, %430, %cst_288 {dimension_numbers = #tpu.dot_dimension_numbers<[2], [2], [1], [1], [0, 0, 0, 1, 1, 1], [0], [0]>} : vector<4x8x8xf32>, vector<4x8x8xf32>, vector<4x8x8xf32> -> vector<4x8x8xf32>
    "tpu.trace_stop"() : () -> ()
    %439 = arith.addf %438, %285 : vector<4x8x8xf32>
    %cst_289 = arith.constant dense<0xFF800000> : vector<4x8xf32>
    %440 = vector.multi_reduction <maximumf>, %439, %cst_289 [2] : vector<4x8x8xf32> to vector<4x8xf32>
    %441 = vector.shape_cast %440 : vector<4x8xf32> to vector<4x8x1xf32>
    %442 = vector.broadcast %441 : vector<4x8x1xf32> to vector<4x8x8xf32>
    %443 = arith.subf %439, %442 : vector<4x8x8xf32>
    %444 = math.exp %443 : vector<4x8x8xf32>
    %cst_290 = arith.constant dense<0.000000e+00> : vector<4x8xf32>
    %445 = vector.multi_reduction <add>, %444, %cst_290 [2] : vector<4x8x8xf32> to vector<4x8xf32>
    %446 = vector.shape_cast %445 : vector<4x8xf32> to vector<4x8x1xf32>
    %447 = tpu.reciprocal %446 {approx = true} : vector<4x8x1xf32> -> vector<4x8x1xf32>
    %448 = vector.broadcast %447 : vector<4x8x1xf32> to vector<4x8x8xf32>
    %449 = arith.mulf %444, %448 : vector<4x8x8xf32>
    "tpu.trace_start"() <{level = 10 : i32, message = "hqk,hkf->hqf"}> : () -> ()
    %cst_291 = arith.constant dense<0.000000e+00> : vector<4x8x8xf32>
    %450 = tpu.matmul %449, %437, %cst_291 {dimension_numbers = #tpu.dot_dimension_numbers<[2], [1], [1], [2], [0, 0, 0, 1, 1, 2], [0], [0]>} : vector<4x8x8xf32>, vector<4x8x8xf32>, vector<4x8x8xf32> -> vector<4x8x8xf32>
    "tpu.trace_stop"() : () -> ()
    %c1_292 = arith.constant 1 : index
    %c0_293 = arith.constant 0 : index
    %c0_294 = arith.constant 0 : index
    %c0_295 = arith.constant 0 : index
    %451 = vector.load %arg8[%c1_292, %c0_293, %c0_294, %c0_295] : memref<2x4x8x32xf32, #tpu.memory_space<vmem>>, vector<1x4x8x32xf32>
    %452 = vector.shape_cast %451 : vector<1x4x8x32xf32> to vector<4x8x32xf32>
    "tpu.trace_start"() <{level = 10 : i32, message = "hsf,hfd->hsd"}> : () -> ()
    %cst_296 = arith.constant dense<0.000000e+00> : vector<4x8x32xf32>
    %453 = tpu.matmul %450, %452, %cst_296 {dimension_numbers = #tpu.dot_dimension_numbers<[2], [1], [1], [2], [0, 0, 0, 1, 1, 2], [0], [0]>} : vector<4x8x8xf32>, vector<4x8x32xf32>, vector<4x8x32xf32> -> vector<4x8x32xf32>
    "tpu.trace_stop"() : () -> ()
    %cst_297 = arith.constant dense<0.000000e+00> : vector<8x32xf32>
    %454 = vector.multi_reduction <add>, %453, %cst_297 [0] : vector<4x8x32xf32> to vector<8x32xf32>
    %c1_298 = arith.constant 1 : index
    %c0_299 = arith.constant 0 : index
    %c0_300 = arith.constant 0 : index
    %455 = vector.load %arg9[%c1_298, %c0_299, %c0_300] : memref<2x1x32xf32, #tpu.memory_space<vmem>>, vector<1x1x32xf32>
    %456 = vector.shape_cast %455 : vector<1x1x32xf32> to vector<1x32xf32>
    %457 = vector.broadcast %456 : vector<1x32xf32> to vector<8x32xf32>
    %458 = arith.addf %454, %457 : vector<8x32xf32>
    %459 = arith.addf %413, %458 : vector<8x32xf32>
    %c1_301 = arith.constant 1 : index
    %c0_302 = arith.constant 0 : index
    %c0_303 = arith.constant 0 : index
    %460 = vector.load %arg10[%c1_301, %c0_302, %c0_303] : memref<2x1x32xf32, #tpu.memory_space<vmem>>, vector<1x1x32xf32>
    %461 = vector.shape_cast %460 : vector<1x1x32xf32> to vector<1x32xf32>
    %c1_304 = arith.constant 1 : index
    %c0_305 = arith.constant 0 : index
    %c0_306 = arith.constant 0 : index
    %462 = vector.load %arg11[%c1_304, %c0_305, %c0_306] : memref<2x1x32xf32, #tpu.memory_space<vmem>>, vector<1x1x32xf32>
    %463 = vector.shape_cast %462 : vector<1x1x32xf32> to vector<1x32xf32>
    %cst_307 = arith.constant dense<0.000000e+00> : vector<8xf32>
    %464 = vector.multi_reduction <add>, %459, %cst_307 [1] : vector<8x32xf32> to vector<8xf32>
    %465 = vector.shape_cast %464 : vector<8xf32> to vector<8x1xf32>
    %cst_308 = arith.constant 3.200000e+01 : f32
    %466 = vector.broadcast %cst_308 : f32 to vector<8x1xf32>
    %467 = arith.divf %465, %466 : vector<8x1xf32>
    %468 = vector.broadcast %467 : vector<8x1xf32> to vector<8x32xf32>
    %469 = arith.subf %459, %468 : vector<8x32xf32>
    %470 = arith.mulf %469, %469 : vector<8x32xf32>
    %cst_309 = arith.constant dense<0.000000e+00> : vector<8xf32>
    %471 = vector.multi_reduction <add>, %470, %cst_309 [1] : vector<8x32xf32> to vector<8xf32>
    %472 = vector.shape_cast %471 : vector<8xf32> to vector<8x1xf32>
    %cst_310 = arith.constant 3.200000e+01 : f32
    %473 = vector.broadcast %cst_310 : f32 to vector<8x1xf32>
    %474 = arith.divf %472, %473 : vector<8x1xf32>
    %475 = vector.broadcast %467 : vector<8x1xf32> to vector<8x32xf32>
    %476 = arith.subf %459, %475 : vector<8x32xf32>
    %cst_311 = arith.constant 9.99999974E-6 : f32
    %477 = vector.broadcast %cst_311 : f32 to vector<8x1xf32>
    %478 = arith.addf %474, %477 : vector<8x1xf32>
    %479 = math.rsqrt %478 : vector<8x1xf32>
    %480 = vector.broadcast %479 : vector<8x1xf32> to vector<8x32xf32>
    %481 = arith.mulf %476, %480 : vector<8x32xf32>
    %482 = vector.broadcast %461 : vector<1x32xf32> to vector<8x32xf32>
    %483 = arith.mulf %481, %482 : vector<8x32xf32>
    %484 = vector.broadcast %463 : vector<1x32xf32> to vector<8x32xf32>
    %485 = arith.addf %483, %484 : vector<8x32xf32>
    %c1_312 = arith.constant 1 : index
    %c0_313 = arith.constant 0 : index
    %c0_314 = arith.constant 0 : index
    %486 = vector.load %arg12[%c1_312, %c0_313, %c0_314] : memref<2x32x128xf32, #tpu.memory_space<vmem>>, vector<1x32x128xf32>
    %487 = vector.shape_cast %486 : vector<1x32x128xf32> to vector<32x128xf32>
    %cst_315 = arith.constant dense<0.000000e+00> : vector<8x128xf32>
    %488 = tpu.matmul %485, %487, %cst_315 {dimension_numbers = #tpu.dot_dimension_numbers<[1], [0], [0], [1], [0, 0, 1, 1], [], []>} : vector<8x32xf32>, vector<32x128xf32>, vector<8x128xf32> -> vector<8x128xf32>
    %c1_316 = arith.constant 1 : index
    %c0_317 = arith.constant 0 : index
    %c0_318 = arith.constant 0 : index
    %489 = vector.load %arg13[%c1_316, %c0_317, %c0_318] : memref<2x1x128xf32, #tpu.memory_space<vmem>>, vector<1x1x128xf32>
    %490 = vector.shape_cast %489 : vector<1x1x128xf32> to vector<1x128xf32>
    %491 = vector.broadcast %490 : vector<1x128xf32> to vector<8x128xf32>
    %492 = arith.addf %488, %491 : vector<8x128xf32>
    %493 = arith.mulf %492, %492 : vector<8x128xf32>
    %494 = arith.mulf %492, %493 : vector<8x128xf32>
    %cst_319 = arith.constant 4.471500e-02 : f32
    %495 = vector.broadcast %cst_319 : f32 to vector<8x128xf32>
    %496 = arith.mulf %495, %494 : vector<8x128xf32>
    %497 = arith.addf %492, %496 : vector<8x128xf32>
    %cst_320 = arith.constant 0.797884583 : f32
    %498 = vector.broadcast %cst_320 : f32 to vector<8x128xf32>
    %499 = arith.mulf %498, %497 : vector<8x128xf32>
    %500 = math.tanh %499 : vector<8x128xf32>
    %cst_321 = arith.constant 1.000000e+00 : f32
    %501 = vector.broadcast %cst_321 : f32 to vector<8x128xf32>
    %502 = arith.addf %501, %500 : vector<8x128xf32>
    %cst_322 = arith.constant 5.000000e-01 : f32
    %503 = vector.broadcast %cst_322 : f32 to vector<8x128xf32>
    %504 = arith.mulf %503, %502 : vector<8x128xf32>
    %505 = arith.mulf %492, %504 : vector<8x128xf32>
    %c1_323 = arith.constant 1 : index
    %c0_324 = arith.constant 0 : index
    %c0_325 = arith.constant 0 : index
    %506 = vector.load %arg14[%c1_323, %c0_324, %c0_325] : memref<2x128x32xf32, #tpu.memory_space<vmem>>, vector<1x128x32xf32>
    %507 = vector.shape_cast %506 : vector<1x128x32xf32> to vector<128x32xf32>
    %cst_326 = arith.constant dense<0.000000e+00> : vector<8x32xf32>
    %508 = tpu.matmul %505, %507, %cst_326 {dimension_numbers = #tpu.dot_dimension_numbers<[1], [0], [0], [1], [0, 0, 1, 1], [], []>} : vector<8x128xf32>, vector<128x32xf32>, vector<8x32xf32> -> vector<8x32xf32>
    %c1_327 = arith.constant 1 : index
    %c0_328 = arith.constant 0 : index
    %c0_329 = arith.constant 0 : index
    %509 = vector.load %arg15[%c1_327, %c0_328, %c0_329] : memref<2x1x32xf32, #tpu.memory_space<vmem>>, vector<1x1x32xf32>
    %510 = vector.shape_cast %509 : vector<1x1x32xf32> to vector<1x32xf32>
    %511 = vector.broadcast %510 : vector<1x32xf32> to vector<8x32xf32>
    %512 = arith.addf %508, %511 : vector<8x32xf32>
    %513 = arith.addf %485, %512 : vector<8x32xf32>
    %c1_330 = arith.constant 1 : index
    %c0_331 = arith.constant 0 : index
    %c0_332 = arith.constant 0 : index
    %514 = vector.load %arg16[%c1_330, %c0_331, %c0_332] : memref<2x1x32xf32, #tpu.memory_space<vmem>>, vector<1x1x32xf32>
    %515 = vector.shape_cast %514 : vector<1x1x32xf32> to vector<1x32xf32>
    %c1_333 = arith.constant 1 : index
    %c0_334 = arith.constant 0 : index
    %c0_335 = arith.constant 0 : index
    %516 = vector.load %arg17[%c1_333, %c0_334, %c0_335] : memref<2x1x32xf32, #tpu.memory_space<vmem>>, vector<1x1x32xf32>
    %517 = vector.shape_cast %516 : vector<1x1x32xf32> to vector<1x32xf32>
    %cst_336 = arith.constant dense<0.000000e+00> : vector<8xf32>
    %518 = vector.multi_reduction <add>, %513, %cst_336 [1] : vector<8x32xf32> to vector<8xf32>
    %519 = vector.shape_cast %518 : vector<8xf32> to vector<8x1xf32>
    %cst_337 = arith.constant 3.200000e+01 : f32
    %520 = vector.broadcast %cst_337 : f32 to vector<8x1xf32>
    %521 = arith.divf %519, %520 : vector<8x1xf32>
    %522 = vector.broadcast %521 : vector<8x1xf32> to vector<8x32xf32>
    %523 = arith.subf %513, %522 : vector<8x32xf32>
    %524 = arith.mulf %523, %523 : vector<8x32xf32>
    %cst_338 = arith.constant dense<0.000000e+00> : vector<8xf32>
    %525 = vector.multi_reduction <add>, %524, %cst_338 [1] : vector<8x32xf32> to vector<8xf32>
    %526 = vector.shape_cast %525 : vector<8xf32> to vector<8x1xf32>
    %cst_339 = arith.constant 3.200000e+01 : f32
    %527 = vector.broadcast %cst_339 : f32 to vector<8x1xf32>
    %528 = arith.divf %526, %527 : vector<8x1xf32>
    %529 = vector.broadcast %521 : vector<8x1xf32> to vector<8x32xf32>
    %530 = arith.subf %513, %529 : vector<8x32xf32>
    %cst_340 = arith.constant 9.99999974E-6 : f32
    %531 = vector.broadcast %cst_340 : f32 to vector<8x1xf32>
    %532 = arith.addf %528, %531 : vector<8x1xf32>
    %533 = math.rsqrt %532 : vector<8x1xf32>
    %534 = vector.broadcast %533 : vector<8x1xf32> to vector<8x32xf32>
    %535 = arith.mulf %530, %534 : vector<8x32xf32>
    %536 = vector.broadcast %515 : vector<1x32xf32> to vector<8x32xf32>
    %537 = arith.mulf %535, %536 : vector<8x32xf32>
    %538 = vector.broadcast %517 : vector<1x32xf32> to vector<8x32xf32>
    %539 = arith.addf %537, %538 : vector<8x32xf32>
    %cst_341 = arith.constant dense<0.000000e+00> : vector<8x128xf32>
    %540 = tpu.matmul %539, %3, %cst_341 {dimension_numbers = #tpu.dot_dimension_numbers<[1], [0], [0], [1], [0, 0, 1, 1], [], []>} : vector<8x32xf32>, vector<32x128xf32>, vector<8x128xf32> -> vector<8x128xf32>
    %c1_342 = arith.constant 1 : index
    %c0_343 = arith.constant 0 : index
    %c0_344 = arith.constant 0 : index
    %541 = vector.load %arg19[%c1_342, %c0_343, %c0_344] : memref<2x8x128xf32, #tpu.memory_space<vmem>>, vector<1x8x128xf32>
    %542 = vector.shape_cast %541 : vector<1x8x128xf32> to vector<8x128xf32>
    %543 = vector.shape_cast %540 : vector<8x128xf32> to vector<1x8x128xf32>
    tpu.vector_store %arg19[%c1_342, %c0_343, %c0_344], %543 {strides = array<i32>} : memref<2x8x128xf32, #tpu.memory_space<vmem>>, vector<1x8x128xf32>,
    return
  }
}

</mosaic_0001>

<llo_original>
// kernel: tpu_custom_call.1
$region0: #{tpu_custom_call.1}
  #allocation0 [shape = 'u32[]', space=smem, size = 0x4, offset = 0x4, fixed_abs, tag = 'smem constant byte address 0x4 - core index']
  #allocation1 [shape = 'u32[72,128]{1,0:T(1,128)}', space=vmem, size = 0x9000, scoped, tag = 'internal scratch']
  %s0 = inlined_call_operand.vmem [shape: f32[2,8,32], index: 0, kind: input, shape index: {}]
  %s1 = inlined_call_operand.vmem [shape: f32[2,1,8], index: 1, kind: input, shape index: {}]
  %s2 = inlined_call_operand.vmem [shape: f32[2,4,32,8], index: 2, kind: input, shape index: {}]
  %s3 = inlined_call_operand.vmem [shape: f32[2,4,32,8], index: 3, kind: input, shape index: {}]
  %s4 = inlined_call_operand.vmem [shape: f32[2,4,32,8], index: 4, kind: input, shape index: {}]
  %s5 = inlined_call_operand.vmem [shape: f32[2,4,1,8], index: 5, kind: input, shape index: {}]
  %s6 = inlined_call_operand.vmem [shape: f32[2,4,1,8], index: 6, kind: input, shape index: {}]
  %s7 = inlined_call_operand.vmem [shape: f32[2,4,1,8], index: 7, kind: input, shape index: {}]
  %s8 = inlined_call_operand.vmem [shape: f32[2,4,8,32], index: 8, kind: input, shape index: {}]
  %s9 = inlined_call_operand.vmem [shape: f32[2,1,32], index: 9, kind: input, shape index: {}]
  %s10 = inlined_call_operand.vmem [shape: f32[2,1,32], index: 10, kind: input, shape index: {}]
  %s11 = inlined_call_operand.vmem [shape: f32[2,1,32], index: 11, kind: input, shape index: {}]
  %s12 = inlined_call_operand.vmem [shape: f32[2,32,128], index: 12, kind: input, shape index: {}]
  %s13 = inlined_call_operand.vmem [shape: f32[2,1,128], index: 13, kind: input, shape index: {}]
  %s14 = inlined_call_operand.vmem [shape: f32[2,128,32], index: 14, kind: input, shape index: {}]
  %s15 = inlined_call_operand.vmem [shape: f32[2,1,32], index: 15, kind: input, shape index: {}]
  %s16 = inlined_call_operand.vmem [shape: f32[2,1,32], index: 16, kind: input, shape index: {}]
  %s17 = inlined_call_operand.vmem [shape: f32[2,1,32], index: 17, kind: input, shape index: {}]
  %s18 = inlined_call_operand.vmem [shape: f32[32,128], index: 18, kind: input, shape index: {}]
  %s19 = inlined_call_operand.hbm [shape: f32[2,8,128], index: 19, kind: output, shape index: {}]
  %s20 = sld [smem:[#allocation0]]
  $region86: #{tpu_custom_call.1} parent=0
    _
  %s22 = ssub.s32 1, %s20
  %s23 = scalar_select 0, %s22, %s20
  $region1: #{tpu_custom_call.1} parent=0
    #allocation2 [shape = 'u8[8192]{0}', space=vmem, size = 0x2000, scoped, tag = 'output window, operand 0, single buffered']
    #allocation3 [shape = 's32[1]{0}', space=sflag, size = 0x4, scoped, tag = 'scoped memory for tpu_custom_call.1']
    %24 = vsyncpa [#allocation3], 0
    // Predicated region
    $region2: #{tpu_custom_call.1} parent=1 // pred_check
      _
    $region3: #{tpu_custom_call.1} parent=1 // pred_check_branch
      %26 = sbr.rel (0) target = $region5
    $region4: #{tpu_custom_call.1} parent=1 // pred_region
      _
    $region5: #{tpu_custom_call.1} parent=1 // pred_fallthru
      _
    // Predicated region
    $region6: #{tpu_custom_call.1} parent=1 // pred_check
      _
    $region7: #{tpu_custom_call.1} parent=1 // pred_check_branch
      %28 = sbr.rel (0) target = $region9
    $region8: #{tpu_custom_call.1} parent=1 // pred_region
      _
    $region9: #{tpu_custom_call.1} parent=1 // pred_fallthru
      _
    // Predicated region
    $region10: #{tpu_custom_call.1} parent=1 // pred_check
      _
    $region11: #{tpu_custom_call.1} parent=1 // pred_check_branch
      %30 = sbr.rel (0) target = $region13
    $region12: #{tpu_custom_call.1} parent=1 // pred_region
      _
    $region13: #{tpu_custom_call.1} parent=1 // pred_fallthru
      _
    // Predicated region
    $region14: #{tpu_custom_call.1} parent=1 // pred_check
      _
    $region15: #{tpu_custom_call.1} parent=1 // pred_check_branch
      %32 = sbr.rel (0) target = $region17
    $region16: #{tpu_custom_call.1} parent=1 // pred_region
      _
    $region17: #{tpu_custom_call.1} parent=1 // pred_fallthru
      _
    // Predicated region
    $region18: #{tpu_custom_call.1} parent=1 // pred_check
      _
    $region19: #{tpu_custom_call.1} parent=1 // pred_check_branch
      %34 = sbr.rel (0) target = $region21
    $region20: #{tpu_custom_call.1} parent=1 // pred_region
      _
    $region21: #{tpu_custom_call.1} parent=1 // pred_fallthru
      _
    // Predicated region
    $region22: #{tpu_custom_call.1} parent=1 // pred_check
      _
    $region23: #{tpu_custom_call.1} parent=1 // pred_check_branch
      %36 = sbr.rel (0) target = $region25
    $region24: #{tpu_custom_call.1} parent=1 // pred_region
      _
    $region25: #{tpu_custom_call.1} parent=1 // pred_fallthru
      _
    // Predicated region
    $region26: #{tpu_custom_call.1} parent=1 // pred_check
      _
    $region27: #{tpu_custom_call.1} parent=1 // pred_check_branch
      %38 = sbr.rel (0) target = $region29
    $region28: #{tpu_custom_call.1} parent=1 // pred_region
      _
    $region29: #{tpu_custom_call.1} parent=1 // pred_fallthru
      _
    // Predicated region
    $region30: #{tpu_custom_call.1} parent=1 // pred_check
      _
    $region31: #{tpu_custom_call.1} parent=1 // pred_check_branch
      %40 = sbr.rel (0) target = $region33
    $region32: #{tpu_custom_call.1} parent=1 // pred_region
      _
    $region33: #{tpu_custom_call.1} parent=1 // pred_fallthru
      _
    // Predicated region
    $region34: #{tpu_custom_call.1} parent=1 // pred_check
      _
    $region35: #{tpu_custom_call.1} parent=1 // pred_check_branch
      %42 = sbr.rel (0) target = $region37
    $region36: #{tpu_custom_call.1} parent=1 // pred_region
      _
    $region37: #{tpu_custom_call.1} parent=1 // pred_fallthru
      _
    // Predicated region
    $region38: #{tpu_custom_call.1} parent=1 // pred_check
      _
    $region39: #{tpu_custom_call.1} parent=1 // pred_check_branch
      %44 = sbr.rel (0) target = $region41
    $region40: #{tpu_custom_call.1} parent=1 // pred_region
      _
    $region41: #{tpu_custom_call.1} parent=1 // pred_fallthru
      _
    // Predicated region
    $region42: #{tpu_custom_call.1} parent=1 // pred_check
      _
    $region43: #{tpu_custom_call.1} parent=1 // pred_check_branch
      %46 = sbr.rel (0) target = $region45
    $region44: #{tpu_custom_call.1} parent=1 // pred_region
      _
    $region45: #{tpu_custom_call.1} parent=1 // pred_fallthru
      _
    // Predicated region
    $region46: #{tpu_custom_call.1} parent=1 // pred_check
      _
    $region47: #{tpu_custom_call.1} parent=1 // pred_check_branch
      %48 = sbr.rel (0) target = $region49
    $region48: #{tpu_custom_call.1} parent=1 // pred_region
      _
    $region49: #{tpu_custom_call.1} parent=1 // pred_fallthru
      _
    // Predicated region
    $region50: #{tpu_custom_call.1} parent=1 // pred_check
      _
    $region51: #{tpu_custom_call.1} parent=1 // pred_check_branch
      %50 = sbr.rel (0) target = $region53
    $region52: #{tpu_custom_call.1} parent=1 // pred_region
      _
    $region53: #{tpu_custom_call.1} parent=1 // pred_fallthru
      _
    // Predicated region
    $region54: #{tpu_custom_call.1} parent=1 // pred_check
      _
    $region55: #{tpu_custom_call.1} parent=1 // pred_check_branch
      %52 = sbr.rel (0) target = $region57
    $region56: #{tpu_custom_call.1} parent=1 // pred_region
      _
    $region57: #{tpu_custom_call.1} parent=1 // pred_fallthru
      _
    // Predicated region
    $region58: #{tpu_custom_call.1} parent=1 // pred_check
      _
    $region59: #{tpu_custom_call.1} parent=1 // pred_check_branch
      %54 = sbr.rel (0) target = $region61
    $region60: #{tpu_custom_call.1} parent=1 // pred_region
      _
    $region61: #{tpu_custom_call.1} parent=1 // pred_fallthru
      _
    // Predicated region
    $region62: #{tpu_custom_call.1} parent=1 // pred_check
      _
    $region63: #{tpu_custom_call.1} parent=1 // pred_check_branch
      %56 = sbr.rel (0) target = $region65
    $region64: #{tpu_custom_call.1} parent=1 // pred_region
      _
    $region65: #{tpu_custom_call.1} parent=1 // pred_fallthru
      _
    // Predicated region
    $region66: #{tpu_custom_call.1} parent=1 // pred_check
      _
    $region67: #{tpu_custom_call.1} parent=1 // pred_check_branch
      %58 = sbr.rel (0) target = $region69
    $region68: #{tpu_custom_call.1} parent=1 // pred_region
      _
    $region69: #{tpu_custom_call.1} parent=1 // pred_fallthru
      _
    // Predicated region
    $region70: #{tpu_custom_call.1} parent=1 // pred_check
      _
    $region71: #{tpu_custom_call.1} parent=1 // pred_check_branch
      %60 = sbr.rel (0) target = $region73
    $region72: #{tpu_custom_call.1} parent=1 // pred_region
      _
    $region73: #{tpu_custom_call.1} parent=1 // pred_fallthru
      _
    // Predicated region
    $region74: #{tpu_custom_call.1} parent=1 // pred_check
      _
    $region75: #{tpu_custom_call.1} parent=1 // pred_check_branch
      %62 = sbr.rel (0) target = $region77
    $region76: #{tpu_custom_call.1} parent=1 // pred_region
      _
    $region77: #{tpu_custom_call.1} parent=1 // pred_fallthru
      _
    %v63 = vlaneseq
    %v64 = vshrl.u32 %v63, 7
    %v65 = vlaneseq
    %v66 = vand.u32 %v65, 127
    %vm67 = vcmp.gt.s32.totalorder %v66, %v64
    %v68 = vld [vmem:[%s18] sm:$0xff]
    %v69 = vld [vmem:[%s18 + $0x8] sm:$0xff]
    %v70 = vld [vmem:[%s18 + $0x10] sm:$0xff]
    %v71 = vld [vmem:[%s18 + $0x18] sm:$0xff]
    %v72 = vld [vmem:[%s1] sm:$0x1]
    %vm73 = vcmp.gt.f32.partialorder %v72, 0.5
    %v74 = vsel %vm73, 1, 0
    %v75 = vperm.slane %v74, 0
    %vm76 = vcmp.eq.s32.totalorder %v75, 1
    %vm77 = vmor %vm67, %vm76
    %v78 = vsel %vm77, -1e+09, 0.0
    %v79 = vld [vmem:[%s0] sm:$0xff]
    %v80 = vld [vmem:[%s2] sm:$0xff]
    %v81 = vld [vmem:[%s2 + $0x8] sm:$0xff]
    %v82 = vld [vmem:[%s2 + $0x10] sm:$0xff]
    %v83 = vld [vmem:[%s2 + $0x18] sm:$0xff]
    %v84 = vld [vmem:[%s2 + $0x20] sm:$0xff]
    %v85 = vld [vmem:[%s2 + $0x28] sm:$0xff]
    %v86 = vld [vmem:[%s2 + $0x30] sm:$0xff]
    %v87 = vld [vmem:[%s2 + $0x38] sm:$0xff]
    %v88 = vld [vmem:[%s2 + $0x40] sm:$0xff]
    %v89 = vld [vmem:[%s2 + $0x48] sm:$0xff]
    %v90 = vld [vmem:[%s2 + $0x50] sm:$0xff]
    %v91 = vld [vmem:[%s2 + $0x58] sm:$0xff]
    %v92 = vld [vmem:[%s2 + $0x60] sm:$0xff]
    %v93 = vld [vmem:[%s2 + $0x68] sm:$0xff]
    %v94 = vld [vmem:[%s2 + $0x70] sm:$0xff]
    %v95 = vld [vmem:[%s2 + $0x78] sm:$0xff]
    %v96 = vld [vmem:[%s5] sm:$0x1]
    %v97 = vld [vmem:[%s5 + $0x1] sm:$0x1]
    %v98 = vld [vmem:[%s5 + $0x2] sm:$0x1]
    %v99 = vld [vmem:[%s5 + $0x3] sm:$0x1]
    %v104 = vperm.slane %v96, 0
    %v105 = vperm.slane %v97, 0
    %v106 = vperm.slane %v98, 0
    %v107 = vperm.slane %v99, 0
    %vm112 = vcmask 261120
    %v114 = vsel %vm112, %v79, 0
    %116 = vmatpush.msra.mxu0 0.0
    %117 = vmatpush.msra.mxu0 0.0
    %118 = vmatpush.msra.mxu0 0.0
    %119 = vmatpush.msra.mxu0 0.0
    %120 = vmatpush.msra.mxu0 0.0
    %121 = vmatpush.msra.mxu0 0.0
    %122 = vmatpush.msra.mxu0 0.0
    %123 = vmatpush.msra.mxu0 0.0
    %124 = vmatpush.msra.mxu0 0.0
    %125 = vmatpush.msra.mxu0 0.0
    %126 = vmatpush.msra.mxu0 0.0
    %127 = vmatpush.msra.mxu0 0.0
    %128 = vmatpush.msra.mxu0 %v83
    %129 = vmatpush.msra.mxu0 %v82
    %130 = vmatpush.msra.mxu0 %v81
    %131 = vmatpush.msra.mxu0 %v80
    %132 = vmatmul.f32.gmra.mxu0 %v114
    %v133 = vpop.f32.mrf.mxu0
    %v134 = vadd.f32 %v104, %v133
    %135 = vdwg.mxu0
    %136 = vmatpush.msra.mxu0 0.0
    %137 = vmatpush.msra.mxu0 0.0
    %138 = vmatpush.msra.mxu0 0.0
    %139 = vmatpush.msra.mxu0 0.0
    %140 = vmatpush.msra.mxu0 0.0
    %141 = vmatpush.msra.mxu0 0.0
    %142 = vmatpush.msra.mxu0 0.0
    %143 = vmatpush.msra.mxu0 0.0
    %144 = vmatpush.msra.mxu0 0.0
    %145 = vmatpush.msra.mxu0 0.0
    %146 = vmatpush.msra.mxu0 0.0
    %147 = vmatpush.msra.mxu0 0.0
    %148 = vmatpush.msra.mxu0 %v87
    %149 = vmatpush.msra.mxu0 %v86
    %150 = vmatpush.msra.mxu0 %v85
    %151 = vmatpush.msra.mxu0 %v84
    %152 = vmatmul.f32.gmra.mxu0 %v114
    %v153 = vpop.f32.mrf.mxu0
    %v154 = vadd.f32 %v105, %v153
    %155 = vdwg.mxu0
    %156 = vmatpush.msra.mxu0 0.0
    %157 = vmatpush.msra.mxu0 0.0
    %158 = vmatpush.msra.mxu0 0.0
    %159 = vmatpush.msra.mxu0 0.0
    %160 = vmatpush.msra.mxu0 0.0
    %161 = vmatpush.msra.mxu0 0.0
    %162 = vmatpush.msra.mxu0 0.0
    %163 = vmatpush.msra.mxu0 0.0
    %164 = vmatpush.msra.mxu0 0.0
    %165 = vmatpush.msra.mxu0 0.0
    %166 = vmatpush.msra.mxu0 0.0
    %167 = vmatpush.msra.mxu0 0.0
    %168 = vmatpush.msra.mxu0 %v91
    %169 = vmatpush.msra.mxu0 %v90
    %170 = vmatpush.msra.mxu0 %v89
    %171 = vmatpush.msra.mxu0 %v88
    %172 = vmatmul.f32.gmra.mxu0 %v114
    %v173 = vpop.f32.mrf.mxu0
    %v174 = vadd.f32 %v106, %v173
    %175 = vdwg.mxu0
    %176 = vmatpush.msra.mxu0 0.0
    %177 = vmatpush.msra.mxu0 0.0
    %178 = vmatpush.msra.mxu0 0.0
    %179 = vmatpush.msra.mxu0 0.0
    %180 = vmatpush.msra.mxu0 0.0
    %181 = vmatpush.msra.mxu0 0.0
    %182 = vmatpush.msra.mxu0 0.0
    %183 = vmatpush.msra.mxu0 0.0
    %184 = vmatpush.msra.mxu0 0.0
    %185 = vmatpush.msra.mxu0 0.0
    %186 = vmatpush.msra.mxu0 0.0
    %187 = vmatpush.msra.mxu0 0.0
    %188 = vmatpush.msra.mxu0 %v95
    %189 = vmatpush.msra.mxu0 %v94
    %190 = vmatpush.msra.mxu0 %v93
    %191 = vmatpush.msra.mxu0 %v92
    %192 = vmatmul.f32.gmra.mxu0 %v114
    %v193 = vpop.f32.mrf.mxu0
    %v194 = vadd.f32 %v107, %v193
    %195 = vdwg.mxu0
    %v196 = vld [vmem:[%s3] sm:$0xff]
    %v197 = vld [vmem:[%s3 + $0x8] sm:$0xff]
    %v198 = vld [vmem:[%s3 + $0x10] sm:$0xff]
    %v199 = vld [vmem:[%s3 + $0x18] sm:$0xff]
    %v200 = vld [vmem:[%s3 + $0x20] sm:$0xff]
    %v201 = vld [vmem:[%s3 + $0x28] sm:$0xff]
    %v202 = vld [vmem:[%s3 + $0x30] sm:$0xff]
    %v203 = vld [vmem:[%s3 + $0x38] sm:$0xff]
    %v204 = vld [vmem:[%s3 + $0x40] sm:$0xff]
    %v205 = vld [vmem:[%s3 + $0x48] sm:$0xff]
    %v206 = vld [vmem:[%s3 + $0x50] sm:$0xff]
    %v207 = vld [vmem:[%s3 + $0x58] sm:$0xff]
    %v208 = vld [vmem:[%s3 + $0x60] sm:$0xff]
    %v209 = vld [vmem:[%s3 + $0x68] sm:$0xff]
    %v210 = vld [vmem:[%s3 + $0x70] sm:$0xff]
    %v211 = vld [vmem:[%s3 + $0x78] sm:$0xff]
    %v212 = vld [vmem:[%s6] sm:$0x1]
    %v213 = vld [vmem:[%s6 + $0x1] sm:$0x1]
    %v214 = vld [vmem:[%s6 + $0x2] sm:$0x1]
    %v215 = vld [vmem:[%s6 + $0x3] sm:$0x1]
    %v220 = vperm.slane %v212, 0
    %v221 = vperm.slane %v213, 0
    %v222 = vperm.slane %v214, 0
    %v223 = vperm.slane %v215, 0
    %228 = vmatpush.msra.mxu0 0.0
    %229 = vmatpush.msra.mxu0 0.0
    %230 = vmatpush.msra.mxu0 0.0
    %231 = vmatpush.msra.mxu0 0.0
    %232 = vmatpush.msra.mxu0 0.0
    %233 = vmatpush.msra.mxu0 0.0
    %234 = vmatpush.msra.mxu0 0.0
    %235 = vmatpush.msra.mxu0 0.0
    %236 = vmatpush.msra.mxu0 0.0
    %237 = vmatpush.msra.mxu0 0.0
    %238 = vmatpush.msra.mxu0 0.0
    %239 = vmatpush.msra.mxu0 0.0
    %240 = vmatpush.msra.mxu0 %v199
    %241 = vmatpush.msra.mxu0 %v198
    %242 = vmatpush.msra.mxu0 %v197
    %243 = vmatpush.msra.mxu0 %v196
    %244 = vmatmul.f32.gmra.mxu0 %v114
    %v245 = vpop.f32.mrf.mxu0
    %v246 = vadd.f32 %v220, %v245
    %247 = vdwg.mxu0
    %248 = vmatpush.msra.mxu0 0.0
    %249 = vmatpush.msra.mxu0 0.0
    %250 = vmatpush.msra.mxu0 0.0
    %251 = vmatpush.msra.mxu0 0.0
    %252 = vmatpush.msra.mxu0 0.0
    %253 = vmatpush.msra.mxu0 0.0
    %254 = vmatpush.msra.mxu0 0.0
    %255 = vmatpush.msra.mxu0 0.0
    %256 = vmatpush.msra.mxu0 0.0
    %257 = vmatpush.msra.mxu0 0.0
    %258 = vmatpush.msra.mxu0 0.0
    %259 = vmatpush.msra.mxu0 0.0
    %260 = vmatpush.msra.mxu0 %v203
    %261 = vmatpush.msra.mxu0 %v202
    %262 = vmatpush.msra.mxu0 %v201
    %263 = vmatpush.msra.mxu0 %v200
    %264 = vmatmul.f32.gmra.mxu0 %v114
    %v265 = vpop.f32.mrf.mxu0
    %v266 = vadd.f32 %v221, %v265
    %267 = vdwg.mxu0
    %268 = vmatpush.msra.mxu0 0.0
    %269 = vmatpush.msra.mxu0 0.0
    %270 = vmatpush.msra.mxu0 0.0
    %271 = vmatpush.msra.mxu0 0.0
    %272 = vmatpush.msra.mxu0 0.0
    %273 = vmatpush.msra.mxu0 0.0
    %274 = vmatpush.msra.mxu0 0.0
    %275 = vmatpush.msra.mxu0 0.0
    %276 = vmatpush.msra.mxu0 0.0
    %277 = vmatpush.msra.mxu0 0.0
    %278 = vmatpush.msra.mxu0 0.0
    %279 = vmatpush.msra.mxu0 0.0
    %280 = vmatpush.msra.mxu0 %v207
    %281 = vmatpush.msra.mxu0 %v206
    %282 = vmatpush.msra.mxu0 %v205
    %283 = vmatpush.msra.mxu0 %v204
    %284 = vmatmul.f32.gmra.mxu0 %v114
    %v285 = vpop.f32.mrf.mxu0
    %v286 = vadd.f32 %v222, %v285
    %287 = vdwg.mxu0
    %288 = vmatpush.msra.mxu0 0.0
    %289 = vmatpush.msra.mxu0 0.0
    %290 = vmatpush.msra.mxu0 0.0
    %291 = vmatpush.msra.mxu0 0.0
    %292 = vmatpush.msra.mxu0 0.0
    %293 = vmatpush.msra.mxu0 0.0
    %294 = vmatpush.msra.mxu0 0.0
    %295 = vmatpush.msra.mxu0 0.0
    %296 = vmatpush.msra.mxu0 0.0
    %297 = vmatpush.msra.mxu0 0.0
    %298 = vmatpush.msra.mxu0 0.0
    %299 = vmatpush.msra.mxu0 0.0
    %300 = vmatpush.msra.mxu0 %v211
    %301 = vmatpush.msra.mxu0 %v210
    %302 = vmatpush.msra.mxu0 %v209
    %303 = vmatpush.msra.mxu0 %v208
    %304 = vmatmul.f32.gmra.mxu0 %v114
    %v305 = vpop.f32.mrf.mxu0
    %v306 = vadd.f32 %v223, %v305
    %307 = vdwg.mxu0
    %v308 = vld [vmem:[%s4] sm:$0xff]
    %v309 = vld [vmem:[%s4 + $0x8] sm:$0xff]
    %v310 = vld [vmem:[%s4 + $0x10] sm:$0xff]
    %v311 = vld [vmem:[%s4 + $0x18] sm:$0xff]
    %v312 = vld [vmem:[%s4 + $0x20] sm:$0xff]
    %v313 = vld [vmem:[%s4 + $0x28] sm:$0xff]
    %v314 = vld [vmem:[%s4 + $0x30] sm:$0xff]
    %v315 = vld [vmem:[%s4 + $0x38] sm:$0xff]
    %v316 = vld [vmem:[%s4 + $0x40] sm:$0xff]
    %v317 = vld [vmem:[%s4 + $0x48] sm:$0xff]
    %v318 = vld [vmem:[%s4 + $0x50] sm:$0xff]
    %v319 = vld [vmem:[%s4 + $0x58] sm:$0xff]
    %v320 = vld [vmem:[%s4 + $0x60] sm:$0xff]
    %v321 = vld [vmem:[%s4 + $0x68] sm:$0xff]
    %v322 = vld [vmem:[%s4 + $0x70] sm:$0xff]
    %v323 = vld [vmem:[%s4 + $0x78] sm:$0xff]
    %v324 = vld [vmem:[%s7] sm:$0x1]
    %v325 = vld [vmem:[%s7 + $0x1] sm:$0x1]
    %v326 = vld [vmem:[%s7 + $0x2] sm:$0x1]
    %v327 = vld [vmem:[%s7 + $0x3] sm:$0x1]
    %v332 = vperm.slane %v324, 0
    %v333 = vperm.slane %v325, 0
    %v334 = vperm.slane %v326, 0
    %v335 = vperm.slane %v327, 0
    %340 = vmatpush.msra.mxu0 0.0
    %341 = vmatpush.msra.mxu0 0.0
    %342 = vmatpush.msra.mxu0 0.0
    %343 = vmatpush.msra.mxu0 0.0
    %344 = vmatpush.msra.mxu0 0.0
    %345 = vmatpush.msra.mxu0 0.0
    %346 = vmatpush.msra.mxu0 0.0
    %347 = vmatpush.msra.mxu0 0.0
    %348 = vmatpush.msra.mxu0 0.0
    %349 = vmatpush.msra.mxu0 0.0
    %350 = vmatpush.msra.mxu0 0.0
    %351 = vmatpush.msra.mxu0 0.0
    %352 = vmatpush.msra.mxu0 %v311
    %353 = vmatpush.msra.mxu0 %v310
    %354 = vmatpush.msra.mxu0 %v309
    %355 = vmatpush.msra.mxu0 %v308
    %356 = vmatmul.f32.gmra.mxu0 %v114
    %v357 = vpop.f32.mrf.mxu0
    %v358 = vadd.f32 %v332, %v357
    %359 = vdwg.mxu0
    %360 = vmatpush.msra.mxu0 0.0
    %361 = vmatpush.msra.mxu0 0.0
    %362 = vmatpush.msra.mxu0 0.0
    %363 = vmatpush.msra.mxu0 0.0
    %364 = vmatpush.msra.mxu0 0.0
    %365 = vmatpush.msra.mxu0 0.0
    %366 = vmatpush.msra.mxu0 0.0
    %367 = vmatpush.msra.mxu0 0.0
    %368 = vmatpush.msra.mxu0 0.0
    %369 = vmatpush.msra.mxu0 0.0
    %370 = vmatpush.msra.mxu0 0.0
    %371 = vmatpush.msra.mxu0 0.0
    %372 = vmatpush.msra.mxu0 %v315
    %373 = vmatpush.msra.mxu0 %v314
    %374 = vmatpush.msra.mxu0 %v313
    %375 = vmatpush.msra.mxu0 %v312
    %376 = vmatmul.f32.gmra.mxu0 %v114
    %v377 = vpop.f32.mrf.mxu0
    %v378 = vadd.f32 %v333, %v377
    %379 = vdwg.mxu0
    %380 = vmatpush.msra.mxu0 0.0
    %381 = vmatpush.msra.mxu0 0.0
    %382 = vmatpush.msra.mxu0 0.0
    %383 = vmatpush.msra.mxu0 0.0
    %384 = vmatpush.msra.mxu0 0.0
    %385 = vmatpush.msra.mxu0 0.0
    %386 = vmatpush.msra.mxu0 0.0
    %387 = vmatpush.msra.mxu0 0.0
    %388 = vmatpush.msra.mxu0 0.0
    %389 = vmatpush.msra.mxu0 0.0
    %390 = vmatpush.msra.mxu0 0.0
    %391 = vmatpush.msra.mxu0 0.0
    %392 = vmatpush.msra.mxu0 %v319
    %393 = vmatpush.msra.mxu0 %v318
    %394 = vmatpush.msra.mxu0 %v317
    %395 = vmatpush.msra.mxu0 %v316
    %396 = vmatmul.f32.gmra.mxu0 %v114
    %v397 = vpop.f32.mrf.mxu0
    %v398 = vadd.f32 %v334, %v397
    %399 = vdwg.mxu0
    %400 = vmatpush.msra.mxu0 0.0
    %401 = vmatpush.msra.mxu0 0.0
    %402 = vmatpush.msra.mxu0 0.0
    %403 = vmatpush.msra.mxu0 0.0
    %404 = vmatpush.msra.mxu0 0.0
    %405 = vmatpush.msra.mxu0 0.0
    %406 = vmatpush.msra.mxu0 0.0
    %407 = vmatpush.msra.mxu0 0.0
    %408 = vmatpush.msra.mxu0 0.0
    %409 = vmatpush.msra.mxu0 0.0
    %410 = vmatpush.msra.mxu0 0.0
    %411 = vmatpush.msra.mxu0 0.0
    %412 = vmatpush.msra.mxu0 %v323
    %413 = vmatpush.msra.mxu0 %v322
    %414 = vmatpush.msra.mxu0 %v321
    %415 = vmatpush.msra.mxu0 %v320
    %416 = vmatmul.f32.gmra.mxu0 %v114
    %v417 = vpop.f32.mrf.mxu0
    %v418 = vadd.f32 %v335, %v417
    %419 = vdwg.mxu0
    %vm420 = vcmask 64512
    %v422 = vsel %vm420, %v134, 0
    %v425 = vsel %vm420, %v246, 0
    %427 = vmatpush.xpose.msra.mxu0 0.0
    %428 = vmatpush.xpose.msra.mxu0 0.0
    %429 = vmatpush.xpose.msra.mxu0 0.0
    %430 = vmatpush.xpose.msra.mxu0 0.0
    %431 = vmatpush.xpose.msra.mxu0 0.0
    %432 = vmatpush.xpose.msra.mxu0 0.0
    %433 = vmatpush.xpose.msra.mxu0 0.0
    %434 = vmatpush.xpose.msra.mxu0 0.0
    %435 = vmatpush.xpose.msra.mxu0 0.0
    %436 = vmatpush.xpose.msra.mxu0 0.0
    %437 = vmatpush.xpose.msra.mxu0 0.0
    %438 = vmatpush.xpose.msra.mxu0 0.0
    %439 = vmatpush.xpose.msra.mxu0 0.0
    %440 = vmatpush.xpose.msra.mxu0 0.0
    %441 = vmatpush.xpose.msra.mxu0 0.0
    %442 = vmatpush.xpose.msra.mxu0 %v425
    %443 = vmatmul.f32.gmra.mxu0 %v422
    %v444 = vpop.f32.mrf.mxu0
    %v445 = vadd.f32 %v78, %v444
    %446 = vdwg.mxu0
    %v448 = vsel %vm420, %v154, 0
    %v451 = vsel %vm420, %v266, 0
    %453 = vmatpush.xpose.msra.mxu0 0.0
    %454 = vmatpush.xpose.msra.mxu0 0.0
    %455 = vmatpush.xpose.msra.mxu0 0.0
    %456 = vmatpush.xpose.msra.mxu0 0.0
    %457 = vmatpush.xpose.msra.mxu0 0.0
    %458 = vmatpush.xpose.msra.mxu0 0.0
    %459 = vmatpush.xpose.msra.mxu0 0.0
    %460 = vmatpush.xpose.msra.mxu0 0.0
    %461 = vmatpush.xpose.msra.mxu0 0.0
    %462 = vmatpush.xpose.msra.mxu0 0.0
    %463 = vmatpush.xpose.msra.mxu0 0.0
    %464 = vmatpush.xpose.msra.mxu0 0.0
    %465 = vmatpush.xpose.msra.mxu0 0.0
    %466 = vmatpush.xpose.msra.mxu0 0.0
    %467 = vmatpush.xpose.msra.mxu0 0.0
    %468 = vmatpush.xpose.msra.mxu0 %v451
    %469 = vmatmul.f32.gmra.mxu0 %v448
    %v470 = vpop.f32.mrf.mxu0
    %v471 = vadd.f32 %v78, %v470
    %472 = vdwg.mxu0
    %v474 = vsel %vm420, %v174, 0
    %v477 = vsel %vm420, %v286, 0
    %479 = vmatpush.xpose.msra.mxu0 0.0
    %480 = vmatpush.xpose.msra.mxu0 0.0
    %481 = vmatpush.xpose.msra.mxu0 0.0
    %482 = vmatpush.xpose.msra.mxu0 0.0
    %483 = vmatpush.xpose.msra.mxu0 0.0
    %484 = vmatpush.xpose.msra.mxu0 0.0
    %485 = vmatpush.xpose.msra.mxu0 0.0
    %486 = vmatpush.xpose.msra.mxu0 0.0
    %487 = vmatpush.xpose.msra.mxu0 0.0
    %488 = vmatpush.xpose.msra.mxu0 0.0
    %489 = vmatpush.xpose.msra.mxu0 0.0
    %490 = vmatpush.xpose.msra.mxu0 0.0
    %491 = vmatpush.xpose.msra.mxu0 0.0
    %492 = vmatpush.xpose.msra.mxu0 0.0
    %493 = vmatpush.xpose.msra.mxu0 0.0
    %494 = vmatpush.xpose.msra.mxu0 %v477
    %495 = vmatmul.f32.gmra.mxu0 %v474
    %v496 = vpop.f32.mrf.mxu0
    %v497 = vadd.f32 %v78, %v496
    %498 = vdwg.mxu0
    %v500 = vsel %vm420, %v194, 0
    %v503 = vsel %vm420, %v306, 0
    %505 = vmatpush.xpose.msra.mxu0 0.0
    %506 = vmatpush.xpose.msra.mxu0 0.0
    %507 = vmatpush.xpose.msra.mxu0 0.0
    %508 = vmatpush.xpose.msra.mxu0 0.0
    %509 = vmatpush.xpose.msra.mxu0 0.0
    %510 = vmatpush.xpose.msra.mxu0 0.0
    %511 = vmatpush.xpose.msra.mxu0 0.0
    %512 = vmatpush.xpose.msra.mxu0 0.0
    %513 = vmatpush.xpose.msra.mxu0 0.0
    %514 = vmatpush.xpose.msra.mxu0 0.0
    %515 = vmatpush.xpose.msra.mxu0 0.0
    %516 = vmatpush.xpose.msra.mxu0 0.0
    %517 = vmatpush.xpose.msra.mxu0 0.0
    %518 = vmatpush.xpose.msra.mxu0 0.0
    %519 = vmatpush.xpose.msra.mxu0 0.0
    %520 = vmatpush.xpose.msra.mxu0 %v503
    %521 = vmatmul.f32.gmra.mxu0 %v500
    %v522 = vpop.f32.mrf.mxu0
    %v523 = vadd.f32 %v78, %v522
    %524 = vdwg.mxu0
    %v525 = vsel %vm420, %v445, -inf
    %526 = vmax.xlane.f32.xlu0 %v525
    %v527 = vpop.xlane.xlu0 %526
    %v528 = vsel %vm420, %v471, -inf
    %529 = vmax.xlane.f32.xlu0 %v528
    %v530 = vpop.xlane.xlu0 %529
    %v531 = vsel %vm420, %v497, -inf
    %532 = vmax.xlane.f32.xlu0 %v531
    %v533 = vpop.xlane.xlu0 %532
    %v534 = vsel %vm420, %v523, -inf
    %535 = vmax.xlane.f32.xlu0 %v534
    %v536 = vpop.xlane.xlu0 %535
    %v537 = vsub.f32 %v445, %v527
    %v538 = vsub.f32 %v471, %v530
    %v539 = vsub.f32 %v497, %v533
    %v540 = vsub.f32 %v523, %v536
    %v541 = vmul.f32 %v537, 1.442695
    %v542 = vpow.pop %v541
    %v543 = vmul.f32 %v538, 1.442695
    %v544 = vpow.pop %v543
    %v545 = vmul.f32 %v539, 1.442695
    %v546 = vpow.pop %v545
    %v547 = vmul.f32 %v540, 1.442695
    %v548 = vpow.pop %v547
    %v549 = vsel %vm420, %v542, 0.0
    %550 = vadd.xlane.f32.xlu0 %v549
    %v551 = vpop.xlane.xlu0 %550
    %v552 = vsel %vm420, %v544, 0.0
    %553 = vadd.xlane.f32.xlu0 %v552
    %v554 = vpop.xlane.xlu0 %553
    %v555 = vsel %vm420, %v546, 0.0
    %556 = vadd.xlane.f32.xlu0 %v555
    %v557 = vpop.xlane.xlu0 %556
    %v558 = vsel %vm420, %v548, 0.0
    %559 = vadd.xlane.f32.xlu0 %v558
    %v560 = vpop.xlane.xlu0 %559
    %v561 = vrcp.pop %v551
    %v562 = vrcp.pop %v554
    %v563 = vrcp.pop %v557
    %v564 = vrcp.pop %v560
    %v565 = vmul.f32 %v542, %v561
    %v566 = vmul.f32 %v544, %v562
    %v567 = vmul.f32 %v546, %v563
    %v568 = vmul.f32 %v548, %v564
    %v570 = vsel %vm420, %v565, 0
    %572 = vmatpush.msra.mxu0 0.0
    %573 = vmatpush.msra.mxu0 0.0
    %574 = vmatpush.msra.mxu0 0.0
    %575 = vmatpush.msra.mxu0 0.0
    %576 = vmatpush.msra.mxu0 0.0
    %577 = vmatpush.msra.mxu0 0.0
    %578 = vmatpush.msra.mxu0 0.0
    %579 = vmatpush.msra.mxu0 0.0
    %580 = vmatpush.msra.mxu0 0.0
    %581 = vmatpush.msra.mxu0 0.0
    %582 = vmatpush.msra.mxu0 0.0
    %583 = vmatpush.msra.mxu0 0.0
    %584 = vmatpush.msra.mxu0 0.0
    %585 = vmatpush.msra.mxu0 0.0
    %586 = vmatpush.msra.mxu0 0.0
    %587 = vmatpush.msra.mxu0 %v358
    %588 = vmatmul.f32.gmra.mxu0 %v570
    %v589 = vpop.f32.mrf.mxu0
    %v590 = vadd.f32 0.0, %v589
    %591 = vdwg.mxu0
    %v593 = vsel %vm420, %v566, 0
    %595 = vmatpush.msra.mxu0 0.0
    %596 = vmatpush.msra.mxu0 0.0
    %597 = vmatpush.msra.mxu0 0.0
    %598 = vmatpush.msra.mxu0 0.0
    %599 = vmatpush.msra.mxu0 0.0
    %600 = vmatpush.msra.mxu0 0.0
    %601 = vmatpush.msra.mxu0 0.0
    %602 = vmatpush.msra.mxu0 0.0
    %603 = vmatpush.msra.mxu0 0.0
    %604 = vmatpush.msra.mxu0 0.0
    %605 = vmatpush.msra.mxu0 0.0
    %606 = vmatpush.msra.mxu0 0.0
    %607 = vmatpush.msra.mxu0 0.0
    %608 = vmatpush.msra.mxu0 0.0
    %609 = vmatpush.msra.mxu0 0.0
    %610 = vmatpush.msra.mxu0 %v378
    %611 = vmatmul.f32.gmra.mxu0 %v593
    %v612 = vpop.f32.mrf.mxu0
    %v613 = vadd.f32 0.0, %v612
    %614 = vdwg.mxu0
    %v616 = vsel %vm420, %v567, 0
    %618 = vmatpush.msra.mxu0 0.0
    %619 = vmatpush.msra.mxu0 0.0
    %620 = vmatpush.msra.mxu0 0.0
    %621 = vmatpush.msra.mxu0 0.0
    %622 = vmatpush.msra.mxu0 0.0
    %623 = vmatpush.msra.mxu0 0.0
    %624 = vmatpush.msra.mxu0 0.0
    %625 = vmatpush.msra.mxu0 0.0
    %626 = vmatpush.msra.mxu0 0.0
    %627 = vmatpush.msra.mxu0 0.0
    %628 = vmatpush.msra.mxu0 0.0
    %629 = vmatpush.msra.mxu0 0.0
    %630 = vmatpush.msra.mxu0 0.0
    %631 = vmatpush.msra.mxu0 0.0
    %632 = vmatpush.msra.mxu0 0.0
    %633 = vmatpush.msra.mxu0 %v398
    %634 = vmatmul.f32.gmra.mxu0 %v616
    %v635 = vpop.f32.mrf.mxu0
    %v636 = vadd.f32 0.0, %v635
    %637 = vdwg.mxu0
    %v639 = vsel %vm420, %v568, 0
    %641 = vmatpush.msra.mxu0 0.0
    %642 = vmatpush.msra.mxu0 0.0
    %643 = vmatpush.msra.mxu0 0.0
    %644 = vmatpush.msra.mxu0 0.0
    %645 = vmatpush.msra.mxu0 0.0
    %646 = vmatpush.msra.mxu0 0.0
    %647 = vmatpush.msra.mxu0 0.0
    %648 = vmatpush.msra.mxu0 0.0
    %649 = vmatpush.msra.mxu0 0.0
    %650 = vmatpush.msra.mxu0 0.0
    %651 = vmatpush.msra.mxu0 0.0
    %652 = vmatpush.msra.mxu0 0.0
    %653 = vmatpush.msra.mxu0 0.0
    %654 = vmatpush.msra.mxu0 0.0
    %655 = vmatpush.msra.mxu0 0.0
    %656 = vmatpush.msra.mxu0 %v418
    %657 = vmatmul.f32.gmra.mxu0 %v639
    %v658 = vpop.f32.mrf.mxu0
    %v659 = vadd.f32 0.0, %v658
    %660 = vdwg.mxu0
    %v661 = vld [vmem:[%s8] sm:$0xff]
    %v662 = vld [vmem:[%s8 + $0x8] sm:$0xff]
    %v663 = vld [vmem:[%s8 + $0x10] sm:$0xff]
    %v664 = vld [vmem:[%s8 + $0x18] sm:$0xff]
    %v666 = vsel %vm420, %v590, 0
    %668 = vmatpush.msra.mxu0 0.0
    %669 = vmatpush.msra.mxu0 0.0
    %670 = vmatpush.msra.mxu0 0.0
    %671 = vmatpush.msra.mxu0 0.0
    %672 = vmatpush.msra.mxu0 0.0
    %673 = vmatpush.msra.mxu0 0.0
    %674 = vmatpush.msra.mxu0 0.0
    %675 = vmatpush.msra.mxu0 0.0
    %676 = vmatpush.msra.mxu0 0.0
    %677 = vmatpush.msra.mxu0 0.0
    %678 = vmatpush.msra.mxu0 0.0
    %679 = vmatpush.msra.mxu0 0.0
    %680 = vmatpush.msra.mxu0 0.0
    %681 = vmatpush.msra.mxu0 0.0
    %682 = vmatpush.msra.mxu0 0.0
    %683 = vmatpush.msra.mxu0 %v661
    %684 = vmatmul.f32.gmra.mxu0 %v666
    %v685 = vpop.f32.mrf.mxu0
    %v686 = vadd.f32 0.0, %v685
    %687 = vdwg.mxu0
    %v689 = vsel %vm420, %v613, 0
    %691 = vmatpush.msra.mxu0 0.0
    %692 = vmatpush.msra.mxu0 0.0
    %693 = vmatpush.msra.mxu0 0.0
    %694 = vmatpush.msra.mxu0 0.0
    %695 = vmatpush.msra.mxu0 0.0
    %696 = vmatpush.msra.mxu0 0.0
    %697 = vmatpush.msra.mxu0 0.0
    %698 = vmatpush.msra.mxu0 0.0
    %699 = vmatpush.msra.mxu0 0.0
    %700 = vmatpush.msra.mxu0 0.0
    %701 = vmatpush.msra.mxu0 0.0
    %702 = vmatpush.msra.mxu0 0.0
    %703 = vmatpush.msra.mxu0 0.0
    %704 = vmatpush.msra.mxu0 0.0
    %705 = vmatpush.msra.mxu0 0.0
    %706 = vmatpush.msra.mxu0 %v662
    %707 = vmatmul.f32.gmra.mxu0 %v689
    %v708 = vpop.f32.mrf.mxu0
    %v709 = vadd.f32 0.0, %v708
    %710 = vdwg.mxu0
    %v712 = vsel %vm420, %v636, 0
    %714 = vmatpush.msra.mxu0 0.0
    %715 = vmatpush.msra.mxu0 0.0
    %716 = vmatpush.msra.mxu0 0.0
    %717 = vmatpush.msra.mxu0 0.0
    %718 = vmatpush.msra.mxu0 0.0
    %719 = vmatpush.msra.mxu0 0.0
    %720 = vmatpush.msra.mxu0 0.0
    %721 = vmatpush.msra.mxu0 0.0
    %722 = vmatpush.msra.mxu0 0.0
    %723 = vmatpush.msra.mxu0 0.0
    %724 = vmatpush.msra.mxu0 0.0
    %725 = vmatpush.msra.mxu0 0.0
    %726 = vmatpush.msra.mxu0 0.0
    %727 = vmatpush.msra.mxu0 0.0
    %728 = vmatpush.msra.mxu0 0.0
    %729 = vmatpush.msra.mxu0 %v663
    %730 = vmatmul.f32.gmra.mxu0 %v712
    %v731 = vpop.f32.mrf.mxu0
    %v732 = vadd.f32 0.0, %v731
    %733 = vdwg.mxu0
    %v735 = vsel %vm420, %v659, 0
    %737 = vmatpush.msra.mxu0 0.0
    %738 = vmatpush.msra.mxu0 0.0
    %739 = vmatpush.msra.mxu0 0.0
    %740 = vmatpush.msra.mxu0 0.0
    %741 = vmatpush.msra.mxu0 0.0
    %742 = vmatpush.msra.mxu0 0.0
    %743 = vmatpush.msra.mxu0 0.0
    %744 = vmatpush.msra.mxu0 0.0
    %745 = vmatpush.msra.mxu0 0.0
    %746 = vmatpush.msra.mxu0 0.0
    %747 = vmatpush.msra.mxu0 0.0
    %748 = vmatpush.msra.mxu0 0.0
    %749 = vmatpush.msra.mxu0 0.0
    %750 = vmatpush.msra.mxu0 0.0
    %751 = vmatpush.msra.mxu0 0.0
    %752 = vmatpush.msra.mxu0 %v664
    %753 = vmatmul.f32.gmra.mxu0 %v735
    %v754 = vpop.f32.mrf.mxu0
    %v755 = vadd.f32 0.0, %v754
    %756 = vdwg.mxu0
    %v757 = vsel %vm112, %v686, 0.0
    %v758 = vsel %vm112, %v709, 0.0
    %v759 = vadd.f32 %v757, %v758
    %v760 = vsel %vm112, %v732, 0.0
    %v761 = vadd.f32 %v759, %v760
    %v762 = vsel %vm112, %v755, 0.0
    %v763 = vadd.f32 %v761, %v762
    %v764 = vld [vmem:[%s9] sm:$0x1]
    %v766 = vperm.slane %v764, 0
    %v768 = vadd.f32 %v763, %v766
    %v769 = vadd.f32 %v79, %v768
    %v770 = vld [vmem:[%s10] sm:$0x1]
    %v771 = vld [vmem:[%s11] sm:$0x1]
    %v772 = vsel %vm112, %v769, 0.0
    %773 = vadd.xlane.f32.xlu0 %v772
    %v774 = vpop.xlane.xlu0 %773
    %v775 = vrcp.pop 32.0
    %v776 = vmul.f32 32.0, %v775
    %v777 = vsub.f32 1.0, %v776
    %v778 = vmul.f32 %v775, %v777
    %v779 = vadd.f32 %v775, %v778
    %vm780 = vweird.f32 %v775
    %v781 = vsel %vm780, %v775, %v779
    %v782 = vmul.f32 %v774, %v781
    %v783 = vsub.f32 %v769, %v782
    %v784 = vmul.f32 %v783, %v783
    %v785 = vsel %vm112, %v784, 0.0
    %786 = vadd.xlane.f32.xlu0 %v785
    %v787 = vpop.xlane.xlu0 %786
    %v788 = vmul.f32 %v787, %v781
    %v789 = vadd.f32 %v788, 1e-05
    %v790 = vrsqrt.pop %v789
    %v791 = vmul.f32 %v790, %v789
    %v792 = vmul.f32 %v791, %v790
    %v793 = vmul.f32 0.5, %v792
    %v794 = vsub.f32 1.5, %v793
    %v795 = vmul.f32 %v790, %v794
    %vm796 = vweird.f32 %v789
    %vm797 = vweird.f32 %v790
    %vm798 = vmor %vm796, %vm797
    %v799 = vsel %vm798, %v790, %v795
    %v800 = vmul.f32 %v783, %v799
    %v802 = vperm.slane %v770, 0
    %v804 = vmul.f32 %v800, %v802
    %v806 = vperm.slane %v771, 0
    %v808 = vadd.f32 %v804, %v806
    %v809 = vld [vmem:[%s12] sm:$0xff]
    %v810 = vld [vmem:[%s12 + $0x8] sm:$0xff]
    %v811 = vld [vmem:[%s12 + $0x10] sm:$0xff]
    %v812 = vld [vmem:[%s12 + $0x18] sm:$0xff]
    %v813 = vld [vmem:[%s13] sm:$0x1]
    %v815 = vperm.slane %v813, 0
    %v818 = vsel %vm112, %v808, 0
    %820 = vmatpush.msra.mxu0 0.0
    %821 = vmatpush.msra.mxu0 0.0
    %822 = vmatpush.msra.mxu0 0.0
    %823 = vmatpush.msra.mxu0 0.0
    %824 = vmatpush.msra.mxu0 0.0
    %825 = vmatpush.msra.mxu0 0.0
    %826 = vmatpush.msra.mxu0 0.0
    %827 = vmatpush.msra.mxu0 0.0
    %828 = vmatpush.msra.mxu0 0.0
    %829 = vmatpush.msra.mxu0 0.0
    %830 = vmatpush.msra.mxu0 0.0
    %831 = vmatpush.msra.mxu0 0.0
    %832 = vmatpush.msra.mxu0 %v812
    %833 = vmatpush.msra.mxu0 %v811
    %834 = vmatpush.msra.mxu0 %v810
    %835 = vmatpush.msra.mxu0 %v809
    %836 = vmatmul.f32.gmra.mxu0 %v818
    %v837 = vpop.f32.mrf.mxu0
    %v838 = vadd.f32 %v815, %v837
    %839 = vdwg.mxu0
    %v840 = vmul.f32 %v838, %v838
    %v841 = vmul.f32 %v838, %v840
    %v842 = vmul.f32 %v841, 0.044715
    %v843 = vadd.f32 %v838, %v842
    %v844 = vmul.f32 %v843, 0.7978846
    %v845 = vtanh.pop %v844
    %v846 = vadd.f32 %v845, 1.0
    %v847 = vmul.f32 %v846, 0.5
    %v848 = vmul.f32 %v838, %v847
    %v849 = vld [vmem:[%s14] sm:$0xff]
    %v850 = vld [vmem:[%s14 + $0x8] sm:$0xff]
    %v851 = vld [vmem:[%s14 + $0x10] sm:$0xff]
    %v852 = vld [vmem:[%s14 + $0x18] sm:$0xff]
    %v853 = vld [vmem:[%s14 + $0x20] sm:$0xff]
    %v854 = vld [vmem:[%s14 + $0x28] sm:$0xff]
    %v855 = vld [vmem:[%s14 + $0x30] sm:$0xff]
    %v856 = vld [vmem:[%s14 + $0x38] sm:$0xff]
    %v857 = vld [vmem:[%s14 + $0x40] sm:$0xff]
    %v858 = vld [vmem:[%s14 + $0x48] sm:$0xff]
    %v859 = vld [vmem:[%s14 + $0x50] sm:$0xff]
    %v860 = vld [vmem:[%s14 + $0x58] sm:$0xff]
    %v861 = vld [vmem:[%s14 + $0x60] sm:$0xff]
    %v862 = vld [vmem:[%s14 + $0x68] sm:$0xff]
    %v863 = vld [vmem:[%s14 + $0x70] sm:$0xff]
    %v864 = vld [vmem:[%s14 + $0x78] sm:$0xff]
    %v865 = vld [vmem:[%s15] sm:$0x1]
    %v867 = vperm.slane %v865, 0
    %869 = vmatpush.msra.mxu0 %v864
    %870 = vmatpush.msra.mxu0 %v863
    %871 = vmatpush.msra.mxu0 %v862
    %872 = vmatpush.msra.mxu0 %v861
    %873 = vmatpush.msra.mxu0 %v860
    %874 = vmatpush.msra.mxu0 %v859
    %875 = vmatpush.msra.mxu0 %v858
    %876 = vmatpush.msra.mxu0 %v857
    %877 = vmatpush.msra.mxu0 %v856
    %878 = vmatpush.msra.mxu0 %v855
    %879 = vmatpush.msra.mxu0 %v854
    %880 = vmatpush.msra.mxu0 %v853
    %881 = vmatpush.msra.mxu0 %v852
    %882 = vmatpush.msra.mxu0 %v851
    %883 = vmatpush.msra.mxu0 %v850
    %884 = vmatpush.msra.mxu0 %v849
    %885 = vmatmul.f32.gmra.mxu0 %v848
    %v886 = vpop.f32.mrf.mxu0
    %v887 = vadd.f32 %v867, %v886
    %888 = vdwg.mxu0
    %v889 = vadd.f32 %v808, %v887
    %v890 = vld [vmem:[%s16] sm:$0x1]
    %v891 = vld [vmem:[%s17] sm:$0x1]
    %v892 = vsel %vm112, %v889, 0.0
    %893 = vadd.xlane.f32.xlu0 %v892
    %v894 = vpop.xlane.xlu0 %893
    %v895 = vmul.f32 %v894, %v781
    %v896 = vsub.f32 %v889, %v895
    %v897 = vmul.f32 %v896, %v896
    %v898 = vsel %vm112, %v897, 0.0
    %899 = vadd.xlane.f32.xlu0 %v898
    %v900 = vpop.xlane.xlu0 %899
    %v901 = vmul.f32 %v900, %v781
    %v902 = vadd.f32 %v901, 1e-05
    %v903 = vrsqrt.pop %v902
    %v904 = vmul.f32 %v903, %v902
    %v905 = vmul.f32 %v904, %v903
    %v906 = vmul.f32 0.5, %v905
    %v907 = vsub.f32 1.5, %v906
    %v908 = vmul.f32 %v903, %v907
    %vm909 = vweird.f32 %v902
    %vm910 = vweird.f32 %v903
    %vm911 = vmor %vm909, %vm910
    %v912 = vsel %vm911, %v903, %v908
    %v913 = vmul.f32 %v896, %v912
    %v915 = vperm.slane %v890, 0
    %v917 = vmul.f32 %v913, %v915
    %v919 = vperm.slane %v891, 0
    %v921 = vadd.f32 %v917, %v919
    %s922 = scalar_lea.vmem %s2, 128
    %v923 = vld [vmem:[%s922] sm:$0xff]
    %v924 = vld [vmem:[%s922 + $0x8] sm:$0xff]
    %v925 = vld [vmem:[%s922 + $0x10] sm:$0xff]
    %v926 = vld [vmem:[%s922 + $0x18] sm:$0xff]
    %v927 = vld [vmem:[%s922 + $0x20] sm:$0xff]
    %v928 = vld [vmem:[%s922 + $0x28] sm:$0xff]
    %v929 = vld [vmem:[%s922 + $0x30] sm:$0xff]
    %v930 = vld [vmem:[%s922 + $0x38] sm:$0xff]
    %v931 = vld [vmem:[%s922 + $0x40] sm:$0xff]
    %v932 = vld [vmem:[%s922 + $0x48] sm:$0xff]
    %v933 = vld [vmem:[%s922 + $0x50] sm:$0xff]
    %v934 = vld [vmem:[%s922 + $0x58] sm:$0xff]
    %v935 = vld [vmem:[%s922 + $0x60] sm:$0xff]
    %v936 = vld [vmem:[%s922 + $0x68] sm:$0xff]
    %v937 = vld [vmem:[%s922 + $0x70] sm:$0xff]
    %v938 = vld [vmem:[%s922 + $0x78] sm:$0xff]
    %s939 = scalar_lea.vmem %s5, 4
    %v940 = vld [vmem:[%s939] sm:$0x1]
    %v941 = vld [vmem:[%s939 + $0x1] sm:$0x1]
    %v942 = vld [vmem:[%s939 + $0x2] sm:$0x1]
    %v943 = vld [vmem:[%s939 + $0x3] sm:$0x1]
    %v948 = vperm.slane %v940, 0
    %v949 = vperm.slane %v941, 0
    %v950 = vperm.slane %v942, 0
    %v951 = vperm.slane %v943, 0
    %v957 = vsel %vm112, %v921, 0
    %959 = vmatpush.msra.mxu0 0.0
    %960 = vmatpush.msra.mxu0 0.0
    %961 = vmatpush.msra.mxu0 0.0
    %962 = vmatpush.msra.mxu0 0.0
    %963 = vmatpush.msra.mxu0 0.0
    %964 = vmatpush.msra.mxu0 0.0
    %965 = vmatpush.msra.mxu0 0.0
    %966 = vmatpush.msra.mxu0 0.0
    %967 = vmatpush.msra.mxu0 0.0
    %968 = vmatpush.msra.mxu0 0.0
    %969 = vmatpush.msra.mxu0 0.0
    %970 = vmatpush.msra.mxu0 0.0
    %971 = vmatpush.msra.mxu0 %v926
    %972 = vmatpush.msra.mxu0 %v925
    %973 = vmatpush.msra.mxu0 %v924
    %974 = vmatpush.msra.mxu0 %v923
    %975 = vmatmul.f32.gmra.mxu0 %v957
    %v976 = vpop.f32.mrf.mxu0
    %v977 = vadd.f32 %v948, %v976
    %978 = vdwg.mxu0
    %979 = vmatpush.msra.mxu0 0.0
    %980 = vmatpush.msra.mxu0 0.0
    %981 = vmatpush.msra.mxu0 0.0
    %982 = vmatpush.msra.mxu0 0.0
    %983 = vmatpush.msra.mxu0 0.0
    %984 = vmatpush.msra.mxu0 0.0
    %985 = vmatpush.msra.mxu0 0.0
    %986 = vmatpush.msra.mxu0 0.0
    %987 = vmatpush.msra.mxu0 0.0
    %988 = vmatpush.msra.mxu0 0.0
    %989 = vmatpush.msra.mxu0 0.0
    %990 = vmatpush.msra.mxu0 0.0
    %991 = vmatpush.msra.mxu0 %v930
    %992 = vmatpush.msra.mxu0 %v929
    %993 = vmatpush.msra.mxu0 %v928
    %994 = vmatpush.msra.mxu0 %v927
    %995 = vmatmul.f32.gmra.mxu0 %v957
    %v996 = vpop.f32.mrf.mxu0
    %v997 = vadd.f32 %v949, %v996
    %998 = vdwg.mxu0
    %999 = vmatpush.msra.mxu0 0.0
    %1000 = vmatpush.msra.mxu0 0.0
    %1001 = vmatpush.msra.mxu0 0.0
    %1002 = vmatpush.msra.mxu0 0.0
    %1003 = vmatpush.msra.mxu0 0.0
    %1004 = vmatpush.msra.mxu0 0.0
    %1005 = vmatpush.msra.mxu0 0.0
    %1006 = vmatpush.msra.mxu0 0.0
    %1007 = vmatpush.msra.mxu0 0.0
    %1008 = vmatpush.msra.mxu0 0.0
    %1009 = vmatpush.msra.mxu0 0.0
    %1010 = vmatpush.msra.mxu0 0.0
    %1011 = vmatpush.msra.mxu0 %v934
    %1012 = vmatpush.msra.mxu0 %v933
    %1013 = vmatpush.msra.mxu0 %v932
    %1014 = vmatpush.msra.mxu0 %v931
    %1015 = vmatmul.f32.gmra.mxu0 %v957
    %v1016 = vpop.f32.mrf.mxu0
    %v1017 = vadd.f32 %v950, %v1016
    %1018 = vdwg.mxu0
    %1019 = vmatpush.msra.mxu0 0.0
    %1020 = vmatpush.msra.mxu0 0.0
    %1021 = vmatpush.msra.mxu0 0.0
    %1022 = vmatpush.msra.mxu0 0.0
    %1023 = vmatpush.msra.mxu0 0.0
    %1024 = vmatpush.msra.mxu0 0.0
    %1025 = vmatpush.msra.mxu0 0.0
    %1026 = vmatpush.msra.mxu0 0.0
    %1027 = vmatpush.msra.mxu0 0.0
    %1028 = vmatpush.msra.mxu0 0.0
    %1029 = vmatpush.msra.mxu0 0.0
    %1030 = vmatpush.msra.mxu0 0.0
    %1031 = vmatpush.msra.mxu0 %v938
    %1032 = vmatpush.msra.mxu0 %v937
    %1033 = vmatpush.msra.mxu0 %v936
    %1034 = vmatpush.msra.mxu0 %v935
    %1035 = vmatmul.f32.gmra.mxu0 %v957
    %v1036 = vpop.f32.mrf.mxu0
    %v1037 = vadd.f32 %v951, %v1036
    %1038 = vdwg.mxu0
    %s1039 = scalar_lea.vmem %s3, 128
    %v1040 = vld [vmem:[%s1039] sm:$0xff]
    %v1041 = vld [vmem:[%s1039 + $0x8] sm:$0xff]
    %v1042 = vld [vmem:[%s1039 + $0x10] sm:$0xff]
    %v1043 = vld [vmem:[%s1039 + $0x18] sm:$0xff]
    %v1044 = vld [vmem:[%s1039 + $0x20] sm:$0xff]
    %v1045 = vld [vmem:[%s1039 + $0x28] sm:$0xff]
    %v1046 = vld [vmem:[%s1039 + $0x30] sm:$0xff]
    %v1047 = vld [vmem:[%s1039 + $0x38] sm:$0xff]
    %v1048 = vld [vmem:[%s1039 + $0x40] sm:$0xff]
    %v1049 = vld [vmem:[%s1039 + $0x48] sm:$0xff]
    %v1050 = vld [vmem:[%s1039 + $0x50] sm:$0xff]
    %v1051 = vld [vmem:[%s1039 + $0x58] sm:$0xff]
    %v1052 = vld [vmem:[%s1039 + $0x60] sm:$0xff]
    %v1053 = vld [vmem:[%s1039 + $0x68] sm:$0xff]
    %v1054 = vld [vmem:[%s1039 + $0x70] sm:$0xff]
    %v1055 = vld [vmem:[%s1039 + $0x78] sm:$0xff]
    %s1056 = scalar_lea.vmem %s6, 4
    %v1057 = vld [vmem:[%s1056] sm:$0x1]
    %v1058 = vld [vmem:[%s1056 + $0x1] sm:$0x1]
    %v1059 = vld [vmem:[%s1056 + $0x2] sm:$0x1]
    %v1060 = vld [vmem:[%s1056 + $0x3] sm:$0x1]
    %v1065 = vperm.slane %v1057, 0
    %v1066 = vperm.slane %v1058, 0
    %v1067 = vperm.slane %v1059, 0
    %v1068 = vperm.slane %v1060, 0
    %1073 = vmatpush.msra.mxu0 0.0
    %1074 = vmatpush.msra.mxu0 0.0
    %1075 = vmatpush.msra.mxu0 0.0
    %1076 = vmatpush.msra.mxu0 0.0
    %1077 = vmatpush.msra.mxu0 0.0
    %1078 = vmatpush.msra.mxu0 0.0
    %1079 = vmatpush.msra.mxu0 0.0
    %1080 = vmatpush.msra.mxu0 0.0
    %1081 = vmatpush.msra.mxu0 0.0
    %1082 = vmatpush.msra.mxu0 0.0
    %1083 = vmatpush.msra.mxu0 0.0
    %1084 = vmatpush.msra.mxu0 0.0
    %1085 = vmatpush.msra.mxu0 %v1043
    %1086 = vmatpush.msra.mxu0 %v1042
    %1087 = vmatpush.msra.mxu0 %v1041
    %1088 = vmatpush.msra.mxu0 %v1040
    %1089 = vmatmul.f32.gmra.mxu0 %v957
    %v1090 = vpop.f32.mrf.mxu0
    %v1091 = vadd.f32 %v1065, %v1090
    %1092 = vdwg.mxu0
    %1093 = vmatpush.msra.mxu0 0.0
    %1094 = vmatpush.msra.mxu0 0.0
    %1095 = vmatpush.msra.mxu0 0.0
    %1096 = vmatpush.msra.mxu0 0.0
    %1097 = vmatpush.msra.mxu0 0.0
    %1098 = vmatpush.msra.mxu0 0.0
    %1099 = vmatpush.msra.mxu0 0.0
    %1100 = vmatpush.msra.mxu0 0.0
    %1101 = vmatpush.msra.mxu0 0.0
    %1102 = vmatpush.msra.mxu0 0.0
    %1103 = vmatpush.msra.mxu0 0.0
    %1104 = vmatpush.msra.mxu0 0.0
    %1105 = vmatpush.msra.mxu0 %v1047
    %1106 = vmatpush.msra.mxu0 %v1046
    %1107 = vmatpush.msra.mxu0 %v1045
    %1108 = vmatpush.msra.mxu0 %v1044
    %1109 = vmatmul.f32.gmra.mxu0 %v957
    %v1110 = vpop.f32.mrf.mxu0
    %v1111 = vadd.f32 %v1066, %v1110
    %1112 = vdwg.mxu0
    %1113 = vmatpush.msra.mxu0 0.0
    %1114 = vmatpush.msra.mxu0 0.0
    %1115 = vmatpush.msra.mxu0 0.0
    %1116 = vmatpush.msra.mxu0 0.0
    %1117 = vmatpush.msra.mxu0 0.0
    %1118 = vmatpush.msra.mxu0 0.0
    %1119 = vmatpush.msra.mxu0 0.0
    %1120 = vmatpush.msra.mxu0 0.0
    %1121 = vmatpush.msra.mxu0 0.0
    %1122 = vmatpush.msra.mxu0 0.0
    %1123 = vmatpush.msra.mxu0 0.0
    %1124 = vmatpush.msra.mxu0 0.0
    %1125 = vmatpush.msra.mxu0 %v1051
    %1126 = vmatpush.msra.mxu0 %v1050
    %1127 = vmatpush.msra.mxu0 %v1049
    %1128 = vmatpush.msra.mxu0 %v1048
    %1129 = vmatmul.f32.gmra.mxu0 %v957
    %v1130 = vpop.f32.mrf.mxu0
    %v1131 = vadd.f32 %v1067, %v1130
    %1132 = vdwg.mxu0
    %1133 = vmatpush.msra.mxu0 0.0
    %1134 = vmatpush.msra.mxu0 0.0
    %1135 = vmatpush.msra.mxu0 0.0
    %1136 = vmatpush.msra.mxu0 0.0
    %1137 = vmatpush.msra.mxu0 0.0
    %1138 = vmatpush.msra.mxu0 0.0
    %1139 = vmatpush.msra.mxu0 0.0
    %1140 = vmatpush.msra.mxu0 0.0
    %1141 = vmatpush.msra.mxu0 0.0
    %1142 = vmatpush.msra.mxu0 0.0
    %1143 = vmatpush.msra.mxu0 0.0
    %1144 = vmatpush.msra.mxu0 0.0
    %1145 = vmatpush.msra.mxu0 %v1055
    %1146 = vmatpush.msra.mxu0 %v1054
    %1147 = vmatpush.msra.mxu0 %v1053
    %1148 = vmatpush.msra.mxu0 %v1052
    %1149 = vmatmul.f32.gmra.mxu0 %v957
    %v1150 = vpop.f32.mrf.mxu0
    %v1151 = vadd.f32 %v1068, %v1150
    %1152 = vdwg.mxu0
    %s1153 = scalar_lea.vmem %s4, 128
    %v1154 = vld [vmem:[%s1153] sm:$0xff]
    %v1155 = vld [vmem:[%s1153 + $0x8] sm:$0xff]
    %v1156 = vld [vmem:[%s1153 + $0x10] sm:$0xff]
    %v1157 = vld [vmem:[%s1153 + $0x18] sm:$0xff]
    %v1158 = vld [vmem:[%s1153 + $0x20] sm:$0xff]
    %v1159 = vld [vmem:[%s1153 + $0x28] sm:$0xff]
    %v1160 = vld [vmem:[%s1153 + $0x30] sm:$0xff]
    %v1161 = vld [vmem:[%s1153 + $0x38] sm:$0xff]
    %v1162 = vld [vmem:[%s1153 + $0x40] sm:$0xff]
    %v1163 = vld [vmem:[%s1153 + $0x48] sm:$0xff]
    %v1164 = vld [vmem:[%s1153 + $0x50] sm:$0xff]
    %v1165 = vld [vmem:[%s1153 + $0x58] sm:$0xff]
    %v1166 = vld [vmem:[%s1153 + $0x60] sm:$0xff]
    %v1167 = vld [vmem:[%s1153 + $0x68] sm:$0xff]
    %v1168 = vld [vmem:[%s1153 + $0x70] sm:$0xff]
    %v1169 = vld [vmem:[%s1153 + $0x78] sm:$0xff]
    %s1170 = scalar_lea.vmem %s7, 4
    %v1171 = vld [vmem:[%s1170] sm:$0x1]
    %v1172 = vld [vmem:[%s1170 + $0x1] sm:$0x1]
    %v1173 = vld [vmem:[%s1170 + $0x2] sm:$0x1]
    %v1174 = vld [vmem:[%s1170 + $0x3] sm:$0x1]
    %v1179 = vperm.slane %v1171, 0
    %v1180 = vperm.slane %v1172, 0
    %v1181 = vperm.slane %v1173, 0
    %v1182 = vperm.slane %v1174, 0
    %1187 = vmatpush.msra.mxu0 0.0
    %1188 = vmatpush.msra.mxu0 0.0
    %1189 = vmatpush.msra.mxu0 0.0
    %1190 = vmatpush.msra.mxu0 0.0
    %1191 = vmatpush.msra.mxu0 0.0
    %1192 = vmatpush.msra.mxu0 0.0
    %1193 = vmatpush.msra.mxu0 0.0
    %1194 = vmatpush.msra.mxu0 0.0
    %1195 = vmatpush.msra.mxu0 0.0
    %1196 = vmatpush.msra.mxu0 0.0
    %1197 = vmatpush.msra.mxu0 0.0
    %1198 = vmatpush.msra.mxu0 0.0
    %1199 = vmatpush.msra.mxu0 %v1157
    %1200 = vmatpush.msra.mxu0 %v1156
    %1201 = vmatpush.msra.mxu0 %v1155
    %1202 = vmatpush.msra.mxu0 %v1154
    %1203 = vmatmul.f32.gmra.mxu0 %v957
    %v1204 = vpop.f32.mrf.mxu0
    %v1205 = vadd.f32 %v1179, %v1204
    %1206 = vdwg.mxu0
    %1207 = vmatpush.msra.mxu0 0.0
    %1208 = vmatpush.msra.mxu0 0.0
    %1209 = vmatpush.msra.mxu0 0.0
    %1210 = vmatpush.msra.mxu0 0.0
    %1211 = vmatpush.msra.mxu0 0.0
    %1212 = vmatpush.msra.mxu0 0.0
    %1213 = vmatpush.msra.mxu0 0.0
    %1214 = vmatpush.msra.mxu0 0.0
    %1215 = vmatpush.msra.mxu0 0.0
    %1216 = vmatpush.msra.mxu0 0.0
    %1217 = vmatpush.msra.mxu0 0.0
    %1218 = vmatpush.msra.mxu0 0.0
    %1219 = vmatpush.msra.mxu0 %v1161
    %1220 = vmatpush.msra.mxu0 %v1160
    %1221 = vmatpush.msra.mxu0 %v1159
    %1222 = vmatpush.msra.mxu0 %v1158
    %1223 = vmatmul.f32.gmra.mxu0 %v957
    %v1224 = vpop.f32.mrf.mxu0
    %v1225 = vadd.f32 %v1180, %v1224
    %1226 = vdwg.mxu0
    %1227 = vmatpush.msra.mxu0 0.0
    %1228 = vmatpush.msra.mxu0 0.0
    %1229 = vmatpush.msra.mxu0 0.0
    %1230 = vmatpush.msra.mxu0 0.0
    %1231 = vmatpush.msra.mxu0 0.0
    %1232 = vmatpush.msra.mxu0 0.0
    %1233 = vmatpush.msra.mxu0 0.0
    %1234 = vmatpush.msra.mxu0 0.0
    %1235 = vmatpush.msra.mxu0 0.0
    %1236 = vmatpush.msra.mxu0 0.0
    %1237 = vmatpush.msra.mxu0 0.0
    %1238 = vmatpush.msra.mxu0 0.0
    %1239 = vmatpush.msra.mxu0 %v1165
    %1240 = vmatpush.msra.mxu0 %v1164
    %1241 = vmatpush.msra.mxu0 %v1163
    %1242 = vmatpush.msra.mxu0 %v1162
    %1243 = vmatmul.f32.gmra.mxu0 %v957
    %v1244 = vpop.f32.mrf.mxu0
    %v1245 = vadd.f32 %v1181, %v1244
    %1246 = vdwg.mxu0
    %1247 = vmatpush.msra.mxu0 0.0
    %1248 = vmatpush.msra.mxu0 0.0
    %1249 = vmatpush.msra.mxu0 0.0
    %1250 = vmatpush.msra.mxu0 0.0
    %1251 = vmatpush.msra.mxu0 0.0
    %1252 = vmatpush.msra.mxu0 0.0
    %1253 = vmatpush.msra.mxu0 0.0
    %1254 = vmatpush.msra.mxu0 0.0
    %1255 = vmatpush.msra.mxu0 0.0
    %1256 = vmatpush.msra.mxu0 0.0
    %1257 = vmatpush.msra.mxu0 0.0
    %1258 = vmatpush.msra.mxu0 0.0
    %1259 = vmatpush.msra.mxu0 %v1169
    %1260 = vmatpush.msra.mxu0 %v1168
    %1261 = vmatpush.msra.mxu0 %v1167
    %1262 = vmatpush.msra.mxu0 %v1166
    %1263 = vmatmul.f32.gmra.mxu0 %v957
    %v1264 = vpop.f32.mrf.mxu0
    %v1265 = vadd.f32 %v1182, %v1264
    %1266 = vdwg.mxu0
    %v1268 = vsel %vm420, %v977, 0
    %v1271 = vsel %vm420, %v1091, 0
    %1273 = vmatpush.xpose.msra.mxu0 0.0
    %1274 = vmatpush.xpose.msra.mxu0 0.0
    %1275 = vmatpush.xpose.msra.mxu0 0.0
    %1276 = vmatpush.xpose.msra.mxu0 0.0
    %1277 = vmatpush.xpose.msra.mxu0 0.0
    %1278 = vmatpush.xpose.msra.mxu0 0.0
    %1279 = vmatpush.xpose.msra.mxu0 0.0
    %1280 = vmatpush.xpose.msra.mxu0 0.0
    %1281 = vmatpush.xpose.msra.mxu0 0.0
    %1282 = vmatpush.xpose.msra.mxu0 0.0
    %1283 = vmatpush.xpose.msra.mxu0 0.0
    %1284 = vmatpush.xpose.msra.mxu0 0.0
    %1285 = vmatpush.xpose.msra.mxu0 0.0
    %1286 = vmatpush.xpose.msra.mxu0 0.0
    %1287 = vmatpush.xpose.msra.mxu0 0.0
    %1288 = vmatpush.xpose.msra.mxu0 %v1271
    %1289 = vmatmul.f32.gmra.mxu0 %v1268
    %v1290 = vpop.f32.mrf.mxu0
    %v1291 = vadd.f32 %v78, %v1290
    %1292 = vdwg.mxu0
    %v1294 = vsel %vm420, %v997, 0
    %v1297 = vsel %vm420, %v1111, 0
    %1299 = vmatpush.xpose.msra.mxu0 0.0
    %1300 = vmatpush.xpose.msra.mxu0 0.0
    %1301 = vmatpush.xpose.msra.mxu0 0.0
    %1302 = vmatpush.xpose.msra.mxu0 0.0
    %1303 = vmatpush.xpose.msra.mxu0 0.0
    %1304 = vmatpush.xpose.msra.mxu0 0.0
    %1305 = vmatpush.xpose.msra.mxu0 0.0
    %1306 = vmatpush.xpose.msra.mxu0 0.0
    %1307 = vmatpush.xpose.msra.mxu0 0.0
    %1308 = vmatpush.xpose.msra.mxu0 0.0
    %1309 = vmatpush.xpose.msra.mxu0 0.0
    %1310 = vmatpush.xpose.msra.mxu0 0.0
    %1311 = vmatpush.xpose.msra.mxu0 0.0
    %1312 = vmatpush.xpose.msra.mxu0 0.0
    %1313 = vmatpush.xpose.msra.mxu0 0.0
    %1314 = vmatpush.xpose.msra.mxu0 %v1297
    %1315 = vmatmul.f32.gmra.mxu0 %v1294
    %v1316 = vpop.f32.mrf.mxu0
    %v1317 = vadd.f32 %v78, %v1316
    %1318 = vdwg.mxu0
    %v1320 = vsel %vm420, %v1017, 0
    %v1323 = vsel %vm420, %v1131, 0
    %1325 = vmatpush.xpose.msra.mxu0 0.0
    %1326 = vmatpush.xpose.msra.mxu0 0.0
    %1327 = vmatpush.xpose.msra.mxu0 0.0
    %1328 = vmatpush.xpose.msra.mxu0 0.0
    %1329 = vmatpush.xpose.msra.mxu0 0.0
    %1330 = vmatpush.xpose.msra.mxu0 0.0
    %1331 = vmatpush.xpose.msra.mxu0 0.0
    %1332 = vmatpush.xpose.msra.mxu0 0.0
    %1333 = vmatpush.xpose.msra.mxu0 0.0
    %1334 = vmatpush.xpose.msra.mxu0 0.0
    %1335 = vmatpush.xpose.msra.mxu0 0.0
    %1336 = vmatpush.xpose.msra.mxu0 0.0
    %1337 = vmatpush.xpose.msra.mxu0 0.0
    %1338 = vmatpush.xpose.msra.mxu0 0.0
    %1339 = vmatpush.xpose.msra.mxu0 0.0
    %1340 = vmatpush.xpose.msra.mxu0 %v1323
    %1341 = vmatmul.f32.gmra.mxu0 %v1320
    %v1342 = vpop.f32.mrf.mxu0
    %v1343 = vadd.f32 %v78, %v1342
    %1344 = vdwg.mxu0
    %v1346 = vsel %vm420, %v1037, 0
    %v1349 = vsel %vm420, %v1151, 0
    %1351 = vmatpush.xpose.msra.mxu0 0.0
    %1352 = vmatpush.xpose.msra.mxu0 0.0
    %1353 = vmatpush.xpose.msra.mxu0 0.0
    %1354 = vmatpush.xpose.msra.mxu0 0.0
    %1355 = vmatpush.xpose.msra.mxu0 0.0
    %1356 = vmatpush.xpose.msra.mxu0 0.0
    %1357 = vmatpush.xpose.msra.mxu0 0.0
    %1358 = vmatpush.xpose.msra.mxu0 0.0
    %1359 = vmatpush.xpose.msra.mxu0 0.0
    %1360 = vmatpush.xpose.msra.mxu0 0.0
    %1361 = vmatpush.xpose.msra.mxu0 0.0
    %1362 = vmatpush.xpose.msra.mxu0 0.0
    %1363 = vmatpush.xpose.msra.mxu0 0.0
    %1364 = vmatpush.xpose.msra.mxu0 0.0
    %1365 = vmatpush.xpose.msra.mxu0 0.0
    %1366 = vmatpush.xpose.msra.mxu0 %v1349
    %1367 = vmatmul.f32.gmra.mxu0 %v1346
    %v1368 = vpop.f32.mrf.mxu0
    %v1369 = vadd.f32 %v78, %v1368
    %1370 = vdwg.mxu0
    %v1371 = vsel %vm420, %v1291, -inf
    %1372 = vmax.xlane.f32.xlu0 %v1371
    %v1373 = vpop.xlane.xlu0 %1372
    %v1374 = vsel %vm420, %v1317, -inf
    %1375 = vmax.xlane.f32.xlu0 %v1374
    %v1376 = vpop.xlane.xlu0 %1375
    %v1377 = vsel %vm420, %v1343, -inf
    %1378 = vmax.xlane.f32.xlu0 %v1377
    %v1379 = vpop.xlane.xlu0 %1378
    %v1380 = vsel %vm420, %v1369, -inf
    %1381 = vmax.xlane.f32.xlu0 %v1380
    %v1382 = vpop.xlane.xlu0 %1381
    %v1383 = vsub.f32 %v1291, %v1373
    %v1384 = vsub.f32 %v1317, %v1376
    %v1385 = vsub.f32 %v1343, %v1379
    %v1386 = vsub.f32 %v1369, %v1382
    %v1387 = vmul.f32 %v1383, 1.442695
    %v1388 = vpow.pop %v1387
    %v1389 = vmul.f32 %v1384, 1.442695
    %v1390 = vpow.pop %v1389
    %v1391 = vmul.f32 %v1385, 1.442695
    %v1392 = vpow.pop %v1391
    %v1393 = vmul.f32 %v1386, 1.442695
    %v1394 = vpow.pop %v1393
    %v1395 = vsel %vm420, %v1388, 0.0
    %1396 = vadd.xlane.f32.xlu0 %v1395
    %v1397 = vpop.xlane.xlu0 %1396
    %v1398 = vsel %vm420, %v1390, 0.0
    %1399 = vadd.xlane.f32.xlu0 %v1398
    %v1400 = vpop.xlane.xlu0 %1399
    %v1401 = vsel %vm420, %v1392, 0.0
    %1402 = vadd.xlane.f32.xlu0 %v1401
    %v1403 = vpop.xlane.xlu0 %1402
    %v1404 = vsel %vm420, %v1394, 0.0
    %1405 = vadd.xlane.f32.xlu0 %v1404
    %v1406 = vpop.xlane.xlu0 %1405
    %v1407 = vrcp.pop %v1397
    %v1408 = vrcp.pop %v1400
    %v1409 = vrcp.pop %v1403
    %v1410 = vrcp.pop %v1406
    %v1411 = vmul.f32 %v1388, %v1407
    %v1412 = vmul.f32 %v1390, %v1408
    %v1413 = vmul.f32 %v1392, %v1409
    %v1414 = vmul.f32 %v1394, %v1410
    %v1416 = vsel %vm420, %v1411, 0
    %1418 = vmatpush.msra.mxu0 0.0
    %1419 = vmatpush.msra.mxu0 0.0
    %1420 = vmatpush.msra.mxu0 0.0
    %1421 = vmatpush.msra.mxu0 0.0
    %1422 = vmatpush.msra.mxu0 0.0
    %1423 = vmatpush.msra.mxu0 0.0
    %1424 = vmatpush.msra.mxu0 0.0
    %1425 = vmatpush.msra.mxu0 0.0
    %1426 = vmatpush.msra.mxu0 0.0
    %1427 = vmatpush.msra.mxu0 0.0
    %1428 = vmatpush.msra.mxu0 0.0
    %1429 = vmatpush.msra.mxu0 0.0
    %1430 = vmatpush.msra.mxu0 0.0
    %1431 = vmatpush.msra.mxu0 0.0
    %1432 = vmatpush.msra.mxu0 0.0
    %1433 = vmatpush.msra.mxu0 %v1205
    %1434 = vmatmul.f32.gmra.mxu0 %v1416
    %v1435 = vpop.f32.mrf.mxu0
    %v1436 = vadd.f32 0.0, %v1435
    %1437 = vdwg.mxu0
    %v1439 = vsel %vm420, %v1412, 0
    %1441 = vmatpush.msra.mxu0 0.0
    %1442 = vmatpush.msra.mxu0 0.0
    %1443 = vmatpush.msra.mxu0 0.0
    %1444 = vmatpush.msra.mxu0 0.0
    %1445 = vmatpush.msra.mxu0 0.0
    %1446 = vmatpush.msra.mxu0 0.0
    %1447 = vmatpush.msra.mxu0 0.0
    %1448 = vmatpush.msra.mxu0 0.0
    %1449 = vmatpush.msra.mxu0 0.0
    %1450 = vmatpush.msra.mxu0 0.0
    %1451 = vmatpush.msra.mxu0 0.0
    %1452 = vmatpush.msra.mxu0 0.0
    %1453 = vmatpush.msra.mxu0 0.0
    %1454 = vmatpush.msra.mxu0 0.0
    %1455 = vmatpush.msra.mxu0 0.0
    %1456 = vmatpush.msra.mxu0 %v1225
    %1457 = vmatmul.f32.gmra.mxu0 %v1439
    %v1458 = vpop.f32.mrf.mxu0
    %v1459 = vadd.f32 0.0, %v1458
    %1460 = vdwg.mxu0
    %v1462 = vsel %vm420, %v1413, 0
    %1464 = vmatpush.msra.mxu0 0.0
    %1465 = vmatpush.msra.mxu0 0.0
    %1466 = vmatpush.msra.mxu0 0.0
    %1467 = vmatpush.msra.mxu0 0.0
    %1468 = vmatpush.msra.mxu0 0.0
    %1469 = vmatpush.msra.mxu0 0.0
    %1470 = vmatpush.msra.mxu0 0.0
    %1471 = vmatpush.msra.mxu0 0.0
    %1472 = vmatpush.msra.mxu0 0.0
    %1473 = vmatpush.msra.mxu0 0.0
    %1474 = vmatpush.msra.mxu0 0.0
    %1475 = vmatpush.msra.mxu0 0.0
    %1476 = vmatpush.msra.mxu0 0.0
    %1477 = vmatpush.msra.mxu0 0.0
    %1478 = vmatpush.msra.mxu0 0.0
    %1479 = vmatpush.msra.mxu0 %v1245
    %1480 = vmatmul.f32.gmra.mxu0 %v1462
    %v1481 = vpop.f32.mrf.mxu0
    %v1482 = vadd.f32 0.0, %v1481
    %1483 = vdwg.mxu0
    %v1485 = vsel %vm420, %v1414, 0
    %1487 = vmatpush.msra.mxu0 0.0
    %1488 = vmatpush.msra.mxu0 0.0
    %1489 = vmatpush.msra.mxu0 0.0
    %1490 = vmatpush.msra.mxu0 0.0
    %1491 = vmatpush.msra.mxu0 0.0
    %1492 = vmatpush.msra.mxu0 0.0
    %1493 = vmatpush.msra.mxu0 0.0
    %1494 = vmatpush.msra.mxu0 0.0
    %1495 = vmatpush.msra.mxu0 0.0
    %1496 = vmatpush.msra.mxu0 0.0
    %1497 = vmatpush.msra.mxu0 0.0
    %1498 = vmatpush.msra.mxu0 0.0
    %1499 = vmatpush.msra.mxu0 0.0
    %1500 = vmatpush.msra.mxu0 0.0
    %1501 = vmatpush.msra.mxu0 0.0
    %1502 = vmatpush.msra.mxu0 %v1265
    %1503 = vmatmul.f32.gmra.mxu0 %v1485
    %v1504 = vpop.f32.mrf.mxu0
    %v1505 = vadd.f32 0.0, %v1504
    %1506 = vdwg.mxu0
    %s1507 = scalar_lea.vmem %s8, 32
    %v1508 = vld [vmem:[%s1507] sm:$0xff]
    %v1509 = vld [vmem:[%s1507 + $0x8] sm:$0xff]
    %v1510 = vld [vmem:[%s1507 + $0x10] sm:$0xff]
    %v1511 = vld [vmem:[%s1507 + $0x18] sm:$0xff]
    %v1513 = vsel %vm420, %v1436, 0
    %1515 = vmatpush.msra.mxu0 0.0
    %1516 = vmatpush.msra.mxu0 0.0
    %1517 = vmatpush.msra.mxu0 0.0
    %1518 = vmatpush.msra.mxu0 0.0
    %1519 = vmatpush.msra.mxu0 0.0
    %1520 = vmatpush.msra.mxu0 0.0
    %1521 = vmatpush.msra.mxu0 0.0
    %1522 = vmatpush.msra.mxu0 0.0
    %1523 = vmatpush.msra.mxu0 0.0
    %1524 = vmatpush.msra.mxu0 0.0
    %1525 = vmatpush.msra.mxu0 0.0
    %1526 = vmatpush.msra.mxu0 0.0
    %1527 = vmatpush.msra.mxu0 0.0
    %1528 = vmatpush.msra.mxu0 0.0
    %1529 = vmatpush.msra.mxu0 0.0
    %1530 = vmatpush.msra.mxu0 %v1508
    %1531 = vmatmul.f32.gmra.mxu0 %v1513
    %v1532 = vpop.f32.mrf.mxu0
    %v1533 = vadd.f32 0.0, %v1532
    %1534 = vdwg.mxu0
    %v1536 = vsel %vm420, %v1459, 0
    %1538 = vmatpush.msra.mxu0 0.0
    %1539 = vmatpush.msra.mxu0 0.0
    %1540 = vmatpush.msra.mxu0 0.0
    %1541 = vmatpush.msra.mxu0 0.0
    %1542 = vmatpush.msra.mxu0 0.0
    %1543 = vmatpush.msra.mxu0 0.0
    %1544 = vmatpush.msra.mxu0 0.0
    %1545 = vmatpush.msra.mxu0 0.0
    %1546 = vmatpush.msra.mxu0 0.0
    %1547 = vmatpush.msra.mxu0 0.0
    %1548 = vmatpush.msra.mxu0 0.0
    %1549 = vmatpush.msra.mxu0 0.0
    %1550 = vmatpush.msra.mxu0 0.0
    %1551 = vmatpush.msra.mxu0 0.0
    %1552 = vmatpush.msra.mxu0 0.0
    %1553 = vmatpush.msra.mxu0 %v1509
    %1554 = vmatmul.f32.gmra.mxu0 %v1536
    %v1555 = vpop.f32.mrf.mxu0
    %v1556 = vadd.f32 0.0, %v1555
    %1557 = vdwg.mxu0
    %v1559 = vsel %vm420, %v1482, 0
    %1561 = vmatpush.msra.mxu0 0.0
    %1562 = vmatpush.msra.mxu0 0.0
    %1563 = vmatpush.msra.mxu0 0.0
    %1564 = vmatpush.msra.mxu0 0.0
    %1565 = vmatpush.msra.mxu0 0.0
    %1566 = vmatpush.msra.mxu0 0.0
    %1567 = vmatpush.msra.mxu0 0.0
    %1568 = vmatpush.msra.mxu0 0.0
    %1569 = vmatpush.msra.mxu0 0.0
    %1570 = vmatpush.msra.mxu0 0.0
    %1571 = vmatpush.msra.mxu0 0.0
    %1572 = vmatpush.msra.mxu0 0.0
    %1573 = vmatpush.msra.mxu0 0.0
    %1574 = vmatpush.msra.mxu0 0.0
    %1575 = vmatpush.msra.mxu0 0.0
    %1576 = vmatpush.msra.mxu0 %v1510
    %1577 = vmatmul.f32.gmra.mxu0 %v1559
    %v1578 = vpop.f32.mrf.mxu0
    %v1579 = vadd.f32 0.0, %v1578
    %1580 = vdwg.mxu0
    %v1582 = vsel %vm420, %v1505, 0
    %1584 = vmatpush.msra.mxu0 0.0
    %1585 = vmatpush.msra.mxu0 0.0
    %1586 = vmatpush.msra.mxu0 0.0
    %1587 = vmatpush.msra.mxu0 0.0
    %1588 = vmatpush.msra.mxu0 0.0
    %1589 = vmatpush.msra.mxu0 0.0
    %1590 = vmatpush.msra.mxu0 0.0
    %1591 = vmatpush.msra.mxu0 0.0
    %1592 = vmatpush.msra.mxu0 0.0
    %1593 = vmatpush.msra.mxu0 0.0
    %1594 = vmatpush.msra.mxu0 0.0
    %1595 = vmatpush.msra.mxu0 0.0
    %1596 = vmatpush.msra.mxu0 0.0
    %1597 = vmatpush.msra.mxu0 0.0
    %1598 = vmatpush.msra.mxu0 0.0
    %1599 = vmatpush.msra.mxu0 %v1511
    %1600 = vmatmul.f32.gmra.mxu0 %v1582
    %v1601 = vpop.f32.mrf.mxu0
    %v1602 = vadd.f32 0.0, %v1601
    %1603 = vdwg.mxu0
    %v1604 = vsel %vm112, %v1533, 0.0
    %v1605 = vsel %vm112, %v1556, 0.0
    %v1606 = vadd.f32 %v1604, %v1605
    %v1607 = vsel %vm112, %v1579, 0.0
    %v1608 = vadd.f32 %v1606, %v1607
    %v1609 = vsel %vm112, %v1602, 0.0
    %v1610 = vadd.f32 %v1608, %v1609
    %s1611 = scalar_lea.vmem %s9, 1
    %v1612 = vld [vmem:[%s1611] sm:$0x1]
    %v1614 = vperm.slane %v1612, 0
    %v1616 = vadd.f32 %v1610, %v1614
    %v1617 = vadd.f32 %v921, %v1616
    %s1618 = scalar_lea.vmem %s10, 1
    %v1619 = vld [vmem:[%s1618] sm:$0x1]
    %s1620 = scalar_lea.vmem %s11, 1
    %v1621 = vld [vmem:[%s1620] sm:$0x1]
    %v1622 = vsel %vm112, %v1617, 0.0
    %1623 = vadd.xlane.f32.xlu0 %v1622
    %v1624 = vpop.xlane.xlu0 %1623
    %v1625 = vmul.f32 %v1624, %v781
    %v1626 = vsub.f32 %v1617, %v1625
    %v1627 = vmul.f32 %v1626, %v1626
    %v1628 = vsel %vm112, %v1627, 0.0
    %1629 = vadd.xlane.f32.xlu0 %v1628
    %v1630 = vpop.xlane.xlu0 %1629
    %v1631 = vmul.f32 %v1630, %v781
    %v1632 = vadd.f32 %v1631, 1e-05
    %v1633 = vrsqrt.pop %v1632
    %v1634 = vmul.f32 %v1633, %v1632
    %v1635 = vmul.f32 %v1634, %v1633
    %v1636 = vmul.f32 0.5, %v1635
    %v1637 = vsub.f32 1.5, %v1636
    %v1638 = vmul.f32 %v1633, %v1637
    %vm1639 = vweird.f32 %v1632
    %vm1640 = vweird.f32 %v1633
    %vm1641 = vmor %vm1639, %vm1640
    %v1642 = vsel %vm1641, %v1633, %v1638
    %v1643 = vmul.f32 %v1626, %v1642
    %v1645 = vperm.slane %v1619, 0
    %v1647 = vmul.f32 %v1643, %v1645
    %v1649 = vperm.slane %v1621, 0
    %v1651 = vadd.f32 %v1647, %v1649
    %s1652 = scalar_lea.vmem %s12, 32
    %v1653 = vld [vmem:[%s1652] sm:$0xff]
    %v1654 = vld [vmem:[%s1652 + $0x8] sm:$0xff]
    %v1655 = vld [vmem:[%s1652 + $0x10] sm:$0xff]
    %v1656 = vld [vmem:[%s1652 + $0x18] sm:$0xff]
    %s1657 = scalar_lea.vmem %s13, 1
    %v1658 = vld [vmem:[%s1657] sm:$0x1]
    %v1660 = vperm.slane %v1658, 0
    %v1663 = vsel %vm112, %v1651, 0
    %1665 = vmatpush.msra.mxu0 0.0
    %1666 = vmatpush.msra.mxu0 0.0
    %1667 = vmatpush.msra.mxu0 0.0
    %1668 = vmatpush.msra.mxu0 0.0
    %1669 = vmatpush.msra.mxu0 0.0
    %1670 = vmatpush.msra.mxu0 0.0
    %1671 = vmatpush.msra.mxu0 0.0
    %1672 = vmatpush.msra.mxu0 0.0
    %1673 = vmatpush.msra.mxu0 0.0
    %1674 = vmatpush.msra.mxu0 0.0
    %1675 = vmatpush.msra.mxu0 0.0
    %1676 = vmatpush.msra.mxu0 0.0
    %1677 = vmatpush.msra.mxu0 %v1656
    %1678 = vmatpush.msra.mxu0 %v1655
    %1679 = vmatpush.msra.mxu0 %v1654
    %1680 = vmatpush.msra.mxu0 %v1653
    %1681 = vmatmul.f32.gmra.mxu0 %v1663
    %v1682 = vpop.f32.mrf.mxu0
    %v1683 = vadd.f32 %v1660, %v1682
    %1684 = vdwg.mxu0
    %v1685 = vmul.f32 %v1683, %v1683
    %v1686 = vmul.f32 %v1683, %v1685
    %v1687 = vmul.f32 %v1686, 0.044715
    %v1688 = vadd.f32 %v1683, %v1687
    %v1689 = vmul.f32 %v1688, 0.7978846
    %v1690 = vtanh.pop %v1689
    %v1691 = vadd.f32 %v1690, 1.0
    %v1692 = vmul.f32 %v1691, 0.5
    %v1693 = vmul.f32 %v1683, %v1692
    %s1694 = scalar_lea.vmem %s14, 128
    %v1695 = vld [vmem:[%s1694] sm:$0xff]
    %v1696 = vld [vmem:[%s1694 + $0x8] sm:$0xff]
    %v1697 = vld [vmem:[%s1694 + $0x10] sm:$0xff]
    %v1698 = vld [vmem:[%s1694 + $0x18] sm:$0xff]
    %v1699 = vld [vmem:[%s1694 + $0x20] sm:$0xff]
    %v1700 = vld [vmem:[%s1694 + $0x28] sm:$0xff]
    %v1701 = vld [vmem:[%s1694 + $0x30] sm:$0xff]
    %v1702 = vld [vmem:[%s1694 + $0x38] sm:$0xff]
    %v1703 = vld [vmem:[%s1694 + $0x40] sm:$0xff]
    %v1704 = vld [vmem:[%s1694 + $0x48] sm:$0xff]
    %v1705 = vld [vmem:[%s1694 + $0x50] sm:$0xff]
    %v1706 = vld [vmem:[%s1694 + $0x58] sm:$0xff]
    %v1707 = vld [vmem:[%s1694 + $0x60] sm:$0xff]
    %v1708 = vld [vmem:[%s1694 + $0x68] sm:$0xff]
    %v1709 = vld [vmem:[%s1694 + $0x70] sm:$0xff]
    %v1710 = vld [vmem:[%s1694 + $0x78] sm:$0xff]
    %s1711 = scalar_lea.vmem %s15, 1
    %v1712 = vld [vmem:[%s1711] sm:$0x1]
    %v1714 = vperm.slane %v1712, 0
    %1716 = vmatpush.msra.mxu0 %v1710
    %1717 = vmatpush.msra.mxu0 %v1709
    %1718 = vmatpush.msra.mxu0 %v1708
    %1719 = vmatpush.msra.mxu0 %v1707
    %1720 = vmatpush.msra.mxu0 %v1706
    %1721 = vmatpush.msra.mxu0 %v1705
    %1722 = vmatpush.msra.mxu0 %v1704
    %1723 = vmatpush.msra.mxu0 %v1703
    %1724 = vmatpush.msra.mxu0 %v1702
    %1725 = vmatpush.msra.mxu0 %v1701
    %1726 = vmatpush.msra.mxu0 %v1700
    %1727 = vmatpush.msra.mxu0 %v1699
    %1728 = vmatpush.msra.mxu0 %v1698
    %1729 = vmatpush.msra.mxu0 %v1697
    %1730 = vmatpush.msra.mxu0 %v1696
    %1731 = vmatpush.msra.mxu0 %v1695
    %1732 = vmatmul.f32.gmra.mxu0 %v1693
    %v1733 = vpop.f32.mrf.mxu0
    %v1734 = vadd.f32 %v1714, %v1733
    %1735 = vdwg.mxu0
    %v1736 = vadd.f32 %v1651, %v1734
    %s1737 = scalar_lea.vmem %s16, 1
    %v1738 = vld [vmem:[%s1737] sm:$0x1]
    %s1739 = scalar_lea.vmem %s17, 1
    %v1740 = vld [vmem:[%s1739] sm:$0x1]
    %v1741 = vsel %vm112, %v1736, 0.0
    %1742 = vadd.xlane.f32.xlu0 %v1741
    %v1743 = vpop.xlane.xlu0 %1742
    %v1744 = vmul.f32 %v1743, %v781
    %v1745 = vsub.f32 %v1736, %v1744
    %v1746 = vmul.f32 %v1745, %v1745
    %v1747 = vsel %vm112, %v1746, 0.0
    %1748 = vadd.xlane.f32.xlu0 %v1747
    %v1749 = vpop.xlane.xlu0 %1748
    %v1750 = vmul.f32 %v1749, %v781
    %v1751 = vadd.f32 %v1750, 1e-05
    %v1752 = vrsqrt.pop %v1751
    %v1753 = vmul.f32 %v1752, %v1751
    %v1754 = vmul.f32 %v1753, %v1752
    %v1755 = vmul.f32 0.5, %v1754
    %v1756 = vsub.f32 1.5, %v1755
    %v1757 = vmul.f32 %v1752, %v1756
    %vm1758 = vweird.f32 %v1751
    %vm1759 = vweird.f32 %v1752
    %vm1760 = vmor %vm1758, %vm1759
    %v1761 = vsel %vm1760, %v1752, %v1757
    %v1762 = vmul.f32 %v1745, %v1761
    %v1764 = vperm.slane %v1738, 0
    %v1766 = vmul.f32 %v1762, %v1764
    %v1768 = vperm.slane %v1740, 0
    %v1770 = vadd.f32 %v1766, %v1768
    %v1772 = vsel %vm112, %v1770, 0
    %1774 = vmatpush.msra.mxu0 0.0
    %1775 = vmatpush.msra.mxu0 0.0
    %1776 = vmatpush.msra.mxu0 0.0
    %1777 = vmatpush.msra.mxu0 0.0
    %1778 = vmatpush.msra.mxu0 0.0
    %1779 = vmatpush.msra.mxu0 0.0
    %1780 = vmatpush.msra.mxu0 0.0
    %1781 = vmatpush.msra.mxu0 0.0
    %1782 = vmatpush.msra.mxu0 0.0
    %1783 = vmatpush.msra.mxu0 0.0
    %1784 = vmatpush.msra.mxu0 0.0
    %1785 = vmatpush.msra.mxu0 0.0
    %1786 = vmatpush.msra.mxu0 %v71
    %1787 = vmatpush.msra.mxu0 %v70
    %1788 = vmatpush.msra.mxu0 %v69
    %1789 = vmatpush.msra.mxu0 %v68
    %1790 = vmatmul.f32.gmra.mxu0 %v1772
    %v1791 = vpop.f32.mrf.mxu0
    %v1792 = vadd.f32 0.0, %v1791
    %1793 = vdwg.mxu0
    %1794 = vst [vmem:[#allocation2] sm:$0xff] %v1792
    %s1795 = scalar_lea.vmem %s1, 1
    %v1796 = vld [vmem:[%s1795] sm:$0x1]
    %vm1797 = vcmp.gt.f32.partialorder %v1796, 0.5
    %v1798 = vsel %vm1797, 1, 0
    %v1799 = vperm.slane %v1798, 0
    %vm1800 = vcmp.eq.s32.totalorder %v1799, 1
    %vm1801 = vmor %vm67, %vm1800
    %v1802 = vsel %vm1801, -1e+09, 0.0
    %s1803 = scalar_lea.vmem %s0, 8
    %v1804 = vld [vmem:[%s1803] sm:$0xff]
    %v1805 = vld [vmem:[%s2] sm:$0xff]
    %v1806 = vld [vmem:[%s2 + $0x8] sm:$0xff]
    %v1807 = vld [vmem:[%s2 + $0x10] sm:$0xff]
    %v1808 = vld [vmem:[%s2 + $0x18] sm:$0xff]
    %v1809 = vld [vmem:[%s2 + $0x20] sm:$0xff]
    %v1810 = vld [vmem:[%s2 + $0x28] sm:$0xff]
    %v1811 = vld [vmem:[%s2 + $0x30] sm:$0xff]
    %v1812 = vld [vmem:[%s2 + $0x38] sm:$0xff]
    %v1813 = vld [vmem:[%s2 + $0x40] sm:$0xff]
    %v1814 = vld [vmem:[%s2 + $0x48] sm:$0xff]
    %v1815 = vld [vmem:[%s2 + $0x50] sm:$0xff]
    %v1816 = vld [vmem:[%s2 + $0x58] sm:$0xff]
    %v1817 = vld [vmem:[%s2 + $0x60] sm:$0xff]
    %v1818 = vld [vmem:[%s2 + $0x68] sm:$0xff]
    %v1819 = vld [vmem:[%s2 + $0x70] sm:$0xff]
    %v1820 = vld [vmem:[%s2 + $0x78] sm:$0xff]
    %v1821 = vld [vmem:[%s5] sm:$0x1]
    %v1822 = vld [vmem:[%s5 + $0x1] sm:$0x1]
    %v1823 = vld [vmem:[%s5 + $0x2] sm:$0x1]
    %v1824 = vld [vmem:[%s5 + $0x3] sm:$0x1]
    %v1829 = vperm.slane %v1821, 0
    %v1830 = vperm.slane %v1822, 0
    %v1831 = vperm.slane %v1823, 0
    %v1832 = vperm.slane %v1824, 0
    %v1838 = vsel %vm112, %v1804, 0
    %1840 = vmatpush.msra.mxu0 0.0
    %1841 = vmatpush.msra.mxu0 0.0
    %1842 = vmatpush.msra.mxu0 0.0
    %1843 = vmatpush.msra.mxu0 0.0
    %1844 = vmatpush.msra.mxu0 0.0
    %1845 = vmatpush.msra.mxu0 0.0
    %1846 = vmatpush.msra.mxu0 0.0
    %1847 = vmatpush.msra.mxu0 0.0
    %1848 = vmatpush.msra.mxu0 0.0
    %1849 = vmatpush.msra.mxu0 0.0
    %1850 = vmatpush.msra.mxu0 0.0
    %1851 = vmatpush.msra.mxu0 0.0
    %1852 = vmatpush.msra.mxu0 %v1808
    %1853 = vmatpush.msra.mxu0 %v1807
    %1854 = vmatpush.msra.mxu0 %v1806
    %1855 = vmatpush.msra.mxu0 %v1805
    %1856 = vmatmul.f32.gmra.mxu0 %v1838
    %v1857 = vpop.f32.mrf.mxu0
    %v1858 = vadd.f32 %v1829, %v1857
    %1859 = vdwg.mxu0
    %1860 = vmatpush.msra.mxu0 0.0
    %1861 = vmatpush.msra.mxu0 0.0
    %1862 = vmatpush.msra.mxu0 0.0
    %1863 = vmatpush.msra.mxu0 0.0
    %1864 = vmatpush.msra.mxu0 0.0
    %1865 = vmatpush.msra.mxu0 0.0
    %1866 = vmatpush.msra.mxu0 0.0
    %1867 = vmatpush.msra.mxu0 0.0
    %1868 = vmatpush.msra.mxu0 0.0
    %1869 = vmatpush.msra.mxu0 0.0
    %1870 = vmatpush.msra.mxu0 0.0
    %1871 = vmatpush.msra.mxu0 0.0
    %1872 = vmatpush.msra.mxu0 %v1812
    %1873 = vmatpush.msra.mxu0 %v1811
    %1874 = vmatpush.msra.mxu0 %v1810
    %1875 = vmatpush.msra.mxu0 %v1809
    %1876 = vmatmul.f32.gmra.mxu0 %v1838
    %v1877 = vpop.f32.mrf.mxu0
    %v1878 = vadd.f32 %v1830, %v1877
    %1879 = vdwg.mxu0
    %1880 = vmatpush.msra.mxu0 0.0
    %1881 = vmatpush.msra.mxu0 0.0
    %1882 = vmatpush.msra.mxu0 0.0
    %1883 = vmatpush.msra.mxu0 0.0
    %1884 = vmatpush.msra.mxu0 0.0
    %1885 = vmatpush.msra.mxu0 0.0
    %1886 = vmatpush.msra.mxu0 0.0
    %1887 = vmatpush.msra.mxu0 0.0
    %1888 = vmatpush.msra.mxu0 0.0
    %1889 = vmatpush.msra.mxu0 0.0
    %1890 = vmatpush.msra.mxu0 0.0
    %1891 = vmatpush.msra.mxu0 0.0
    %1892 = vmatpush.msra.mxu0 %v1816
    %1893 = vmatpush.msra.mxu0 %v1815
    %1894 = vmatpush.msra.mxu0 %v1814
    %1895 = vmatpush.msra.mxu0 %v1813
    %1896 = vmatmul.f32.gmra.mxu0 %v1838
    %v1897 = vpop.f32.mrf.mxu0
    %v1898 = vadd.f32 %v1831, %v1897
    %1899 = vdwg.mxu0
    %1900 = vmatpush.msra.mxu0 0.0
    %1901 = vmatpush.msra.mxu0 0.0
    %1902 = vmatpush.msra.mxu0 0.0
    %1903 = vmatpush.msra.mxu0 0.0
    %1904 = vmatpush.msra.mxu0 0.0
    %1905 = vmatpush.msra.mxu0 0.0
    %1906 = vmatpush.msra.mxu0 0.0
    %1907 = vmatpush.msra.mxu0 0.0
    %1908 = vmatpush.msra.mxu0 0.0
    %1909 = vmatpush.msra.mxu0 0.0
    %1910 = vmatpush.msra.mxu0 0.0
    %1911 = vmatpush.msra.mxu0 0.0
    %1912 = vmatpush.msra.mxu0 %v1820
    %1913 = vmatpush.msra.mxu0 %v1819
    %1914 = vmatpush.msra.mxu0 %v1818
    %1915 = vmatpush.msra.mxu0 %v1817
    %1916 = vmatmul.f32.gmra.mxu0 %v1838
    %v1917 = vpop.f32.mrf.mxu0
    %v1918 = vadd.f32 %v1832, %v1917
    %1919 = vdwg.mxu0
    %v1920 = vld [vmem:[%s3] sm:$0xff]
    %v1921 = vld [vmem:[%s3 + $0x8] sm:$0xff]
    %v1922 = vld [vmem:[%s3 + $0x10] sm:$0xff]
    %v1923 = vld [vmem:[%s3 + $0x18] sm:$0xff]
    %v1924 = vld [vmem:[%s3 + $0x20] sm:$0xff]
    %v1925 = vld [vmem:[%s3 + $0x28] sm:$0xff]
    %v1926 = vld [vmem:[%s3 + $0x30] sm:$0xff]
    %v1927 = vld [vmem:[%s3 + $0x38] sm:$0xff]
    %v1928 = vld [vmem:[%s3 + $0x40] sm:$0xff]
    %v1929 = vld [vmem:[%s3 + $0x48] sm:$0xff]
    %v1930 = vld [vmem:[%s3 + $0x50] sm:$0xff]
    %v1931 = vld [vmem:[%s3 + $0x58] sm:$0xff]
    %v1932 = vld [vmem:[%s3 + $0x60] sm:$0xff]
    %v1933 = vld [vmem:[%s3 + $0x68] sm:$0xff]
    %v1934 = vld [vmem:[%s3 + $0x70] sm:$0xff]
    %v1935 = vld [vmem:[%s3 + $0x78] sm:$0xff]
    %v1936 = vld [vmem:[%s6] sm:$0x1]
    %v1937 = vld [vmem:[%s6 + $0x1] sm:$0x1]
    %v1938 = vld [vmem:[%s6 + $0x2] sm:$0x1]
    %v1939 = vld [vmem:[%s6 + $0x3] sm:$0x1]
    %v1944 = vperm.slane %v1936, 0
    %v1945 = vperm.slane %v1937, 0
    %v1946 = vperm.slane %v1938, 0
    %v1947 = vperm.slane %v1939, 0
    %1952 = vmatpush.msra.mxu0 0.0
    %1953 = vmatpush.msra.mxu0 0.0
    %1954 = vmatpush.msra.mxu0 0.0
    %1955 = vmatpush.msra.mxu0 0.0
    %1956 = vmatpush.msra.mxu0 0.0
    %1957 = vmatpush.msra.mxu0 0.0
    %1958 = vmatpush.msra.mxu0 0.0
    %1959 = vmatpush.msra.mxu0 0.0
    %1960 = vmatpush.msra.mxu0 0.0
    %1961 = vmatpush.msra.mxu0 0.0
    %1962 = vmatpush.msra.mxu0 0.0
    %1963 = vmatpush.msra.mxu0 0.0
    %1964 = vmatpush.msra.mxu0 %v1923
    %1965 = vmatpush.msra.mxu0 %v1922
    %1966 = vmatpush.msra.mxu0 %v1921
    %1967 = vmatpush.msra.mxu0 %v1920
    %1968 = vmatmul.f32.gmra.mxu0 %v1838
    %v1969 = vpop.f32.mrf.mxu0
    %v1970 = vadd.f32 %v1944, %v1969
    %1971 = vdwg.mxu0
    %1972 = vmatpush.msra.mxu0 0.0
    %1973 = vmatpush.msra.mxu0 0.0
    %1974 = vmatpush.msra.mxu0 0.0
    %1975 = vmatpush.msra.mxu0 0.0
    %1976 = vmatpush.msra.mxu0 0.0
    %1977 = vmatpush.msra.mxu0 0.0
    %1978 = vmatpush.msra.mxu0 0.0
    %1979 = vmatpush.msra.mxu0 0.0
    %1980 = vmatpush.msra.mxu0 0.0
    %1981 = vmatpush.msra.mxu0 0.0
    %1982 = vmatpush.msra.mxu0 0.0
    %1983 = vmatpush.msra.mxu0 0.0
    %1984 = vmatpush.msra.mxu0 %v1927
    %1985 = vmatpush.msra.mxu0 %v1926
    %1986 = vmatpush.msra.mxu0 %v1925
    %1987 = vmatpush.msra.mxu0 %v1924
    %1988 = vmatmul.f32.gmra.mxu0 %v1838
    %v1989 = vpop.f32.mrf.mxu0
    %v1990 = vadd.f32 %v1945, %v1989
    %1991 = vdwg.mxu0
    %1992 = vmatpush.msra.mxu0 0.0
    %1993 = vmatpush.msra.mxu0 0.0
    %1994 = vmatpush.msra.mxu0 0.0
    %1995 = vmatpush.msra.mxu0 0.0
    %1996 = vmatpush.msra.mxu0 0.0
    %1997 = vmatpush.msra.mxu0 0.0
    %1998 = vmatpush.msra.mxu0 0.0
    %1999 = vmatpush.msra.mxu0 0.0
    %2000 = vmatpush.msra.mxu0 0.0
    %2001 = vmatpush.msra.mxu0 0.0
    %2002 = vmatpush.msra.mxu0 0.0
    %2003 = vmatpush.msra.mxu0 0.0
    %2004 = vmatpush.msra.mxu0 %v1931
    %2005 = vmatpush.msra.mxu0 %v1930
    %2006 = vmatpush.msra.mxu0 %v1929
    %2007 = vmatpush.msra.mxu0 %v1928
    %2008 = vmatmul.f32.gmra.mxu0 %v1838
    %v2009 = vpop.f32.mrf.mxu0
    %v2010 = vadd.f32 %v1946, %v2009
    %2011 = vdwg.mxu0
    %2012 = vmatpush.msra.mxu0 0.0
    %2013 = vmatpush.msra.mxu0 0.0
    %2014 = vmatpush.msra.mxu0 0.0
    %2015 = vmatpush.msra.mxu0 0.0
    %2016 = vmatpush.msra.mxu0 0.0
    %2017 = vmatpush.msra.mxu0 0.0
    %2018 = vmatpush.msra.mxu0 0.0
    %2019 = vmatpush.msra.mxu0 0.0
    %2020 = vmatpush.msra.mxu0 0.0
    %2021 = vmatpush.msra.mxu0 0.0
    %2022 = vmatpush.msra.mxu0 0.0
    %2023 = vmatpush.msra.mxu0 0.0
    %2024 = vmatpush.msra.mxu0 %v1935
    %2025 = vmatpush.msra.mxu0 %v1934
    %2026 = vmatpush.msra.mxu0 %v1933
    %2027 = vmatpush.msra.mxu0 %v1932
    %2028 = vmatmul.f32.gmra.mxu0 %v1838
    %v2029 = vpop.f32.mrf.mxu0
    %v2030 = vadd.f32 %v1947, %v2029
    %2031 = vdwg.mxu0
    %v2032 = vld [vmem:[%s4] sm:$0xff]
    %v2033 = vld [vmem:[%s4 + $0x8] sm:$0xff]
    %v2034 = vld [vmem:[%s4 + $0x10] sm:$0xff]
    %v2035 = vld [vmem:[%s4 + $0x18] sm:$0xff]
    %v2036 = vld [vmem:[%s4 + $0x20] sm:$0xff]
    %v2037 = vld [vmem:[%s4 + $0x28] sm:$0xff]
    %v2038 = vld [vmem:[%s4 + $0x30] sm:$0xff]
    %v2039 = vld [vmem:[%s4 + $0x38] sm:$0xff]
    %v2040 = vld [vmem:[%s4 + $0x40] sm:$0xff]
    %v2041 = vld [vmem:[%s4 + $0x48] sm:$0xff]
    %v2042 = vld [vmem:[%s4 + $0x50] sm:$0xff]
    %v2043 = vld [vmem:[%s4 + $0x58] sm:$0xff]
    %v2044 = vld [vmem:[%s4 + $0x60] sm:$0xff]
    %v2045 = vld [vmem:[%s4 + $0x68] sm:$0xff]
    %v2046 = vld [vmem:[%s4 + $0x70] sm:$0xff]
    %v2047 = vld [vmem:[%s4 + $0x78] sm:$0xff]
    %v2048 = vld [vmem:[%s7] sm:$0x1]
    %v2049 = vld [vmem:[%s7 + $0x1] sm:$0x1]
    %v2050 = vld [vmem:[%s7 + $0x2] sm:$0x1]
    %v2051 = vld [vmem:[%s7 + $0x3] sm:$0x1]
    %v2056 = vperm.slane %v2048, 0
    %v2057 = vperm.slane %v2049, 0
    %v2058 = vperm.slane %v2050, 0
    %v2059 = vperm.slane %v2051, 0
    %2064 = vmatpush.msra.mxu0 0.0
    %2065 = vmatpush.msra.mxu0 0.0
    %2066 = vmatpush.msra.mxu0 0.0
    %2067 = vmatpush.msra.mxu0 0.0
    %2068 = vmatpush.msra.mxu0 0.0
    %2069 = vmatpush.msra.mxu0 0.0
    %2070 = vmatpush.msra.mxu0 0.0
    %2071 = vmatpush.msra.mxu0 0.0
    %2072 = vmatpush.msra.mxu0 0.0
    %2073 = vmatpush.msra.mxu0 0.0
    %2074 = vmatpush.msra.mxu0 0.0
    %2075 = vmatpush.msra.mxu0 0.0
    %2076 = vmatpush.msra.mxu0 %v2035
    %2077 = vmatpush.msra.mxu0 %v2034
    %2078 = vmatpush.msra.mxu0 %v2033
    %2079 = vmatpush.msra.mxu0 %v2032
    %2080 = vmatmul.f32.gmra.mxu0 %v1838
    %v2081 = vpop.f32.mrf.mxu0
    %v2082 = vadd.f32 %v2056, %v2081
    %2083 = vdwg.mxu0
    %2084 = vmatpush.msra.mxu0 0.0
    %2085 = vmatpush.msra.mxu0 0.0
    %2086 = vmatpush.msra.mxu0 0.0
    %2087 = vmatpush.msra.mxu0 0.0
    %2088 = vmatpush.msra.mxu0 0.0
    %2089 = vmatpush.msra.mxu0 0.0
    %2090 = vmatpush.msra.mxu0 0.0
    %2091 = vmatpush.msra.mxu0 0.0
    %2092 = vmatpush.msra.mxu0 0.0
    %2093 = vmatpush.msra.mxu0 0.0
    %2094 = vmatpush.msra.mxu0 0.0
    %2095 = vmatpush.msra.mxu0 0.0
    %2096 = vmatpush.msra.mxu0 %v2039
    %2097 = vmatpush.msra.mxu0 %v2038
    %2098 = vmatpush.msra.mxu0 %v2037
    %2099 = vmatpush.msra.mxu0 %v2036
    %2100 = vmatmul.f32.gmra.mxu0 %v1838
    %v2101 = vpop.f32.mrf.mxu0
    %v2102 = vadd.f32 %v2057, %v2101
    %2103 = vdwg.mxu0
    %2104 = vmatpush.msra.mxu0 0.0
    %2105 = vmatpush.msra.mxu0 0.0
    %2106 = vmatpush.msra.mxu0 0.0
    %2107 = vmatpush.msra.mxu0 0.0
    %2108 = vmatpush.msra.mxu0 0.0
    %2109 = vmatpush.msra.mxu0 0.0
    %2110 = vmatpush.msra.mxu0 0.0
    %2111 = vmatpush.msra.mxu0 0.0
    %2112 = vmatpush.msra.mxu0 0.0
    %2113 = vmatpush.msra.mxu0 0.0
    %2114 = vmatpush.msra.mxu0 0.0
    %2115 = vmatpush.msra.mxu0 0.0
    %2116 = vmatpush.msra.mxu0 %v2043
    %2117 = vmatpush.msra.mxu0 %v2042
    %2118 = vmatpush.msra.mxu0 %v2041
    %2119 = vmatpush.msra.mxu0 %v2040
    %2120 = vmatmul.f32.gmra.mxu0 %v1838
    %v2121 = vpop.f32.mrf.mxu0
    %v2122 = vadd.f32 %v2058, %v2121
    %2123 = vdwg.mxu0
    %2124 = vmatpush.msra.mxu0 0.0
    %2125 = vmatpush.msra.mxu0 0.0
    %2126 = vmatpush.msra.mxu0 0.0
    %2127 = vmatpush.msra.mxu0 0.0
    %2128 = vmatpush.msra.mxu0 0.0
    %2129 = vmatpush.msra.mxu0 0.0
    %2130 = vmatpush.msra.mxu0 0.0
    %2131 = vmatpush.msra.mxu0 0.0
    %2132 = vmatpush.msra.mxu0 0.0
    %2133 = vmatpush.msra.mxu0 0.0
    %2134 = vmatpush.msra.mxu0 0.0
    %2135 = vmatpush.msra.mxu0 0.0
    %2136 = vmatpush.msra.mxu0 %v2047
    %2137 = vmatpush.msra.mxu0 %v2046
    %2138 = vmatpush.msra.mxu0 %v2045
    %2139 = vmatpush.msra.mxu0 %v2044
    %2140 = vmatmul.f32.gmra.mxu0 %v1838
    %v2141 = vpop.f32.mrf.mxu0
    %v2142 = vadd.f32 %v2059, %v2141
    %2143 = vdwg.mxu0
    %v2145 = vsel %vm420, %v1858, 0
    %v2148 = vsel %vm420, %v1970, 0
    %2150 = vmatpush.xpose.msra.mxu0 0.0
    %2151 = vmatpush.xpose.msra.mxu0 0.0
    %2152 = vmatpush.xpose.msra.mxu0 0.0
    %2153 = vmatpush.xpose.msra.mxu0 0.0
    %2154 = vmatpush.xpose.msra.mxu0 0.0
    %2155 = vmatpush.xpose.msra.mxu0 0.0
    %2156 = vmatpush.xpose.msra.mxu0 0.0
    %2157 = vmatpush.xpose.msra.mxu0 0.0
    %2158 = vmatpush.xpose.msra.mxu0 0.0
    %2159 = vmatpush.xpose.msra.mxu0 0.0
    %2160 = vmatpush.xpose.msra.mxu0 0.0
    %2161 = vmatpush.xpose.msra.mxu0 0.0
    %2162 = vmatpush.xpose.msra.mxu0 0.0
    %2163 = vmatpush.xpose.msra.mxu0 0.0
    %2164 = vmatpush.xpose.msra.mxu0 0.0
    %2165 = vmatpush.xpose.msra.mxu0 %v2148
    %2166 = vmatmul.f32.gmra.mxu0 %v2145
    %v2167 = vpop.f32.mrf.mxu0
    %v2168 = vadd.f32 %v1802, %v2167
    %2169 = vdwg.mxu0
    %v2171 = vsel %vm420, %v1878, 0
    %v2174 = vsel %vm420, %v1990, 0
    %2176 = vmatpush.xpose.msra.mxu0 0.0
    %2177 = vmatpush.xpose.msra.mxu0 0.0
    %2178 = vmatpush.xpose.msra.mxu0 0.0
    %2179 = vmatpush.xpose.msra.mxu0 0.0
    %2180 = vmatpush.xpose.msra.mxu0 0.0
    %2181 = vmatpush.xpose.msra.mxu0 0.0
    %2182 = vmatpush.xpose.msra.mxu0 0.0
    %2183 = vmatpush.xpose.msra.mxu0 0.0
    %2184 = vmatpush.xpose.msra.mxu0 0.0
    %2185 = vmatpush.xpose.msra.mxu0 0.0
    %2186 = vmatpush.xpose.msra.mxu0 0.0
    %2187 = vmatpush.xpose.msra.mxu0 0.0
    %2188 = vmatpush.xpose.msra.mxu0 0.0
    %2189 = vmatpush.xpose.msra.mxu0 0.0
    %2190 = vmatpush.xpose.msra.mxu0 0.0
    %2191 = vmatpush.xpose.msra.mxu0 %v2174
    %2192 = vmatmul.f32.gmra.mxu0 %v2171
    %v2193 = vpop.f32.mrf.mxu0
    %v2194 = vadd.f32 %v1802, %v2193
    %2195 = vdwg.mxu0
    %v2197 = vsel %vm420, %v1898, 0
    %v2200 = vsel %vm420, %v2010, 0
    %2202 = vmatpush.xpose.msra.mxu0 0.0
    %2203 = vmatpush.xpose.msra.mxu0 0.0
    %2204 = vmatpush.xpose.msra.mxu0 0.0
    %2205 = vmatpush.xpose.msra.mxu0 0.0
    %2206 = vmatpush.xpose.msra.mxu0 0.0
    %2207 = vmatpush.xpose.msra.mxu0 0.0
    %2208 = vmatpush.xpose.msra.mxu0 0.0
    %2209 = vmatpush.xpose.msra.mxu0 0.0
    %2210 = vmatpush.xpose.msra.mxu0 0.0
    %2211 = vmatpush.xpose.msra.mxu0 0.0
    %2212 = vmatpush.xpose.msra.mxu0 0.0
    %2213 = vmatpush.xpose.msra.mxu0 0.0
    %2214 = vmatpush.xpose.msra.mxu0 0.0
    %2215 = vmatpush.xpose.msra.mxu0 0.0
    %2216 = vmatpush.xpose.msra.mxu0 0.0
    %2217 = vmatpush.xpose.msra.mxu0 %v2200
    %2218 = vmatmul.f32.gmra.mxu0 %v2197
    %v2219 = vpop.f32.mrf.mxu0
    %v2220 = vadd.f32 %v1802, %v2219
    %2221 = vdwg.mxu0
    %v2223 = vsel %vm420, %v1918, 0
    %v2226 = vsel %vm420, %v2030, 0
    %2228 = vmatpush.xpose.msra.mxu0 0.0
    %2229 = vmatpush.xpose.msra.mxu0 0.0
    %2230 = vmatpush.xpose.msra.mxu0 0.0
    %2231 = vmatpush.xpose.msra.mxu0 0.0
    %2232 = vmatpush.xpose.msra.mxu0 0.0
    %2233 = vmatpush.xpose.msra.mxu0 0.0
    %2234 = vmatpush.xpose.msra.mxu0 0.0
    %2235 = vmatpush.xpose.msra.mxu0 0.0
    %2236 = vmatpush.xpose.msra.mxu0 0.0
    %2237 = vmatpush.xpose.msra.mxu0 0.0
    %2238 = vmatpush.xpose.msra.mxu0 0.0
    %2239 = vmatpush.xpose.msra.mxu0 0.0
    %2240 = vmatpush.xpose.msra.mxu0 0.0
    %2241 = vmatpush.xpose.msra.mxu0 0.0
    %2242 = vmatpush.xpose.msra.mxu0 0.0
    %2243 = vmatpush.xpose.msra.mxu0 %v2226
    %2244 = vmatmul.f32.gmra.mxu0 %v2223
    %v2245 = vpop.f32.mrf.mxu0
    %v2246 = vadd.f32 %v1802, %v2245
    %2247 = vdwg.mxu0
    %v2248 = vsel %vm420, %v2168, -inf
    %2249 = vmax.xlane.f32.xlu0 %v2248
    %v2250 = vpop.xlane.xlu0 %2249
    %v2251 = vsel %vm420, %v2194, -inf
    %2252 = vmax.xlane.f32.xlu0 %v2251
    %v2253 = vpop.xlane.xlu0 %2252
    %v2254 = vsel %vm420, %v2220, -inf
    %2255 = vmax.xlane.f32.xlu0 %v2254
    %v2256 = vpop.xlane.xlu0 %2255
    %v2257 = vsel %vm420, %v2246, -inf
    %2258 = vmax.xlane.f32.xlu0 %v2257
    %v2259 = vpop.xlane.xlu0 %2258
    %v2260 = vsub.f32 %v2168, %v2250
    %v2261 = vsub.f32 %v2194, %v2253
    %v2262 = vsub.f32 %v2220, %v2256
    %v2263 = vsub.f32 %v2246, %v2259
    %v2264 = vmul.f32 %v2260, 1.442695
    %v2265 = vpow.pop %v2264
    %v2266 = vmul.f32 %v2261, 1.442695
    %v2267 = vpow.pop %v2266
    %v2268 = vmul.f32 %v2262, 1.442695
    %v2269 = vpow.pop %v2268
    %v2270 = vmul.f32 %v2263, 1.442695
    %v2271 = vpow.pop %v2270
    %v2272 = vsel %vm420, %v2265, 0.0
    %2273 = vadd.xlane.f32.xlu0 %v2272
    %v2274 = vpop.xlane.xlu0 %2273
    %v2275 = vsel %vm420, %v2267, 0.0
    %2276 = vadd.xlane.f32.xlu0 %v2275
    %v2277 = vpop.xlane.xlu0 %2276
    %v2278 = vsel %vm420, %v2269, 0.0
    %2279 = vadd.xlane.f32.xlu0 %v2278
    %v2280 = vpop.xlane.xlu0 %2279
    %v2281 = vsel %vm420, %v2271, 0.0
    %2282 = vadd.xlane.f32.xlu0 %v2281
    %v2283 = vpop.xlane.xlu0 %2282
    %v2284 = vrcp.pop %v2274
    %v2285 = vrcp.pop %v2277
    %v2286 = vrcp.pop %v2280
    %v2287 = vrcp.pop %v2283
    %v2288 = vmul.f32 %v2265, %v2284
    %v2289 = vmul.f32 %v2267, %v2285
    %v2290 = vmul.f32 %v2269, %v2286
    %v2291 = vmul.f32 %v2271, %v2287
    %v2293 = vsel %vm420, %v2288, 0
    %2295 = vmatpush.msra.mxu0 0.0
    %2296 = vmatpush.msra.mxu0 0.0
    %2297 = vmatpush.msra.mxu0 0.0
    %2298 = vmatpush.msra.mxu0 0.0
    %2299 = vmatpush.msra.mxu0 0.0
    %2300 = vmatpush.msra.mxu0 0.0
    %2301 = vmatpush.msra.mxu0 0.0
    %2302 = vmatpush.msra.mxu0 0.0
    %2303 = vmatpush.msra.mxu0 0.0
    %2304 = vmatpush.msra.mxu0 0.0
    %2305 = vmatpush.msra.mxu0 0.0
    %2306 = vmatpush.msra.mxu0 0.0
    %2307 = vmatpush.msra.mxu0 0.0
    %2308 = vmatpush.msra.mxu0 0.0
    %2309 = vmatpush.msra.mxu0 0.0
    %2310 = vmatpush.msra.mxu0 %v2082
    %2311 = vmatmul.f32.gmra.mxu0 %v2293
    %v2312 = vpop.f32.mrf.mxu0
    %v2313 = vadd.f32 0.0, %v2312
    %2314 = vdwg.mxu0
    %v2316 = vsel %vm420, %v2289, 0
    %2318 = vmatpush.msra.mxu0 0.0
    %2319 = vmatpush.msra.mxu0 0.0
    %2320 = vmatpush.msra.mxu0 0.0
    %2321 = vmatpush.msra.mxu0 0.0
    %2322 = vmatpush.msra.mxu0 0.0
    %2323 = vmatpush.msra.mxu0 0.0
    %2324 = vmatpush.msra.mxu0 0.0
    %2325 = vmatpush.msra.mxu0 0.0
    %2326 = vmatpush.msra.mxu0 0.0
    %2327 = vmatpush.msra.mxu0 0.0
    %2328 = vmatpush.msra.mxu0 0.0
    %2329 = vmatpush.msra.mxu0 0.0
    %2330 = vmatpush.msra.mxu0 0.0
    %2331 = vmatpush.msra.mxu0 0.0
    %2332 = vmatpush.msra.mxu0 0.0
    %2333 = vmatpush.msra.mxu0 %v2102
    %2334 = vmatmul.f32.gmra.mxu0 %v2316
    %v2335 = vpop.f32.mrf.mxu0
    %v2336 = vadd.f32 0.0, %v2335
    %2337 = vdwg.mxu0
    %v2339 = vsel %vm420, %v2290, 0
    %2341 = vmatpush.msra.mxu0 0.0
    %2342 = vmatpush.msra.mxu0 0.0
    %2343 = vmatpush.msra.mxu0 0.0
    %2344 = vmatpush.msra.mxu0 0.0
    %2345 = vmatpush.msra.mxu0 0.0
    %2346 = vmatpush.msra.mxu0 0.0
    %2347 = vmatpush.msra.mxu0 0.0
    %2348 = vmatpush.msra.mxu0 0.0
    %2349 = vmatpush.msra.mxu0 0.0
    %2350 = vmatpush.msra.mxu0 0.0
    %2351 = vmatpush.msra.mxu0 0.0
    %2352 = vmatpush.msra.mxu0 0.0
    %2353 = vmatpush.msra.mxu0 0.0
    %2354 = vmatpush.msra.mxu0 0.0
    %2355 = vmatpush.msra.mxu0 0.0
    %2356 = vmatpush.msra.mxu0 %v2122
    %2357 = vmatmul.f32.gmra.mxu0 %v2339
    %v2358 = vpop.f32.mrf.mxu0
    %v2359 = vadd.f32 0.0, %v2358
    %2360 = vdwg.mxu0
    %v2362 = vsel %vm420, %v2291, 0
    %2364 = vmatpush.msra.mxu0 0.0
    %2365 = vmatpush.msra.mxu0 0.0
    %2366 = vmatpush.msra.mxu0 0.0
    %2367 = vmatpush.msra.mxu0 0.0
    %2368 = vmatpush.msra.mxu0 0.0
    %2369 = vmatpush.msra.mxu0 0.0
    %2370 = vmatpush.msra.mxu0 0.0
    %2371 = vmatpush.msra.mxu0 0.0
    %2372 = vmatpush.msra.mxu0 0.0
    %2373 = vmatpush.msra.mxu0 0.0
    %2374 = vmatpush.msra.mxu0 0.0
    %2375 = vmatpush.msra.mxu0 0.0
    %2376 = vmatpush.msra.mxu0 0.0
    %2377 = vmatpush.msra.mxu0 0.0
    %2378 = vmatpush.msra.mxu0 0.0
    %2379 = vmatpush.msra.mxu0 %v2142
    %2380 = vmatmul.f32.gmra.mxu0 %v2362
    %v2381 = vpop.f32.mrf.mxu0
    %v2382 = vadd.f32 0.0, %v2381
    %2383 = vdwg.mxu0
    %v2384 = vld [vmem:[%s8] sm:$0xff]
    %v2385 = vld [vmem:[%s8 + $0x8] sm:$0xff]
    %v2386 = vld [vmem:[%s8 + $0x10] sm:$0xff]
    %v2387 = vld [vmem:[%s8 + $0x18] sm:$0xff]
    %v2389 = vsel %vm420, %v2313, 0
    %2391 = vmatpush.msra.mxu0 0.0
    %2392 = vmatpush.msra.mxu0 0.0
    %2393 = vmatpush.msra.mxu0 0.0
    %2394 = vmatpush.msra.mxu0 0.0
    %2395 = vmatpush.msra.mxu0 0.0
    %2396 = vmatpush.msra.mxu0 0.0
    %2397 = vmatpush.msra.mxu0 0.0
    %2398 = vmatpush.msra.mxu0 0.0
    %2399 = vmatpush.msra.mxu0 0.0
    %2400 = vmatpush.msra.mxu0 0.0
    %2401 = vmatpush.msra.mxu0 0.0
    %2402 = vmatpush.msra.mxu0 0.0
    %2403 = vmatpush.msra.mxu0 0.0
    %2404 = vmatpush.msra.mxu0 0.0
    %2405 = vmatpush.msra.mxu0 0.0
    %2406 = vmatpush.msra.mxu0 %v2384
    %2407 = vmatmul.f32.gmra.mxu0 %v2389
    %v2408 = vpop.f32.mrf.mxu0
    %v2409 = vadd.f32 0.0, %v2408
    %2410 = vdwg.mxu0
    %v2412 = vsel %vm420, %v2336, 0
    %2414 = vmatpush.msra.mxu0 0.0
    %2415 = vmatpush.msra.mxu0 0.0
    %2416 = vmatpush.msra.mxu0 0.0
    %2417 = vmatpush.msra.mxu0 0.0
    %2418 = vmatpush.msra.mxu0 0.0
    %2419 = vmatpush.msra.mxu0 0.0
    %2420 = vmatpush.msra.mxu0 0.0
    %2421 = vmatpush.msra.mxu0 0.0
    %2422 = vmatpush.msra.mxu0 0.0
    %2423 = vmatpush.msra.mxu0 0.0
    %2424 = vmatpush.msra.mxu0 0.0
    %2425 = vmatpush.msra.mxu0 0.0
    %2426 = vmatpush.msra.mxu0 0.0
    %2427 = vmatpush.msra.mxu0 0.0
    %2428 = vmatpush.msra.mxu0 0.0
    %2429 = vmatpush.msra.mxu0 %v2385
    %2430 = vmatmul.f32.gmra.mxu0 %v2412
    %v2431 = vpop.f32.mrf.mxu0
    %v2432 = vadd.f32 0.0, %v2431
    %2433 = vdwg.mxu0
    %v2435 = vsel %vm420, %v2359, 0
    %2437 = vmatpush.msra.mxu0 0.0
    %2438 = vmatpush.msra.mxu0 0.0
    %2439 = vmatpush.msra.mxu0 0.0
    %2440 = vmatpush.msra.mxu0 0.0
    %2441 = vmatpush.msra.mxu0 0.0
    %2442 = vmatpush.msra.mxu0 0.0
    %2443 = vmatpush.msra.mxu0 0.0
    %2444 = vmatpush.msra.mxu0 0.0
    %2445 = vmatpush.msra.mxu0 0.0
    %2446 = vmatpush.msra.mxu0 0.0
    %2447 = vmatpush.msra.mxu0 0.0
    %2448 = vmatpush.msra.mxu0 0.0
    %2449 = vmatpush.msra.mxu0 0.0
    %2450 = vmatpush.msra.mxu0 0.0
    %2451 = vmatpush.msra.mxu0 0.0
    %2452 = vmatpush.msra.mxu0 %v2386
    %2453 = vmatmul.f32.gmra.mxu0 %v2435
    %v2454 = vpop.f32.mrf.mxu0
    %v2455 = vadd.f32 0.0, %v2454
    %2456 = vdwg.mxu0
    %v2458 = vsel %vm420, %v2382, 0
    %2460 = vmatpush.msra.mxu0 0.0
    %2461 = vmatpush.msra.mxu0 0.0
    %2462 = vmatpush.msra.mxu0 0.0
    %2463 = vmatpush.msra.mxu0 0.0
    %2464 = vmatpush.msra.mxu0 0.0
    %2465 = vmatpush.msra.mxu0 0.0
    %2466 = vmatpush.msra.mxu0 0.0
    %2467 = vmatpush.msra.mxu0 0.0
    %2468 = vmatpush.msra.mxu0 0.0
    %2469 = vmatpush.msra.mxu0 0.0
    %2470 = vmatpush.msra.mxu0 0.0
    %2471 = vmatpush.msra.mxu0 0.0
    %2472 = vmatpush.msra.mxu0 0.0
    %2473 = vmatpush.msra.mxu0 0.0
    %2474 = vmatpush.msra.mxu0 0.0
    %2475 = vmatpush.msra.mxu0 %v2387
    %2476 = vmatmul.f32.gmra.mxu0 %v2458
    %v2477 = vpop.f32.mrf.mxu0
    %v2478 = vadd.f32 0.0, %v2477
    %2479 = vdwg.mxu0
    %v2480 = vsel %vm112, %v2409, 0.0
    %v2481 = vsel %vm112, %v2432, 0.0
    %v2482 = vadd.f32 %v2480, %v2481
    %v2483 = vsel %vm112, %v2455, 0.0
    %v2484 = vadd.f32 %v2482, %v2483
    %v2485 = vsel %vm112, %v2478, 0.0
    %v2486 = vadd.f32 %v2484, %v2485
    %v2487 = vld [vmem:[%s9] sm:$0x1]
    %v2489 = vperm.slane %v2487, 0
    %v2491 = vadd.f32 %v2486, %v2489
    %v2492 = vadd.f32 %v1804, %v2491
    %v2493 = vld [vmem:[%s10] sm:$0x1]
    %v2494 = vld [vmem:[%s11] sm:$0x1]
    %v2495 = vsel %vm112, %v2492, 0.0
    %2496 = vadd.xlane.f32.xlu0 %v2495
    %v2497 = vpop.xlane.xlu0 %2496
    %v2498 = vmul.f32 %v2497, %v781
    %v2499 = vsub.f32 %v2492, %v2498
    %v2500 = vmul.f32 %v2499, %v2499
    %v2501 = vsel %vm112, %v2500, 0.0
    %2502 = vadd.xlane.f32.xlu0 %v2501
    %v2503 = vpop.xlane.xlu0 %2502
    %v2504 = vmul.f32 %v2503, %v781
    %v2505 = vadd.f32 %v2504, 1e-05
    %v2506 = vrsqrt.pop %v2505
    %v2507 = vmul.f32 %v2506, %v2505
    %v2508 = vmul.f32 %v2507, %v2506
    %v2509 = vmul.f32 0.5, %v2508
    %v2510 = vsub.f32 1.5, %v2509
    %v2511 = vmul.f32 %v2506, %v2510
    %vm2512 = vweird.f32 %v2505
    %vm2513 = vweird.f32 %v2506
    %vm2514 = vmor %vm2512, %vm2513
    %v2515 = vsel %vm2514, %v2506, %v2511
    %v2516 = vmul.f32 %v2499, %v2515
    %v2518 = vperm.slane %v2493, 0
    %v2520 = vmul.f32 %v2516, %v2518
    %v2522 = vperm.slane %v2494, 0
    %v2524 = vadd.f32 %v2520, %v2522
    %v2525 = vld [vmem:[%s12] sm:$0xff]
    %v2526 = vld [vmem:[%s12 + $0x8] sm:$0xff]
    %v2527 = vld [vmem:[%s12 + $0x10] sm:$0xff]
    %v2528 = vld [vmem:[%s12 + $0x18] sm:$0xff]
    %v2529 = vld [vmem:[%s13] sm:$0x1]
    %v2531 = vperm.slane %v2529, 0
    %v2534 = vsel %vm112, %v2524, 0
    %2536 = vmatpush.msra.mxu0 0.0
    %2537 = vmatpush.msra.mxu0 0.0
    %2538 = vmatpush.msra.mxu0 0.0
    %2539 = vmatpush.msra.mxu0 0.0
    %2540 = vmatpush.msra.mxu0 0.0
    %2541 = vmatpush.msra.mxu0 0.0
    %2542 = vmatpush.msra.mxu0 0.0
    %2543 = vmatpush.msra.mxu0 0.0
    %2544 = vmatpush.msra.mxu0 0.0
    %2545 = vmatpush.msra.mxu0 0.0
    %2546 = vmatpush.msra.mxu0 0.0
    %2547 = vmatpush.msra.mxu0 0.0
    %2548 = vmatpush.msra.mxu0 %v2528
    %2549 = vmatpush.msra.mxu0 %v2527
    %2550 = vmatpush.msra.mxu0 %v2526
    %2551 = vmatpush.msra.mxu0 %v2525
    %2552 = vmatmul.f32.gmra.mxu0 %v2534
    %v2553 = vpop.f32.mrf.mxu0
    %v2554 = vadd.f32 %v2531, %v2553
    %2555 = vdwg.mxu0
    %v2556 = vmul.f32 %v2554, %v2554
    %v2557 = vmul.f32 %v2554, %v2556
    %v2558 = vmul.f32 %v2557, 0.044715
    %v2559 = vadd.f32 %v2554, %v2558
    %v2560 = vmul.f32 %v2559, 0.7978846
    %v2561 = vtanh.pop %v2560
    %v2562 = vadd.f32 %v2561, 1.0
    %v2563 = vmul.f32 %v2562, 0.5
    %v2564 = vmul.f32 %v2554, %v2563
    %v2565 = vld [vmem:[%s14] sm:$0xff]
    %v2566 = vld [vmem:[%s14 + $0x8] sm:$0xff]
    %v2567 = vld [vmem:[%s14 + $0x10] sm:$0xff]
    %v2568 = vld [vmem:[%s14 + $0x18] sm:$0xff]
    %v2569 = vld [vmem:[%s14 + $0x20] sm:$0xff]
    %v2570 = vld [vmem:[%s14 + $0x28] sm:$0xff]
    %v2571 = vld [vmem:[%s14 + $0x30] sm:$0xff]
    %v2572 = vld [vmem:[%s14 + $0x38] sm:$0xff]
    %v2573 = vld [vmem:[%s14 + $0x40] sm:$0xff]
    %v2574 = vld [vmem:[%s14 + $0x48] sm:$0xff]
    %v2575 = vld [vmem:[%s14 + $0x50] sm:$0xff]
    %v2576 = vld [vmem:[%s14 + $0x58] sm:$0xff]
    %v2577 = vld [vmem:[%s14 + $0x60] sm:$0xff]
    %v2578 = vld [vmem:[%s14 + $0x68] sm:$0xff]
    %v2579 = vld [vmem:[%s14 + $0x70] sm:$0xff]
    %v2580 = vld [vmem:[%s14 + $0x78] sm:$0xff]
    %v2581 = vld [vmem:[%s15] sm:$0x1]
    %v2583 = vperm.slane %v2581, 0
    %2585 = vmatpush.msra.mxu0 %v2580
    %2586 = vmatpush.msra.mxu0 %v2579
    %2587 = vmatpush.msra.mxu0 %v2578
    %2588 = vmatpush.msra.mxu0 %v2577
    %2589 = vmatpush.msra.mxu0 %v2576
    %2590 = vmatpush.msra.mxu0 %v2575
    %2591 = vmatpush.msra.mxu0 %v2574
    %2592 = vmatpush.msra.mxu0 %v2573
    %2593 = vmatpush.msra.mxu0 %v2572
    %2594 = vmatpush.msra.mxu0 %v2571
    %2595 = vmatpush.msra.mxu0 %v2570
    %2596 = vmatpush.msra.mxu0 %v2569
    %2597 = vmatpush.msra.mxu0 %v2568
    %2598 = vmatpush.msra.mxu0 %v2567
    %2599 = vmatpush.msra.mxu0 %v2566
    %2600 = vmatpush.msra.mxu0 %v2565
    %2601 = vmatmul.f32.gmra.mxu0 %v2564
    %v2602 = vpop.f32.mrf.mxu0
    %v2603 = vadd.f32 %v2583, %v2602
    %2604 = vdwg.mxu0
    %v2605 = vadd.f32 %v2524, %v2603
    %v2606 = vld [vmem:[%s16] sm:$0x1]
    %v2607 = vld [vmem:[%s17] sm:$0x1]
    %v2608 = vsel %vm112, %v2605, 0.0
    %2609 = vadd.xlane.f32.xlu0 %v2608
    %v2610 = vpop.xlane.xlu0 %2609
    %v2611 = vmul.f32 %v2610, %v781
    %v2612 = vsub.f32 %v2605, %v2611
    %v2613 = vmul.f32 %v2612, %v2612
    %v2614 = vsel %vm112, %v2613, 0.0
    %2615 = vadd.xlane.f32.xlu0 %v2614
    %v2616 = vpop.xlane.xlu0 %2615
    %v2617 = vmul.f32 %v2616, %v781
    %v2618 = vadd.f32 %v2617, 1e-05
    %v2619 = vrsqrt.pop %v2618
    %v2620 = vmul.f32 %v2619, %v2618
    %v2621 = vmul.f32 %v2620, %v2619
    %v2622 = vmul.f32 0.5, %v2621
    %v2623 = vsub.f32 1.5, %v2622
    %v2624 = vmul.f32 %v2619, %v2623
    %vm2625 = vweird.f32 %v2618
    %vm2626 = vweird.f32 %v2619
    %vm2627 = vmor %vm2625, %vm2626
    %v2628 = vsel %vm2627, %v2619, %v2624
    %v2629 = vmul.f32 %v2612, %v2628
    %v2631 = vperm.slane %v2606, 0
    %v2633 = vmul.f32 %v2629, %v2631
    %v2635 = vperm.slane %v2607, 0
    %v2637 = vadd.f32 %v2633, %v2635
    %v2638 = vld [vmem:[%s922] sm:$0xff]
    %v2639 = vld [vmem:[%s922 + $0x8] sm:$0xff]
    %v2640 = vld [vmem:[%s922 + $0x10] sm:$0xff]
    %v2641 = vld [vmem:[%s922 + $0x18] sm:$0xff]
    %v2642 = vld [vmem:[%s922 + $0x20] sm:$0xff]
    %v2643 = vld [vmem:[%s922 + $0x28] sm:$0xff]
    %v2644 = vld [vmem:[%s922 + $0x30] sm:$0xff]
    %v2645 = vld [vmem:[%s922 + $0x38] sm:$0xff]
    %v2646 = vld [vmem:[%s922 + $0x40] sm:$0xff]
    %v2647 = vld [vmem:[%s922 + $0x48] sm:$0xff]
    %v2648 = vld [vmem:[%s922 + $0x50] sm:$0xff]
    %v2649 = vld [vmem:[%s922 + $0x58] sm:$0xff]
    %v2650 = vld [vmem:[%s922 + $0x60] sm:$0xff]
    %v2651 = vld [vmem:[%s922 + $0x68] sm:$0xff]
    %v2652 = vld [vmem:[%s922 + $0x70] sm:$0xff]
    %v2653 = vld [vmem:[%s922 + $0x78] sm:$0xff]
    %v2654 = vld [vmem:[%s939] sm:$0x1]
    %v2655 = vld [vmem:[%s939 + $0x1] sm:$0x1]
    %v2656 = vld [vmem:[%s939 + $0x2] sm:$0x1]
    %v2657 = vld [vmem:[%s939 + $0x3] sm:$0x1]
    %v2662 = vperm.slane %v2654, 0
    %v2663 = vperm.slane %v2655, 0
    %v2664 = vperm.slane %v2656, 0
    %v2665 = vperm.slane %v2657, 0
    %v2671 = vsel %vm112, %v2637, 0
    %2673 = vmatpush.msra.mxu0 0.0
    %2674 = vmatpush.msra.mxu0 0.0
    %2675 = vmatpush.msra.mxu0 0.0
    %2676 = vmatpush.msra.mxu0 0.0
    %2677 = vmatpush.msra.mxu0 0.0
    %2678 = vmatpush.msra.mxu0 0.0
    %2679 = vmatpush.msra.mxu0 0.0
    %2680 = vmatpush.msra.mxu0 0.0
    %2681 = vmatpush.msra.mxu0 0.0
    %2682 = vmatpush.msra.mxu0 0.0
    %2683 = vmatpush.msra.mxu0 0.0
    %2684 = vmatpush.msra.mxu0 0.0
    %2685 = vmatpush.msra.mxu0 %v2641
    %2686 = vmatpush.msra.mxu0 %v2640
    %2687 = vmatpush.msra.mxu0 %v2639
    %2688 = vmatpush.msra.mxu0 %v2638
    %2689 = vmatmul.f32.gmra.mxu0 %v2671
    %v2690 = vpop.f32.mrf.mxu0
    %v2691 = vadd.f32 %v2662, %v2690
    %2692 = vdwg.mxu0
    %2693 = vmatpush.msra.mxu0 0.0
    %2694 = vmatpush.msra.mxu0 0.0
    %2695 = vmatpush.msra.mxu0 0.0
    %2696 = vmatpush.msra.mxu0 0.0
    %2697 = vmatpush.msra.mxu0 0.0
    %2698 = vmatpush.msra.mxu0 0.0
    %2699 = vmatpush.msra.mxu0 0.0
    %2700 = vmatpush.msra.mxu0 0.0
    %2701 = vmatpush.msra.mxu0 0.0
    %2702 = vmatpush.msra.mxu0 0.0
    %2703 = vmatpush.msra.mxu0 0.0
    %2704 = vmatpush.msra.mxu0 0.0
    %2705 = vmatpush.msra.mxu0 %v2645
    %2706 = vmatpush.msra.mxu0 %v2644
    %2707 = vmatpush.msra.mxu0 %v2643
    %2708 = vmatpush.msra.mxu0 %v2642
    %2709 = vmatmul.f32.gmra.mxu0 %v2671
    %v2710 = vpop.f32.mrf.mxu0
    %v2711 = vadd.f32 %v2663, %v2710
    %2712 = vdwg.mxu0
    %2713 = vmatpush.msra.mxu0 0.0
    %2714 = vmatpush.msra.mxu0 0.0
    %2715 = vmatpush.msra.mxu0 0.0
    %2716 = vmatpush.msra.mxu0 0.0
    %2717 = vmatpush.msra.mxu0 0.0
    %2718 = vmatpush.msra.mxu0 0.0
    %2719 = vmatpush.msra.mxu0 0.0
    %2720 = vmatpush.msra.mxu0 0.0
    %2721 = vmatpush.msra.mxu0 0.0
    %2722 = vmatpush.msra.mxu0 0.0
    %2723 = vmatpush.msra.mxu0 0.0
    %2724 = vmatpush.msra.mxu0 0.0
    %2725 = vmatpush.msra.mxu0 %v2649
    %2726 = vmatpush.msra.mxu0 %v2648
    %2727 = vmatpush.msra.mxu0 %v2647
    %2728 = vmatpush.msra.mxu0 %v2646
    %2729 = vmatmul.f32.gmra.mxu0 %v2671
    %v2730 = vpop.f32.mrf.mxu0
    %v2731 = vadd.f32 %v2664, %v2730
    %2732 = vdwg.mxu0
    %2733 = vmatpush.msra.mxu0 0.0
    %2734 = vmatpush.msra.mxu0 0.0
    %2735 = vmatpush.msra.mxu0 0.0
    %2736 = vmatpush.msra.mxu0 0.0
    %2737 = vmatpush.msra.mxu0 0.0
    %2738 = vmatpush.msra.mxu0 0.0
    %2739 = vmatpush.msra.mxu0 0.0
    %2740 = vmatpush.msra.mxu0 0.0
    %2741 = vmatpush.msra.mxu0 0.0
    %2742 = vmatpush.msra.mxu0 0.0
    %2743 = vmatpush.msra.mxu0 0.0
    %2744 = vmatpush.msra.mxu0 0.0
    %2745 = vmatpush.msra.mxu0 %v2653
    %2746 = vmatpush.msra.mxu0 %v2652
    %2747 = vmatpush.msra.mxu0 %v2651
    %2748 = vmatpush.msra.mxu0 %v2650
    %2749 = vmatmul.f32.gmra.mxu0 %v2671
    %v2750 = vpop.f32.mrf.mxu0
    %v2751 = vadd.f32 %v2665, %v2750
    %2752 = vdwg.mxu0
    %v2753 = vld [vmem:[%s1039] sm:$0xff]
    %v2754 = vld [vmem:[%s1039 + $0x8] sm:$0xff]
    %v2755 = vld [vmem:[%s1039 + $0x10] sm:$0xff]
    %v2756 = vld [vmem:[%s1039 + $0x18] sm:$0xff]
    %v2757 = vld [vmem:[%s1039 + $0x20] sm:$0xff]
    %v2758 = vld [vmem:[%s1039 + $0x28] sm:$0xff]
    %v2759 = vld [vmem:[%s1039 + $0x30] sm:$0xff]
    %v2760 = vld [vmem:[%s1039 + $0x38] sm:$0xff]
    %v2761 = vld [vmem:[%s1039 + $0x40] sm:$0xff]
    %v2762 = vld [vmem:[%s1039 + $0x48] sm:$0xff]
    %v2763 = vld [vmem:[%s1039 + $0x50] sm:$0xff]
    %v2764 = vld [vmem:[%s1039 + $0x58] sm:$0xff]
    %v2765 = vld [vmem:[%s1039 + $0x60] sm:$0xff]
    %v2766 = vld [vmem:[%s1039 + $0x68] sm:$0xff]
    %v2767 = vld [vmem:[%s1039 + $0x70] sm:$0xff]
    %v2768 = vld [vmem:[%s1039 + $0x78] sm:$0xff]
    %v2769 = vld [vmem:[%s1056] sm:$0x1]
    %v2770 = vld [vmem:[%s1056 + $0x1] sm:$0x1]
    %v2771 = vld [vmem:[%s1056 + $0x2] sm:$0x1]
    %v2772 = vld [vmem:[%s1056 + $0x3] sm:$0x1]
    %v2777 = vperm.slane %v2769, 0
    %v2778 = vperm.slane %v2770, 0
    %v2779 = vperm.slane %v2771, 0
    %v2780 = vperm.slane %v2772, 0
    %2785 = vmatpush.msra.mxu0 0.0
    %2786 = vmatpush.msra.mxu0 0.0
    %2787 = vmatpush.msra.mxu0 0.0
    %2788 = vmatpush.msra.mxu0 0.0
    %2789 = vmatpush.msra.mxu0 0.0
    %2790 = vmatpush.msra.mxu0 0.0
    %2791 = vmatpush.msra.mxu0 0.0
    %2792 = vmatpush.msra.mxu0 0.0
    %2793 = vmatpush.msra.mxu0 0.0
    %2794 = vmatpush.msra.mxu0 0.0
    %2795 = vmatpush.msra.mxu0 0.0
    %2796 = vmatpush.msra.mxu0 0.0
    %2797 = vmatpush.msra.mxu0 %v2756
    %2798 = vmatpush.msra.mxu0 %v2755
    %2799 = vmatpush.msra.mxu0 %v2754
    %2800 = vmatpush.msra.mxu0 %v2753
    %2801 = vmatmul.f32.gmra.mxu0 %v2671
    %v2802 = vpop.f32.mrf.mxu0
    %v2803 = vadd.f32 %v2777, %v2802
    %2804 = vdwg.mxu0
    %2805 = vmatpush.msra.mxu0 0.0
    %2806 = vmatpush.msra.mxu0 0.0
    %2807 = vmatpush.msra.mxu0 0.0
    %2808 = vmatpush.msra.mxu0 0.0
    %2809 = vmatpush.msra.mxu0 0.0
    %2810 = vmatpush.msra.mxu0 0.0
    %2811 = vmatpush.msra.mxu0 0.0
    %2812 = vmatpush.msra.mxu0 0.0
    %2813 = vmatpush.msra.mxu0 0.0
    %2814 = vmatpush.msra.mxu0 0.0
    %2815 = vmatpush.msra.mxu0 0.0
    %2816 = vmatpush.msra.mxu0 0.0
    %2817 = vmatpush.msra.mxu0 %v2760
    %2818 = vmatpush.msra.mxu0 %v2759
    %2819 = vmatpush.msra.mxu0 %v2758
    %2820 = vmatpush.msra.mxu0 %v2757
    %2821 = vmatmul.f32.gmra.mxu0 %v2671
    %v2822 = vpop.f32.mrf.mxu0
    %v2823 = vadd.f32 %v2778, %v2822
    %2824 = vdwg.mxu0
    %2825 = vmatpush.msra.mxu0 0.0
    %2826 = vmatpush.msra.mxu0 0.0
    %2827 = vmatpush.msra.mxu0 0.0
    %2828 = vmatpush.msra.mxu0 0.0
    %2829 = vmatpush.msra.mxu0 0.0
    %2830 = vmatpush.msra.mxu0 0.0
    %2831 = vmatpush.msra.mxu0 0.0
    %2832 = vmatpush.msra.mxu0 0.0
    %2833 = vmatpush.msra.mxu0 0.0
    %2834 = vmatpush.msra.mxu0 0.0
    %2835 = vmatpush.msra.mxu0 0.0
    %2836 = vmatpush.msra.mxu0 0.0
    %2837 = vmatpush.msra.mxu0 %v2764
    %2838 = vmatpush.msra.mxu0 %v2763
    %2839 = vmatpush.msra.mxu0 %v2762
    %2840 = vmatpush.msra.mxu0 %v2761
    %2841 = vmatmul.f32.gmra.mxu0 %v2671
    %v2842 = vpop.f32.mrf.mxu0
    %v2843 = vadd.f32 %v2779, %v2842
    %2844 = vdwg.mxu0
    %2845 = vmatpush.msra.mxu0 0.0
    %2846 = vmatpush.msra.mxu0 0.0
    %2847 = vmatpush.msra.mxu0 0.0
    %2848 = vmatpush.msra.mxu0 0.0
    %2849 = vmatpush.msra.mxu0 0.0
    %2850 = vmatpush.msra.mxu0 0.0
    %2851 = vmatpush.msra.mxu0 0.0
    %2852 = vmatpush.msra.mxu0 0.0
    %2853 = vmatpush.msra.mxu0 0.0
    %2854 = vmatpush.msra.mxu0 0.0
    %2855 = vmatpush.msra.mxu0 0.0
    %2856 = vmatpush.msra.mxu0 0.0
    %2857 = vmatpush.msra.mxu0 %v2768
    %2858 = vmatpush.msra.mxu0 %v2767
    %2859 = vmatpush.msra.mxu0 %v2766
    %2860 = vmatpush.msra.mxu0 %v2765
    %2861 = vmatmul.f32.gmra.mxu0 %v2671
    %v2862 = vpop.f32.mrf.mxu0
    %v2863 = vadd.f32 %v2780, %v2862
    %2864 = vdwg.mxu0
    %v2865 = vld [vmem:[%s1153] sm:$0xff]
    %v2866 = vld [vmem:[%s1153 + $0x8] sm:$0xff]
    %v2867 = vld [vmem:[%s1153 + $0x10] sm:$0xff]
    %v2868 = vld [vmem:[%s1153 + $0x18] sm:$0xff]
    %v2869 = vld [vmem:[%s1153 + $0x20] sm:$0xff]
    %v2870 = vld [vmem:[%s1153 + $0x28] sm:$0xff]
    %v2871 = vld [vmem:[%s1153 + $0x30] sm:$0xff]
    %v2872 = vld [vmem:[%s1153 + $0x38] sm:$0xff]
    %v2873 = vld [vmem:[%s1153 + $0x40] sm:$0xff]
    %v2874 = vld [vmem:[%s1153 + $0x48] sm:$0xff]
    %v2875 = vld [vmem:[%s1153 + $0x50] sm:$0xff]
    %v2876 = vld [vmem:[%s1153 + $0x58] sm:$0xff]
    %v2877 = vld [vmem:[%s1153 + $0x60] sm:$0xff]
    %v2878 = vld [vmem:[%s1153 + $0x68] sm:$0xff]
    %v2879 = vld [vmem:[%s1153 + $0x70] sm:$0xff]
    %v2880 = vld [vmem:[%s1153 + $0x78] sm:$0xff]
    %v2881 = vld [vmem:[%s1170] sm:$0x1]
    %v2882 = vld [vmem:[%s1170 + $0x1] sm:$0x1]
    %v2883 = vld [vmem:[%s1170 + $0x2] sm:$0x1]
    %v2884 = vld [vmem:[%s1170 + $0x3] sm:$0x1]
    %v2889 = vperm.slane %v2881, 0
    %v2890 = vperm.slane %v2882, 0
    %v2891 = vperm.slane %v2883, 0
    %v2892 = vperm.slane %v2884, 0
    %2897 = vmatpush.msra.mxu0 0.0
    %2898 = vmatpush.msra.mxu0 0.0
    %2899 = vmatpush.msra.mxu0 0.0
    %2900 = vmatpush.msra.mxu0 0.0
    %2901 = vmatpush.msra.mxu0 0.0
    %2902 = vmatpush.msra.mxu0 0.0
    %2903 = vmatpush.msra.mxu0 0.0
    %2904 = vmatpush.msra.mxu0 0.0
    %2905 = vmatpush.msra.mxu0 0.0
    %2906 = vmatpush.msra.mxu0 0.0
    %2907 = vmatpush.msra.mxu0 0.0
    %2908 = vmatpush.msra.mxu0 0.0
    %2909 = vmatpush.msra.mxu0 %v2868
    %2910 = vmatpush.msra.mxu0 %v2867
    %2911 = vmatpush.msra.mxu0 %v2866
    %2912 = vmatpush.msra.mxu0 %v2865
    %2913 = vmatmul.f32.gmra.mxu0 %v2671
    %v2914 = vpop.f32.mrf.mxu0
    %v2915 = vadd.f32 %v2889, %v2914
    %2916 = vdwg.mxu0
    %2917 = vmatpush.msra.mxu0 0.0
    %2918 = vmatpush.msra.mxu0 0.0
    %2919 = vmatpush.msra.mxu0 0.0
    %2920 = vmatpush.msra.mxu0 0.0
    %2921 = vmatpush.msra.mxu0 0.0
    %2922 = vmatpush.msra.mxu0 0.0
    %2923 = vmatpush.msra.mxu0 0.0
    %2924 = vmatpush.msra.mxu0 0.0
    %2925 = vmatpush.msra.mxu0 0.0
    %2926 = vmatpush.msra.mxu0 0.0
    %2927 = vmatpush.msra.mxu0 0.0
    %2928 = vmatpush.msra.mxu0 0.0
    %2929 = vmatpush.msra.mxu0 %v2872
    %2930 = vmatpush.msra.mxu0 %v2871
    %2931 = vmatpush.msra.mxu0 %v2870
    %2932 = vmatpush.msra.mxu0 %v2869
    %2933 = vmatmul.f32.gmra.mxu0 %v2671
    %v2934 = vpop.f32.mrf.mxu0
    %v2935 = vadd.f32 %v2890, %v2934
    %2936 = vdwg.mxu0
    %2937 = vmatpush.msra.mxu0 0.0
    %2938 = vmatpush.msra.mxu0 0.0
    %2939 = vmatpush.msra.mxu0 0.0
    %2940 = vmatpush.msra.mxu0 0.0
    %2941 = vmatpush.msra.mxu0 0.0
    %2942 = vmatpush.msra.mxu0 0.0
    %2943 = vmatpush.msra.mxu0 0.0
    %2944 = vmatpush.msra.mxu0 0.0
    %2945 = vmatpush.msra.mxu0 0.0
    %2946 = vmatpush.msra.mxu0 0.0
    %2947 = vmatpush.msra.mxu0 0.0
    %2948 = vmatpush.msra.mxu0 0.0
    %2949 = vmatpush.msra.mxu0 %v2876
    %2950 = vmatpush.msra.mxu0 %v2875
    %2951 = vmatpush.msra.mxu0 %v2874
    %2952 = vmatpush.msra.mxu0 %v2873
    %2953 = vmatmul.f32.gmra.mxu0 %v2671
    %v2954 = vpop.f32.mrf.mxu0
    %v2955 = vadd.f32 %v2891, %v2954
    %2956 = vdwg.mxu0
    %2957 = vmatpush.msra.mxu0 0.0
    %2958 = vmatpush.msra.mxu0 0.0
    %2959 = vmatpush.msra.mxu0 0.0
    %2960 = vmatpush.msra.mxu0 0.0
    %2961 = vmatpush.msra.mxu0 0.0
    %2962 = vmatpush.msra.mxu0 0.0
    %2963 = vmatpush.msra.mxu0 0.0
    %2964 = vmatpush.msra.mxu0 0.0
    %2965 = vmatpush.msra.mxu0 0.0
    %2966 = vmatpush.msra.mxu0 0.0
    %2967 = vmatpush.msra.mxu0 0.0
    %2968 = vmatpush.msra.mxu0 0.0
    %2969 = vmatpush.msra.mxu0 %v2880
    %2970 = vmatpush.msra.mxu0 %v2879
    %2971 = vmatpush.msra.mxu0 %v2878
    %2972 = vmatpush.msra.mxu0 %v2877
    %2973 = vmatmul.f32.gmra.mxu0 %v2671
    %v2974 = vpop.f32.mrf.mxu0
    %v2975 = vadd.f32 %v2892, %v2974
    %2976 = vdwg.mxu0
    %v2978 = vsel %vm420, %v2691, 0
    %v2981 = vsel %vm420, %v2803, 0
    %2983 = vmatpush.xpose.msra.mxu0 0.0
    %2984 = vmatpush.xpose.msra.mxu0 0.0
    %2985 = vmatpush.xpose.msra.mxu0 0.0
    %2986 = vmatpush.xpose.msra.mxu0 0.0
    %2987 = vmatpush.xpose.msra.mxu0 0.0
    %2988 = vmatpush.xpose.msra.mxu0 0.0
    %2989 = vmatpush.xpose.msra.mxu0 0.0
    %2990 = vmatpush.xpose.msra.mxu0 0.0
    %2991 = vmatpush.xpose.msra.mxu0 0.0
    %2992 = vmatpush.xpose.msra.mxu0 0.0
    %2993 = vmatpush.xpose.msra.mxu0 0.0
    %2994 = vmatpush.xpose.msra.mxu0 0.0
    %2995 = vmatpush.xpose.msra.mxu0 0.0
    %2996 = vmatpush.xpose.msra.mxu0 0.0
    %2997 = vmatpush.xpose.msra.mxu0 0.0
    %2998 = vmatpush.xpose.msra.mxu0 %v2981
    %2999 = vmatmul.f32.gmra.mxu0 %v2978
    %v3000 = vpop.f32.mrf.mxu0
    %v3001 = vadd.f32 %v1802, %v3000
    %3002 = vdwg.mxu0
    %v3004 = vsel %vm420, %v2711, 0
    %v3007 = vsel %vm420, %v2823, 0
    %3009 = vmatpush.xpose.msra.mxu0 0.0
    %3010 = vmatpush.xpose.msra.mxu0 0.0
    %3011 = vmatpush.xpose.msra.mxu0 0.0
    %3012 = vmatpush.xpose.msra.mxu0 0.0
    %3013 = vmatpush.xpose.msra.mxu0 0.0
    %3014 = vmatpush.xpose.msra.mxu0 0.0
    %3015 = vmatpush.xpose.msra.mxu0 0.0
    %3016 = vmatpush.xpose.msra.mxu0 0.0
    %3017 = vmatpush.xpose.msra.mxu0 0.0
    %3018 = vmatpush.xpose.msra.mxu0 0.0
    %3019 = vmatpush.xpose.msra.mxu0 0.0
    %3020 = vmatpush.xpose.msra.mxu0 0.0
    %3021 = vmatpush.xpose.msra.mxu0 0.0
    %3022 = vmatpush.xpose.msra.mxu0 0.0
    %3023 = vmatpush.xpose.msra.mxu0 0.0
    %3024 = vmatpush.xpose.msra.mxu0 %v3007
    %3025 = vmatmul.f32.gmra.mxu0 %v3004
    %v3026 = vpop.f32.mrf.mxu0
    %v3027 = vadd.f32 %v1802, %v3026
    %3028 = vdwg.mxu0
    %v3030 = vsel %vm420, %v2731, 0
    %v3033 = vsel %vm420, %v2843, 0
    %3035 = vmatpush.xpose.msra.mxu0 0.0
    %3036 = vmatpush.xpose.msra.mxu0 0.0
    %3037 = vmatpush.xpose.msra.mxu0 0.0
    %3038 = vmatpush.xpose.msra.mxu0 0.0
    %3039 = vmatpush.xpose.msra.mxu0 0.0
    %3040 = vmatpush.xpose.msra.mxu0 0.0
    %3041 = vmatpush.xpose.msra.mxu0 0.0
    %3042 = vmatpush.xpose.msra.mxu0 0.0
    %3043 = vmatpush.xpose.msra.mxu0 0.0
    %3044 = vmatpush.xpose.msra.mxu0 0.0
    %3045 = vmatpush.xpose.msra.mxu0 0.0
    %3046 = vmatpush.xpose.msra.mxu0 0.0
    %3047 = vmatpush.xpose.msra.mxu0 0.0
    %3048 = vmatpush.xpose.msra.mxu0 0.0
    %3049 = vmatpush.xpose.msra.mxu0 0.0
    %3050 = vmatpush.xpose.msra.mxu0 %v3033
    %3051 = vmatmul.f32.gmra.mxu0 %v3030
    %v3052 = vpop.f32.mrf.mxu0
    %v3053 = vadd.f32 %v1802, %v3052
    %3054 = vdwg.mxu0
    %v3056 = vsel %vm420, %v2751, 0
    %v3059 = vsel %vm420, %v2863, 0
    %3061 = vmatpush.xpose.msra.mxu0 0.0
    %3062 = vmatpush.xpose.msra.mxu0 0.0
    %3063 = vmatpush.xpose.msra.mxu0 0.0
    %3064 = vmatpush.xpose.msra.mxu0 0.0
    %3065 = vmatpush.xpose.msra.mxu0 0.0
    %3066 = vmatpush.xpose.msra.mxu0 0.0
    %3067 = vmatpush.xpose.msra.mxu0 0.0
    %3068 = vmatpush.xpose.msra.mxu0 0.0
    %3069 = vmatpush.xpose.msra.mxu0 0.0
    %3070 = vmatpush.xpose.msra.mxu0 0.0
    %3071 = vmatpush.xpose.msra.mxu0 0.0
    %3072 = vmatpush.xpose.msra.mxu0 0.0
    %3073 = vmatpush.xpose.msra.mxu0 0.0
    %3074 = vmatpush.xpose.msra.mxu0 0.0
    %3075 = vmatpush.xpose.msra.mxu0 0.0
    %3076 = vmatpush.xpose.msra.mxu0 %v3059
    %3077 = vmatmul.f32.gmra.mxu0 %v3056
    %v3078 = vpop.f32.mrf.mxu0
    %v3079 = vadd.f32 %v1802, %v3078
    %3080 = vdwg.mxu0
    %v3081 = vsel %vm420, %v3001, -inf
    %3082 = vmax.xlane.f32.xlu0 %v3081
    %v3083 = vpop.xlane.xlu0 %3082
    %v3084 = vsel %vm420, %v3027, -inf
    %3085 = vmax.xlane.f32.xlu0 %v3084
    %v3086 = vpop.xlane.xlu0 %3085
    %v3087 = vsel %vm420, %v3053, -inf
    %3088 = vmax.xlane.f32.xlu0 %v3087
    %v3089 = vpop.xlane.xlu0 %3088
    %v3090 = vsel %vm420, %v3079, -inf
    %3091 = vmax.xlane.f32.xlu0 %v3090
    %v3092 = vpop.xlane.xlu0 %3091
    %v3093 = vsub.f32 %v3001, %v3083
    %v3094 = vsub.f32 %v3027, %v3086
    %v3095 = vsub.f32 %v3053, %v3089
    %v3096 = vsub.f32 %v3079, %v3092
    %v3097 = vmul.f32 %v3093, 1.442695
    %v3098 = vpow.pop %v3097
    %v3099 = vmul.f32 %v3094, 1.442695
    %v3100 = vpow.pop %v3099
    %v3101 = vmul.f32 %v3095, 1.442695
    %v3102 = vpow.pop %v3101
    %v3103 = vmul.f32 %v3096, 1.442695
    %v3104 = vpow.pop %v3103
    %v3105 = vsel %vm420, %v3098, 0.0
    %3106 = vadd.xlane.f32.xlu0 %v3105
    %v3107 = vpop.xlane.xlu0 %3106
    %v3108 = vsel %vm420, %v3100, 0.0
    %3109 = vadd.xlane.f32.xlu0 %v3108
    %v3110 = vpop.xlane.xlu0 %3109
    %v3111 = vsel %vm420, %v3102, 0.0
    %3112 = vadd.xlane.f32.xlu0 %v3111
    %v3113 = vpop.xlane.xlu0 %3112
    %v3114 = vsel %vm420, %v3104, 0.0
    %3115 = vadd.xlane.f32.xlu0 %v3114
    %v3116 = vpop.xlane.xlu0 %3115
    %v3117 = vrcp.pop %v3107
    %v3118 = vrcp.pop %v3110
    %v3119 = vrcp.pop %v3113
    %v3120 = vrcp.pop %v3116
    %v3121 = vmul.f32 %v3098, %v3117
    %v3122 = vmul.f32 %v3100, %v3118
    %v3123 = vmul.f32 %v3102, %v3119
    %v3124 = vmul.f32 %v3104, %v3120
    %v3126 = vsel %vm420, %v3121, 0
    %3128 = vmatpush.msra.mxu0 0.0
    %3129 = vmatpush.msra.mxu0 0.0
    %3130 = vmatpush.msra.mxu0 0.0
    %3131 = vmatpush.msra.mxu0 0.0
    %3132 = vmatpush.msra.mxu0 0.0
    %3133 = vmatpush.msra.mxu0 0.0
    %3134 = vmatpush.msra.mxu0 0.0
    %3135 = vmatpush.msra.mxu0 0.0
    %3136 = vmatpush.msra.mxu0 0.0
    %3137 = vmatpush.msra.mxu0 0.0
    %3138 = vmatpush.msra.mxu0 0.0
    %3139 = vmatpush.msra.mxu0 0.0
    %3140 = vmatpush.msra.mxu0 0.0
    %3141 = vmatpush.msra.mxu0 0.0
    %3142 = vmatpush.msra.mxu0 0.0
    %3143 = vmatpush.msra.mxu0 %v2915
    %3144 = vmatmul.f32.gmra.mxu0 %v3126
    %v3145 = vpop.f32.mrf.mxu0
    %v3146 = vadd.f32 0.0, %v3145
    %3147 = vdwg.mxu0
    %v3149 = vsel %vm420, %v3122, 0
    %3151 = vmatpush.msra.mxu0 0.0
    %3152 = vmatpush.msra.mxu0 0.0
    %3153 = vmatpush.msra.mxu0 0.0
    %3154 = vmatpush.msra.mxu0 0.0
    %3155 = vmatpush.msra.mxu0 0.0
    %3156 = vmatpush.msra.mxu0 0.0
    %3157 = vmatpush.msra.mxu0 0.0
    %3158 = vmatpush.msra.mxu0 0.0
    %3159 = vmatpush.msra.mxu0 0.0
    %3160 = vmatpush.msra.mxu0 0.0
    %3161 = vmatpush.msra.mxu0 0.0
    %3162 = vmatpush.msra.mxu0 0.0
    %3163 = vmatpush.msra.mxu0 0.0
    %3164 = vmatpush.msra.mxu0 0.0
    %3165 = vmatpush.msra.mxu0 0.0
    %3166 = vmatpush.msra.mxu0 %v2935
    %3167 = vmatmul.f32.gmra.mxu0 %v3149
    %v3168 = vpop.f32.mrf.mxu0
    %v3169 = vadd.f32 0.0, %v3168
    %3170 = vdwg.mxu0
    %v3172 = vsel %vm420, %v3123, 0
    %3174 = vmatpush.msra.mxu0 0.0
    %3175 = vmatpush.msra.mxu0 0.0
    %3176 = vmatpush.msra.mxu0 0.0
    %3177 = vmatpush.msra.mxu0 0.0
    %3178 = vmatpush.msra.mxu0 0.0
    %3179 = vmatpush.msra.mxu0 0.0
    %3180 = vmatpush.msra.mxu0 0.0
    %3181 = vmatpush.msra.mxu0 0.0
    %3182 = vmatpush.msra.mxu0 0.0
    %3183 = vmatpush.msra.mxu0 0.0
    %3184 = vmatpush.msra.mxu0 0.0
    %3185 = vmatpush.msra.mxu0 0.0
    %3186 = vmatpush.msra.mxu0 0.0
    %3187 = vmatpush.msra.mxu0 0.0
    %3188 = vmatpush.msra.mxu0 0.0
    %3189 = vmatpush.msra.mxu0 %v2955
    %3190 = vmatmul.f32.gmra.mxu0 %v3172
    %v3191 = vpop.f32.mrf.mxu0
    %v3192 = vadd.f32 0.0, %v3191
    %3193 = vdwg.mxu0
    %v3195 = vsel %vm420, %v3124, 0
    %3197 = vmatpush.msra.mxu0 0.0
    %3198 = vmatpush.msra.mxu0 0.0
    %3199 = vmatpush.msra.mxu0 0.0
    %3200 = vmatpush.msra.mxu0 0.0
    %3201 = vmatpush.msra.mxu0 0.0
    %3202 = vmatpush.msra.mxu0 0.0
    %3203 = vmatpush.msra.mxu0 0.0
    %3204 = vmatpush.msra.mxu0 0.0
    %3205 = vmatpush.msra.mxu0 0.0
    %3206 = vmatpush.msra.mxu0 0.0
    %3207 = vmatpush.msra.mxu0 0.0
    %3208 = vmatpush.msra.mxu0 0.0
    %3209 = vmatpush.msra.mxu0 0.0
    %3210 = vmatpush.msra.mxu0 0.0
    %3211 = vmatpush.msra.mxu0 0.0
    %3212 = vmatpush.msra.mxu0 %v2975
    %3213 = vmatmul.f32.gmra.mxu0 %v3195
    %v3214 = vpop.f32.mrf.mxu0
    %v3215 = vadd.f32 0.0, %v3214
    %3216 = vdwg.mxu0
    %v3217 = vld [vmem:[%s1507] sm:$0xff]
    %v3218 = vld [vmem:[%s1507 + $0x8] sm:$0xff]
    %v3219 = vld [vmem:[%s1507 + $0x10] sm:$0xff]
    %v3220 = vld [vmem:[%s1507 + $0x18] sm:$0xff]
    %v3222 = vsel %vm420, %v3146, 0
    %3224 = vmatpush.msra.mxu0 0.0
    %3225 = vmatpush.msra.mxu0 0.0
    %3226 = vmatpush.msra.mxu0 0.0
    %3227 = vmatpush.msra.mxu0 0.0
    %3228 = vmatpush.msra.mxu0 0.0
    %3229 = vmatpush.msra.mxu0 0.0
    %3230 = vmatpush.msra.mxu0 0.0
    %3231 = vmatpush.msra.mxu0 0.0
    %3232 = vmatpush.msra.mxu0 0.0
    %3233 = vmatpush.msra.mxu0 0.0
    %3234 = vmatpush.msra.mxu0 0.0
    %3235 = vmatpush.msra.mxu0 0.0
    %3236 = vmatpush.msra.mxu0 0.0
    %3237 = vmatpush.msra.mxu0 0.0
    %3238 = vmatpush.msra.mxu0 0.0
    %3239 = vmatpush.msra.mxu0 %v3217
    %3240 = vmatmul.f32.gmra.mxu0 %v3222
    %v3241 = vpop.f32.mrf.mxu0
    %v3242 = vadd.f32 0.0, %v3241
    %3243 = vdwg.mxu0
    %v3245 = vsel %vm420, %v3169, 0
    %3247 = vmatpush.msra.mxu0 0.0
    %3248 = vmatpush.msra.mxu0 0.0
    %3249 = vmatpush.msra.mxu0 0.0
    %3250 = vmatpush.msra.mxu0 0.0
    %3251 = vmatpush.msra.mxu0 0.0
    %3252 = vmatpush.msra.mxu0 0.0
    %3253 = vmatpush.msra.mxu0 0.0
    %3254 = vmatpush.msra.mxu0 0.0
    %3255 = vmatpush.msra.mxu0 0.0
    %3256 = vmatpush.msra.mxu0 0.0
    %3257 = vmatpush.msra.mxu0 0.0
    %3258 = vmatpush.msra.mxu0 0.0
    %3259 = vmatpush.msra.mxu0 0.0
    %3260 = vmatpush.msra.mxu0 0.0
    %3261 = vmatpush.msra.mxu0 0.0
    %3262 = vmatpush.msra.mxu0 %v3218
    %3263 = vmatmul.f32.gmra.mxu0 %v3245
    %v3264 = vpop.f32.mrf.mxu0
    %v3265 = vadd.f32 0.0, %v3264
    %3266 = vdwg.mxu0
    %v3268 = vsel %vm420, %v3192, 0
    %3270 = vmatpush.msra.mxu0 0.0
    %3271 = vmatpush.msra.mxu0 0.0
    %3272 = vmatpush.msra.mxu0 0.0
    %3273 = vmatpush.msra.mxu0 0.0
    %3274 = vmatpush.msra.mxu0 0.0
    %3275 = vmatpush.msra.mxu0 0.0
    %3276 = vmatpush.msra.mxu0 0.0
    %3277 = vmatpush.msra.mxu0 0.0
    %3278 = vmatpush.msra.mxu0 0.0
    %3279 = vmatpush.msra.mxu0 0.0
    %3280 = vmatpush.msra.mxu0 0.0
    %3281 = vmatpush.msra.mxu0 0.0
    %3282 = vmatpush.msra.mxu0 0.0
    %3283 = vmatpush.msra.mxu0 0.0
    %3284 = vmatpush.msra.mxu0 0.0
    %3285 = vmatpush.msra.mxu0 %v3219
    %3286 = vmatmul.f32.gmra.mxu0 %v3268
    %v3287 = vpop.f32.mrf.mxu0
    %v3288 = vadd.f32 0.0, %v3287
    %3289 = vdwg.mxu0
    %v3291 = vsel %vm420, %v3215, 0
    %3293 = vmatpush.msra.mxu0 0.0
    %3294 = vmatpush.msra.mxu0 0.0
    %3295 = vmatpush.msra.mxu0 0.0
    %3296 = vmatpush.msra.mxu0 0.0
    %3297 = vmatpush.msra.mxu0 0.0
    %3298 = vmatpush.msra.mxu0 0.0
    %3299 = vmatpush.msra.mxu0 0.0
    %3300 = vmatpush.msra.mxu0 0.0
    %3301 = vmatpush.msra.mxu0 0.0
    %3302 = vmatpush.msra.mxu0 0.0
    %3303 = vmatpush.msra.mxu0 0.0
    %3304 = vmatpush.msra.mxu0 0.0
    %3305 = vmatpush.msra.mxu0 0.0
    %3306 = vmatpush.msra.mxu0 0.0
    %3307 = vmatpush.msra.mxu0 0.0
    %3308 = vmatpush.msra.mxu0 %v3220
    %3309 = vmatmul.f32.gmra.mxu0 %v3291
    %v3310 = vpop.f32.mrf.mxu0
    %v3311 = vadd.f32 0.0, %v3310
    %3312 = vdwg.mxu0
    %v3313 = vsel %vm112, %v3242, 0.0
    %v3314 = vsel %vm112, %v3265, 0.0
    %v3315 = vadd.f32 %v3313, %v3314
    %v3316 = vsel %vm112, %v3288, 0.0
    %v3317 = vadd.f32 %v3315, %v3316
    %v3318 = vsel %vm112, %v3311, 0.0
    %v3319 = vadd.f32 %v3317, %v3318
    %v3320 = vld [vmem:[%s1611] sm:$0x1]
    %v3322 = vperm.slane %v3320, 0
    %v3324 = vadd.f32 %v3319, %v3322
    %v3325 = vadd.f32 %v2637, %v3324
    %v3326 = vld [vmem:[%s1618] sm:$0x1]
    %v3327 = vld [vmem:[%s1620] sm:$0x1]
    %v3328 = vsel %vm112, %v3325, 0.0
    %3329 = vadd.xlane.f32.xlu0 %v3328
    %v3330 = vpop.xlane.xlu0 %3329
    %v3331 = vmul.f32 %v3330, %v781
    %v3332 = vsub.f32 %v3325, %v3331
    %v3333 = vmul.f32 %v3332, %v3332
    %v3334 = vsel %vm112, %v3333, 0.0
    %3335 = vadd.xlane.f32.xlu0 %v3334
    %v3336 = vpop.xlane.xlu0 %3335
    %v3337 = vmul.f32 %v3336, %v781
    %v3338 = vadd.f32 %v3337, 1e-05
    %v3339 = vrsqrt.pop %v3338
    %v3340 = vmul.f32 %v3339, %v3338
    %v3341 = vmul.f32 %v3340, %v3339
    %v3342 = vmul.f32 0.5, %v3341
    %v3343 = vsub.f32 1.5, %v3342
    %v3344 = vmul.f32 %v3339, %v3343
    %vm3345 = vweird.f32 %v3338
    %vm3346 = vweird.f32 %v3339
    %vm3347 = vmor %vm3345, %vm3346
    %v3348 = vsel %vm3347, %v3339, %v3344
    %v3349 = vmul.f32 %v3332, %v3348
    %v3351 = vperm.slane %v3326, 0
    %v3353 = vmul.f32 %v3349, %v3351
    %v3355 = vperm.slane %v3327, 0
    %v3357 = vadd.f32 %v3353, %v3355
    %v3358 = vld [vmem:[%s1652] sm:$0xff]
    %v3359 = vld [vmem:[%s1652 + $0x8] sm:$0xff]
    %v3360 = vld [vmem:[%s1652 + $0x10] sm:$0xff]
    %v3361 = vld [vmem:[%s1652 + $0x18] sm:$0xff]
    %v3362 = vld [vmem:[%s1657] sm:$0x1]
    %v3364 = vperm.slane %v3362, 0
    %v3367 = vsel %vm112, %v3357, 0
    %3369 = vmatpush.msra.mxu0 0.0
    %3370 = vmatpush.msra.mxu0 0.0
    %3371 = vmatpush.msra.mxu0 0.0
    %3372 = vmatpush.msra.mxu0 0.0
    %3373 = vmatpush.msra.mxu0 0.0
    %3374 = vmatpush.msra.mxu0 0.0
    %3375 = vmatpush.msra.mxu0 0.0
    %3376 = vmatpush.msra.mxu0 0.0
    %3377 = vmatpush.msra.mxu0 0.0
    %3378 = vmatpush.msra.mxu0 0.0
    %3379 = vmatpush.msra.mxu0 0.0
    %3380 = vmatpush.msra.mxu0 0.0
    %3381 = vmatpush.msra.mxu0 %v3361
    %3382 = vmatpush.msra.mxu0 %v3360
    %3383 = vmatpush.msra.mxu0 %v3359
    %3384 = vmatpush.msra.mxu0 %v3358
    %3385 = vmatmul.f32.gmra.mxu0 %v3367
    %v3386 = vpop.f32.mrf.mxu0
    %v3387 = vadd.f32 %v3364, %v3386
    %3388 = vdwg.mxu0
    %v3389 = vmul.f32 %v3387, %v3387
    %v3390 = vmul.f32 %v3387, %v3389
    %v3391 = vmul.f32 %v3390, 0.044715
    %v3392 = vadd.f32 %v3387, %v3391
    %v3393 = vmul.f32 %v3392, 0.7978846
    %v3394 = vtanh.pop %v3393
    %v3395 = vadd.f32 %v3394, 1.0
    %v3396 = vmul.f32 %v3395, 0.5
    %v3397 = vmul.f32 %v3387, %v3396
    %v3398 = vld [vmem:[%s1694] sm:$0xff]
    %v3399 = vld [vmem:[%s1694 + $0x8] sm:$0xff]
    %v3400 = vld [vmem:[%s1694 + $0x10] sm:$0xff]
    %v3401 = vld [vmem:[%s1694 + $0x18] sm:$0xff]
    %v3402 = vld [vmem:[%s1694 + $0x20] sm:$0xff]
    %v3403 = vld [vmem:[%s1694 + $0x28] sm:$0xff]
    %v3404 = vld [vmem:[%s1694 + $0x30] sm:$0xff]
    %v3405 = vld [vmem:[%s1694 + $0x38] sm:$0xff]
    %v3406 = vld [vmem:[%s1694 + $0x40] sm:$0xff]
    %v3407 = vld [vmem:[%s1694 + $0x48] sm:$0xff]
    %v3408 = vld [vmem:[%s1694 + $0x50] sm:$0xff]
    %v3409 = vld [vmem:[%s1694 + $0x58] sm:$0xff]
    %v3410 = vld [vmem:[%s1694 + $0x60] sm:$0xff]
    %v3411 = vld [vmem:[%s1694 + $0x68] sm:$0xff]
    %v3412 = vld [vmem:[%s1694 + $0x70] sm:$0xff]
    %v3413 = vld [vmem:[%s1694 + $0x78] sm:$0xff]
    %v3414 = vld [vmem:[%s1711] sm:$0x1]
    %v3416 = vperm.slane %v3414, 0
    %3418 = vmatpush.msra.mxu0 %v3413
    %3419 = vmatpush.msra.mxu0 %v3412
    %3420 = vmatpush.msra.mxu0 %v3411
    %3421 = vmatpush.msra.mxu0 %v3410
    %3422 = vmatpush.msra.mxu0 %v3409
    %3423 = vmatpush.msra.mxu0 %v3408
    %3424 = vmatpush.msra.mxu0 %v3407
    %3425 = vmatpush.msra.mxu0 %v3406
    %3426 = vmatpush.msra.mxu0 %v3405
    %3427 = vmatpush.msra.mxu0 %v3404
    %3428 = vmatpush.msra.mxu0 %v3403
    %3429 = vmatpush.msra.mxu0 %v3402
    %3430 = vmatpush.msra.mxu0 %v3401
    %3431 = vmatpush.msra.mxu0 %v3400
    %3432 = vmatpush.msra.mxu0 %v3399
    %3433 = vmatpush.msra.mxu0 %v3398
    %3434 = vmatmul.f32.gmra.mxu0 %v3397
    %v3435 = vpop.f32.mrf.mxu0
    %v3436 = vadd.f32 %v3416, %v3435
    %3437 = vdwg.mxu0
    %v3438 = vadd.f32 %v3357, %v3436
    %v3439 = vld [vmem:[%s1737] sm:$0x1]
    %v3440 = vld [vmem:[%s1739] sm:$0x1]
    %v3441 = vsel %vm112, %v3438, 0.0
    %3442 = vadd.xlane.f32.xlu0 %v3441
    %v3443 = vpop.xlane.xlu0 %3442
    %v3444 = vmul.f32 %v3443, %v781
    %v3445 = vsub.f32 %v3438, %v3444
    %v3446 = vmul.f32 %v3445, %v3445
    %v3447 = vsel %vm112, %v3446, 0.0
    %3448 = vadd.xlane.f32.xlu0 %v3447
    %v3449 = vpop.xlane.xlu0 %3448
    %v3450 = vmul.f32 %v3449, %v781
    %v3451 = vadd.f32 %v3450, 1e-05
    %v3452 = vrsqrt.pop %v3451
    %v3453 = vmul.f32 %v3452, %v3451
    %v3454 = vmul.f32 %v3453, %v3452
    %v3455 = vmul.f32 0.5, %v3454
    %v3456 = vsub.f32 1.5, %v3455
    %v3457 = vmul.f32 %v3452, %v3456
    %vm3458 = vweird.f32 %v3451
    %vm3459 = vweird.f32 %v3452
    %vm3460 = vmor %vm3458, %vm3459
    %v3461 = vsel %vm3460, %v3452, %v3457
    %v3462 = vmul.f32 %v3445, %v3461
    %v3464 = vperm.slane %v3439, 0
    %v3466 = vmul.f32 %v3462, %v3464
    %v3468 = vperm.slane %v3440, 0
    %v3470 = vadd.f32 %v3466, %v3468
    %v3472 = vsel %vm112, %v3470, 0
    %3474 = vmatpush.msra.mxu0 0.0
    %3475 = vmatpush.msra.mxu0 0.0
    %3476 = vmatpush.msra.mxu0 0.0
    %3477 = vmatpush.msra.mxu0 0.0
    %3478 = vmatpush.msra.mxu0 0.0
    %3479 = vmatpush.msra.mxu0 0.0
    %3480 = vmatpush.msra.mxu0 0.0
    %3481 = vmatpush.msra.mxu0 0.0
    %3482 = vmatpush.msra.mxu0 0.0
    %3483 = vmatpush.msra.mxu0 0.0
    %3484 = vmatpush.msra.mxu0 0.0
    %3485 = vmatpush.msra.mxu0 0.0
    %3486 = vmatpush.msra.mxu0 %v71
    %3487 = vmatpush.msra.mxu0 %v70
    %3488 = vmatpush.msra.mxu0 %v69
    %3489 = vmatpush.msra.mxu0 %v68
    %3490 = vmatmul.f32.gmra.mxu0 %v3472
    %v3491 = vpop.f32.mrf.mxu0
    %v3492 = vadd.f32 0.0, %v3491
    %3493 = vdwg.mxu0
    %s3494 = scalar_lea.vmem [#allocation2], 8
    %3495 = vst [vmem:[%s3494] sm:$0xff] %v3492
    // Predicated region
    $region78: #{tpu_custom_call.1} parent=1 // pred_check
      _
    $region79: #{tpu_custom_call.1} parent=1 // pred_check_branch
      %3497 = sbr.rel (0) target = $region81
    $region80: #{tpu_custom_call.1} parent=1 // pred_region
      %3499 = vsyncadd [#allocation3], 0
      %s3500 = sshll.u32 [#allocation2], 4
      %s3501 = int_to_ptr.vmem [resolvable:$true] %s3500
      %s3502 = sshll.u32 %s19, 4
      %s3503 = int_to_ptr.hbm [resolvable:$true] %s3502
      %3508 = dma.vmem_to_hbm [thread:$0]  %s3501, 256, %s3503, [#allocation3], 128, 128, 8
    $region81: #{tpu_custom_call.1} parent=1 // pred_fallthru
      _
    // Predicated region
    $region82: #{tpu_custom_call.1} parent=1 // pred_check
      _
    $region83: #{tpu_custom_call.1} parent=1 // pred_check_branch
      %3510 = sbr.rel (0) target = $region85
    $region84: #{tpu_custom_call.1} parent=1 // pred_region
      %3512 = dma.done [#allocation3], 256
    $region85: #{tpu_custom_call.1} parent=1 // pred_fallthru
      _
    %3513 = vsyncpa [#allocation3], 1

</llo_original>
